<compile_context>
chip_gen: v6e
topology: v6e:2x2x1
jax: 0.10.0
libtpu: 0.0.40
codegen_flags: <defaults>
</compile_context>

<pallas_src>
import jax
import jax.numpy as jnp
from jax import lax
from jax.experimental import pallas as pl
from jax.experimental.pallas import tpu as pltpu

M = 16     # sequence length
d = 1024   # model dim
dh = 512   # q/k dim
dv = 512   # v dim

_PACKED_COLS = 2 * dh + 128  # q | k | folded-v/fc column (+ zero lane padding)


def tf_kernel(x_ref, w_ref, o_ref):
    # x_ref: (B, M, d) f32
    # w_ref: (d, 2*dh + 128) bf16 = [Wq^T | Wk^T | Wv^T @ Wfc^T | zero-pad]
    # o_ref: (B, 1) f32
    B, Mq, dd = x_ref.shape
    x2 = x_ref[...].astype(jnp.bfloat16).reshape(B * Mq, dd)   # leading-dim merge

    # One weight-stationary MXU pass for q, k and the folded v/fc column.
    proj = jnp.dot(x2, w_ref[...], preferred_element_type=jnp.float32)  # (B*M, 2*dh+128)

    q_all = proj[:, :dh]                              # (B*M, dh)
    k_all = proj[:, dh:2 * dh]                        # (B*M, dh)
    vfc_all = proj[:, 2 * dh:2 * dh + 1]              # (B*M, 1)

    for b in range(B):                                # B is small & static (unrolled)
        lo, hi = b * Mq, (b + 1) * Mq
        qb = q_all[lo:hi]                             # (M, dh)
        kb = k_all[lo:hi]                             # (M, dh)
        vb = vfc_all[lo:hi]                           # (M, 1)

        # q @ k^T without materializing the transpose of k.
        qk = lax.dot_general(qb, kb, (((1,), (1,)), ((), ())),
                             preferred_element_type=jnp.float32)        # (M, M)
        qk = qk - jnp.max(qk, axis=1, keepdims=True)
        e = jnp.exp(qk)
        denom = jnp.sum(e, axis=1, keepdims=True)                       # (M, 1)
        # softmax denominator on the EUP; fold the final 1/M scale into the argument.
        inv = pl.reciprocal(denom * float(Mq), approx=True)             # (M, 1)
        a = jnp.sum(e * inv, axis=0, keepdims=True)                     # (1, M)

        out_b = jnp.dot(a, vb, preferred_element_type=jnp.float32)      # (1, 1)
        o_ref[pl.ds(b, 1), :] = out_b


def tf_prepare_params(wq, wk, wv, wfc):
    """One-time weight prep (off the hot path).

    PyTorch layouts: wq/wk (dh, d), wv (dv, d), wfc (1, dv).
    Returns packed bf16 weight of shape (d, 2*dh + 128):
        [Wq^T | Wk^T | Wv^T @ Wfc^T | zero pad to a lane multiple].
    """
    wq = jnp.asarray(wq, jnp.float32)
    wk = jnp.asarray(wk, jnp.float32)
    wv = jnp.asarray(wv, jnp.float32)
    wfc = jnp.asarray(wfc, jnp.float32)
    wvfc = wv.T @ wfc.T                                        # (d, 1) fold: v-proj + fc
    pad = jnp.zeros((d, _PACKED_COLS - 2 * dh - 1), jnp.float32)
    w = jnp.concatenate([wq.T, wk.T, wvfc, pad], axis=1)       # (d, 2*dh + 128)
    return w.astype(jnp.bfloat16)


def tf_forward(x, w_packed):
    """x: (B, M, d) f32; w_packed from tf_prepare_params."""
    B = x.shape[0]
    return pl.pallas_call(
        tf_kernel,
        out_shape=jax.ShapeDtypeStruct((B, 1), jnp.float32),
        # ~2.5 MB of operands: fully VMEM-resident, no grid/tiling needed.
        in_specs=[pl.BlockSpec(memory_space=pltpu.MemorySpace.VMEM)] * 2,
        out_specs=pl.BlockSpec(memory_space=pltpu.MemorySpace.VMEM),
    )(x, w_packed)


def tf_reference(x, wq, wk, wv, wfc):
    q = x @ wq.T
    k = x @ wk.T
    v = x @ wv.T
    qk = jnp.einsum("bqh,bkh->bqk", q, k)
    attn = jax.nn.softmax(qk, axis=2)
    a = jnp.sum(attn, axis=1, keepdims=True) / M
    z = jnp.squeeze(a @ v, axis=1)
    return z @ wfc.T


if __name__ == "__main__":
    key = jax.random.PRNGKey(0)
    kx, kq, kk, kv, kf = jax.random.split(key, 5)

    B = 2
    x = jax.random.normal(kx, (B, M, d), dtype=jnp.float32)

    # Deterministic param init mimicking nn.Linear uniform(-1/sqrt(fan_in), ...),
    # with the /16 rescale from TF.__init__ applied to q/k/v.
    bound = 1.0 / (d ** 0.5)
    wq = jax.random.uniform(kq, (dh, d), jnp.float32, -bound, bound) / 16
    wk = jax.random.uniform(kk, (dh, d), jnp.float32, -bound, bound) / 16
    wv = jax.random.uniform(kv, (dv, d), jnp.float32, -bound, bound) / 16
    bound_fc = 1.0 / (dv ** 0.5)
    wfc = jax.random.uniform(kf, (1, dv), jnp.float32, -bound_fc, bound_fc)

    w_packed = jax.block_until_ready(tf_prepare_params(wq, wk, wv, wfc))

    out = jax.block_until_ready(tf_forward(x, w_packed))
    ref = tf_reference(x, wq, wk, wv, wfc)

    assert out.shape == (B, 1), out.shape
    assert jnp.allclose(out, ref, rtol=2e-2, atol=2e-3), (out, ref)
    print("KERNEL_OK")
</pallas_src>

<mosaic_0001>
module attributes {stable_mosaic.version = 11 : i64} {
  func.func @tf_kernel(%arg0: memref<2x16x1024xf32, #tpu.memory_space<vmem>>, %arg1: memref<1024x1152xbf16, #tpu.memory_space<vmem>>, %arg2: memref<2x1xf32, #tpu.memory_space<vmem>>) attributes {dimension_semantics = [], scalar_prefetch = 0 : i64, scratch_operands = 0 : i64, tpu.core_type = #tpu.core_type<tc>} {
    %c0 = arith.constant 0 : index
    %c0_0 = arith.constant 0 : index
    %c0_1 = arith.constant 0 : index
    %0 = vector.load %arg0[%c0, %c0_0, %c0_1] : memref<2x16x1024xf32, #tpu.memory_space<vmem>>, vector<2x16x1024xf32>
    %1 = arith.truncf %0 : vector<2x16x1024xf32> to vector<2x16x1024xbf16>
    %2 = vector.shape_cast %1 : vector<2x16x1024xbf16> to vector<32x1024xbf16>
    %c0_2 = arith.constant 0 : index
    %c0_3 = arith.constant 0 : index
    %3 = vector.load %arg1[%c0_2, %c0_3] : memref<1024x1152xbf16, #tpu.memory_space<vmem>>, vector<1024x1152xbf16>
    %cst = arith.constant dense<0.000000e+00> : vector<32x1152xf32>
    %4 = tpu.matmul %2, %3, %cst {dimension_numbers = #tpu.dot_dimension_numbers<[1], [0], [0], [1], [0, 0, 1, 1], [], []>} : vector<32x1024xbf16>, vector<1024x1152xbf16>, vector<32x1152xf32> -> vector<32x1152xf32>
    %5 = vector.extract_strided_slice %4 {offsets = [0, 0], sizes = [32, 512], strides = [1, 1]} : vector<32x1152xf32> to vector<32x512xf32>
    %6 = vector.extract_strided_slice %4 {offsets = [0, 512], sizes = [32, 512], strides = [1, 1]} : vector<32x1152xf32> to vector<32x512xf32>
    %7 = vector.extract_strided_slice %4 {offsets = [0, 1024], sizes = [32, 1], strides = [1, 1]} : vector<32x1152xf32> to vector<32x1xf32>
    %8 = vector.extract_strided_slice %5 {offsets = [0, 0], sizes = [16, 512], strides = [1, 1]} : vector<32x512xf32> to vector<16x512xf32>
    %9 = vector.extract_strided_slice %6 {offsets = [0, 0], sizes = [16, 512], strides = [1, 1]} : vector<32x512xf32> to vector<16x512xf32>
    %10 = vector.extract_strided_slice %7 {offsets = [0, 0], sizes = [16, 1], strides = [1, 1]} : vector<32x1xf32> to vector<16x1xf32>
    %cst_4 = arith.constant dense<0.000000e+00> : vector<16x16xf32>
    %11 = tpu.matmul %8, %9, %cst_4 {dimension_numbers = #tpu.dot_dimension_numbers<[1], [1], [0], [0], [0, 0, 1, 0], [], []>} : vector<16x512xf32>, vector<16x512xf32>, vector<16x16xf32> -> vector<16x16xf32>
    %cst_5 = arith.constant dense<0xFF800000> : vector<16xf32>
    %12 = vector.multi_reduction <maximumf>, %11, %cst_5 [1] : vector<16x16xf32> to vector<16xf32>
    %13 = vector.shape_cast %12 : vector<16xf32> to vector<16x1xf32>
    %14 = vector.broadcast %13 : vector<16x1xf32> to vector<16x16xf32>
    %15 = arith.subf %11, %14 : vector<16x16xf32>
    %16 = math.exp %15 : vector<16x16xf32>
    %cst_6 = arith.constant dense<0.000000e+00> : vector<16xf32>
    %17 = vector.multi_reduction <add>, %16, %cst_6 [1] : vector<16x16xf32> to vector<16xf32>
    %18 = vector.shape_cast %17 : vector<16xf32> to vector<16x1xf32>
    %cst_7 = arith.constant 1.600000e+01 : f32
    %19 = vector.broadcast %cst_7 : f32 to vector<16x1xf32>
    %20 = arith.mulf %18, %19 : vector<16x1xf32>
    %21 = tpu.reciprocal %20 {approx = true} : vector<16x1xf32> -> vector<16x1xf32>
    %22 = vector.broadcast %21 : vector<16x1xf32> to vector<16x16xf32>
    %23 = arith.mulf %16, %22 : vector<16x16xf32>
    %cst_8 = arith.constant dense<0.000000e+00> : vector<16xf32>
    %24 = vector.multi_reduction <add>, %23, %cst_8 [0] : vector<16x16xf32> to vector<16xf32>
    %25 = vector.shape_cast %24 : vector<16xf32> to vector<1x16xf32>
    %cst_9 = arith.constant dense<0.000000e+00> : vector<1x1xf32>
    %26 = tpu.matmul %25, %10, %cst_9 {dimension_numbers = #tpu.dot_dimension_numbers<[1], [0], [0], [1], [0, 0, 1, 1], [], []>} : vector<1x16xf32>, vector<16x1xf32>, vector<1x1xf32> -> vector<1x1xf32>
    %c0_10 = arith.constant 0 : index
    %c0_11 = arith.constant 0 : index
    %27 = vector.load %arg2[%c0_10, %c0_11] : memref<2x1xf32, #tpu.memory_space<vmem>>, vector<1x1xf32>
    tpu.vector_store %arg2[%c0_10, %c0_11], %26 {strides = array<i32>} : memref<2x1xf32, #tpu.memory_space<vmem>>, vector<1x1xf32>,
    %28 = vector.extract_strided_slice %5 {offsets = [16, 0], sizes = [16, 512], strides = [1, 1]} : vector<32x512xf32> to vector<16x512xf32>
    %29 = vector.extract_strided_slice %6 {offsets = [16, 0], sizes = [16, 512], strides = [1, 1]} : vector<32x512xf32> to vector<16x512xf32>
    %30 = vector.extract_strided_slice %7 {offsets = [16, 0], sizes = [16, 1], strides = [1, 1]} : vector<32x1xf32> to vector<16x1xf32>
    %cst_12 = arith.constant dense<0.000000e+00> : vector<16x16xf32>
    %31 = tpu.matmul %28, %29, %cst_12 {dimension_numbers = #tpu.dot_dimension_numbers<[1], [1], [0], [0], [0, 0, 1, 0], [], []>} : vector<16x512xf32>, vector<16x512xf32>, vector<16x16xf32> -> vector<16x16xf32>
    %cst_13 = arith.constant dense<0xFF800000> : vector<16xf32>
    %32 = vector.multi_reduction <maximumf>, %31, %cst_13 [1] : vector<16x16xf32> to vector<16xf32>
    %33 = vector.shape_cast %32 : vector<16xf32> to vector<16x1xf32>
    %34 = vector.broadcast %33 : vector<16x1xf32> to vector<16x16xf32>
    %35 = arith.subf %31, %34 : vector<16x16xf32>
    %36 = math.exp %35 : vector<16x16xf32>
    %cst_14 = arith.constant dense<0.000000e+00> : vector<16xf32>
    %37 = vector.multi_reduction <add>, %36, %cst_14 [1] : vector<16x16xf32> to vector<16xf32>
    %38 = vector.shape_cast %37 : vector<16xf32> to vector<16x1xf32>
    %cst_15 = arith.constant 1.600000e+01 : f32
    %39 = vector.broadcast %cst_15 : f32 to vector<16x1xf32>
    %40 = arith.mulf %38, %39 : vector<16x1xf32>
    %41 = tpu.reciprocal %40 {approx = true} : vector<16x1xf32> -> vector<16x1xf32>
    %42 = vector.broadcast %41 : vector<16x1xf32> to vector<16x16xf32>
    %43 = arith.mulf %36, %42 : vector<16x16xf32>
    %cst_16 = arith.constant dense<0.000000e+00> : vector<16xf32>
    %44 = vector.multi_reduction <add>, %43, %cst_16 [0] : vector<16x16xf32> to vector<16xf32>
    %45 = vector.shape_cast %44 : vector<16xf32> to vector<1x16xf32>
    %cst_17 = arith.constant dense<0.000000e+00> : vector<1x1xf32>
    %46 = tpu.matmul %45, %30, %cst_17 {dimension_numbers = #tpu.dot_dimension_numbers<[1], [0], [0], [1], [0, 0, 1, 1], [], []>} : vector<1x16xf32>, vector<16x1xf32>, vector<1x1xf32> -> vector<1x1xf32>
    %c1 = arith.constant 1 : index
    %c0_18 = arith.constant 0 : index
    %47 = vector.load %arg2[%c1, %c0_18] : memref<2x1xf32, #tpu.memory_space<vmem>>, vector<1x1xf32>
    tpu.vector_store %arg2[%c1, %c0_18], %46 {strides = array<i32>} : memref<2x1xf32, #tpu.memory_space<vmem>>, vector<1x1xf32>,
    return
  }
}

</mosaic_0001>

<llo_original>
// kernel: tpu_custom_call.1
$region0: #{tpu_custom_call.1}
  #allocation0 [shape = 'u32[]', space=smem, size = 0x4, offset = 0x4, fixed_abs, tag = 'smem constant byte address 0x4 - core index']
  #allocation1 [shape = 'u32[144,128]{1,0:T(1,128)}', space=vmem, size = 0x12000, scoped, tag = 'internal scratch']
  %s0 = inlined_call_operand.hbm [shape: f32[2,16,1024], index: 0, kind: input, shape index: {}]
  %s1 = inlined_call_operand.hbm [shape: bf16[1024,1152], index: 1, kind: input, shape index: {}]
  %s2 = inlined_call_operand.vmem [shape: f32[2,1], index: 2, kind: output, shape index: {}]
  %s3 = sld [smem:[#allocation0]]
  $region26: #{tpu_custom_call.1} parent=0
    _
  %s5 = ssub.s32 1, %s3
  %s6 = scalar_select 0, %s5, %s3
  $region1: #{tpu_custom_call.1} parent=0
    #allocation2 [shape = 'u8[131072]{0}', space=vmem, size = 0x20000, scoped, tag = 'input window, operand 0, single buffered']
    #allocation3 [shape = 's32[1]{0}', space=sflag, size = 0x4, scoped, tag = 'scoped memory for tpu_custom_call.1']
    #allocation4 [shape = 'u8[2359296]{0}', space=vmem, size = 0x240000, scoped, tag = 'input window, operand 1, single buffered']
    #allocation5 [shape = 's32[1]{0}', space=sflag, size = 0x4, scoped, tag = 'scoped memory for tpu_custom_call.1']
    %7 = vsyncpa [#allocation3], 0
    %8 = vsyncpa [#allocation5], 0
    // Predicated region
    $region2: #{tpu_custom_call.1} parent=1 // pred_check
      _
    $region3: #{tpu_custom_call.1} parent=1 // pred_check_branch
      %10 = sbr.rel (0) target = $region5
    $region4: #{tpu_custom_call.1} parent=1 // pred_region
      %s12 = ssub.s32 4096, 4096
      %13 = vsyncadd [#allocation3], %s12
      %s14 = sshll.u32 [#allocation2], 4
      %s15 = int_to_ptr.vmem [resolvable:$true] %s14
      %20 = dma.hbm_to_vmem [thread:$0]  %s0, 4096, %s15, [#allocation3], 1024, 1024, 64
    $region5: #{tpu_custom_call.1} parent=1 // pred_fallthru
      _
    // Predicated region
    $region6: #{tpu_custom_call.1} parent=1 // pred_check
      _
    $region7: #{tpu_custom_call.1} parent=1 // pred_check_branch
      %22 = sbr.rel (0) target = $region9
    $region8: #{tpu_custom_call.1} parent=1 // pred_region
      %s24 = ssub.s32 73728, 73728
      %25 = vsyncadd [#allocation5], %s24
      %s26 = sshll.u32 [#allocation4], 4
      %s27 = int_to_ptr.vmem [resolvable:$true] %s26
      %32 = dma.hbm_to_vmem [thread:$0]  %s1, 73728, %s27, [#allocation5], 576, 576, 36
    $region9: #{tpu_custom_call.1} parent=1 // pred_fallthru
      _
    // Predicated region
    $region10: #{tpu_custom_call.1} parent=1 // pred_check
      _
    $region11: #{tpu_custom_call.1} parent=1 // pred_check_branch
      %34 = sbr.rel (0) target = $region13
    $region12: #{tpu_custom_call.1} parent=1 // pred_region
      %35 = dma.done [#allocation3], 4096
    $region13: #{tpu_custom_call.1} parent=1 // pred_fallthru
      _
    // Predicated region
    $region14: #{tpu_custom_call.1} parent=1 // pred_check
      _
    $region15: #{tpu_custom_call.1} parent=1 // pred_check_branch
      %37 = sbr.rel (0) target = $region17
    $region16: #{tpu_custom_call.1} parent=1 // pred_region
      %38 = dma.done [#allocation5], 73728
    $region17: #{tpu_custom_call.1} parent=1 // pred_fallthru
      _
    %v40 = vld [vmem:[#allocation2] sm:$0xff]
    %v41 = vld [vmem:[#allocation2 + $0x8] sm:$0xff]
    %v42 = vld [vmem:[#allocation2 + $0x10] sm:$0xff]
    %v43 = vld [vmem:[#allocation2 + $0x18] sm:$0xff]
    %v44 = vld [vmem:[#allocation2 + $0x20] sm:$0xff]
    %v45 = vld [vmem:[#allocation2 + $0x28] sm:$0xff]
    %v46 = vld [vmem:[#allocation2 + $0x30] sm:$0xff]
    %v47 = vld [vmem:[#allocation2 + $0x38] sm:$0xff]
    %v48 = vld [vmem:[#allocation2 + $0x40] sm:$0xff]
    %v49 = vld [vmem:[#allocation2 + $0x48] sm:$0xff]
    %v50 = vld [vmem:[#allocation2 + $0x50] sm:$0xff]
    %v51 = vld [vmem:[#allocation2 + $0x58] sm:$0xff]
    %v52 = vld [vmem:[#allocation2 + $0x60] sm:$0xff]
    %v53 = vld [vmem:[#allocation2 + $0x68] sm:$0xff]
    %v54 = vld [vmem:[#allocation2 + $0x70] sm:$0xff]
    %v55 = vld [vmem:[#allocation2 + $0x78] sm:$0xff]
    %v56 = vld [vmem:[#allocation2 + $0x80] sm:$0xff]
    %v57 = vld [vmem:[#allocation2 + $0x88] sm:$0xff]
    %v58 = vld [vmem:[#allocation2 + $0x90] sm:$0xff]
    %v59 = vld [vmem:[#allocation2 + $0x98] sm:$0xff]
    %v60 = vld [vmem:[#allocation2 + $0xa0] sm:$0xff]
    %v61 = vld [vmem:[#allocation2 + $0xa8] sm:$0xff]
    %v62 = vld [vmem:[#allocation2 + $0xb0] sm:$0xff]
    %v63 = vld [vmem:[#allocation2 + $0xb8] sm:$0xff]
    %v64 = vld [vmem:[#allocation2 + $0xc0] sm:$0xff]
    %v65 = vld [vmem:[#allocation2 + $0xc8] sm:$0xff]
    %v66 = vld [vmem:[#allocation2 + $0xd0] sm:$0xff]
    %v67 = vld [vmem:[#allocation2 + $0xd8] sm:$0xff]
    %v68 = vld [vmem:[#allocation2 + $0xe0] sm:$0xff]
    %v69 = vld [vmem:[#allocation2 + $0xe8] sm:$0xff]
    %v70 = vld [vmem:[#allocation2 + $0xf0] sm:$0xff]
    %v71 = vld [vmem:[#allocation2 + $0xf8] sm:$0xff]
    %v72 = vpack.c.bf16 %v48, %v40
    %v73 = vpack.c.bf16 %v49, %v41
    %v74 = vpack.c.bf16 %v50, %v42
    %v75 = vpack.c.bf16 %v51, %v43
    %v76 = vpack.c.bf16 %v52, %v44
    %v77 = vpack.c.bf16 %v53, %v45
    %v78 = vpack.c.bf16 %v54, %v46
    %v79 = vpack.c.bf16 %v55, %v47
    %v80 = vpack.c.bf16 %v64, %v56
    %v81 = vpack.c.bf16 %v65, %v57
    %v82 = vpack.c.bf16 %v66, %v58
    %v83 = vpack.c.bf16 %v67, %v59
    %v84 = vpack.c.bf16 %v68, %v60
    %v85 = vpack.c.bf16 %v69, %v61
    %v86 = vpack.c.bf16 %v70, %v62
    %v87 = vpack.c.bf16 %v71, %v63
    %v88 = vld [vmem:[#allocation4] sm:$0xff]
    %v89 = vld [vmem:[#allocation4 + $0x8] sm:$0xff]
    %v90 = vld [vmem:[#allocation4 + $0x10] sm:$0xff]
    %v91 = vld [vmem:[#allocation4 + $0x18] sm:$0xff]
    %v92 = vld [vmem:[#allocation4 + $0x20] sm:$0xf]
    %v93 = vld [vmem:[#allocation4 + $0x24] sm:$0xff]
    %v94 = vld [vmem:[#allocation4 + $0x2c] sm:$0xff]
    %v95 = vld [vmem:[#allocation4 + $0x34] sm:$0xff]
    %v96 = vld [vmem:[#allocation4 + $0x3c] sm:$0xff]
    %v97 = vld [vmem:[#allocation4 + $0x44] sm:$0xf]
    %v98 = vld [vmem:[#allocation4 + $0x48] sm:$0xff]
    %v99 = vld [vmem:[#allocation4 + $0x50] sm:$0xff]
    %v100 = vld [vmem:[#allocation4 + $0x58] sm:$0xff]
    %v101 = vld [vmem:[#allocation4 + $0x60] sm:$0xff]
    %v102 = vld [vmem:[#allocation4 + $0x68] sm:$0xf]
    %v103 = vld [vmem:[#allocation4 + $0x6c] sm:$0xff]
    %v104 = vld [vmem:[#allocation4 + $0x74] sm:$0xff]
    %v105 = vld [vmem:[#allocation4 + $0x7c] sm:$0xff]
    %v106 = vld [vmem:[#allocation4 + $0x84] sm:$0xff]
    %v107 = vld [vmem:[#allocation4 + $0x8c] sm:$0xf]
    %v108 = vld [vmem:[#allocation4 + $0x90] sm:$0xff]
    %v109 = vld [vmem:[#allocation4 + $0x98] sm:$0xff]
    %v110 = vld [vmem:[#allocation4 + $0xa0] sm:$0xff]
    %v111 = vld [vmem:[#allocation4 + $0xa8] sm:$0xff]
    %v112 = vld [vmem:[#allocation4 + $0xb0] sm:$0xf]
    %v113 = vld [vmem:[#allocation4 + $0xb4] sm:$0xff]
    %v114 = vld [vmem:[#allocation4 + $0xbc] sm:$0xff]
    %v115 = vld [vmem:[#allocation4 + $0xc4] sm:$0xff]
    %v116 = vld [vmem:[#allocation4 + $0xcc] sm:$0xff]
    %v117 = vld [vmem:[#allocation4 + $0xd4] sm:$0xf]
    %v118 = vld [vmem:[#allocation4 + $0xd8] sm:$0xff]
    %v119 = vld [vmem:[#allocation4 + $0xe0] sm:$0xff]
    %v120 = vld [vmem:[#allocation4 + $0xe8] sm:$0xff]
    %v121 = vld [vmem:[#allocation4 + $0xf0] sm:$0xff]
    %v122 = vld [vmem:[#allocation4 + $0xf8] sm:$0xf]
    %v123 = vld [vmem:[#allocation4 + $0xfc] sm:$0xff]
    %v124 = vld [vmem:[#allocation4 + $0x104] sm:$0xff]
    %v125 = vld [vmem:[#allocation4 + $0x10c] sm:$0xff]
    %v126 = vld [vmem:[#allocation4 + $0x114] sm:$0xff]
    %v127 = vld [vmem:[#allocation4 + $0x11c] sm:$0xf]
    %v128 = vld [vmem:[#allocation4 + $0x120] sm:$0xff]
    %v129 = vld [vmem:[#allocation4 + $0x128] sm:$0xff]
    %v130 = vld [vmem:[#allocation4 + $0x130] sm:$0xff]
    %v131 = vld [vmem:[#allocation4 + $0x138] sm:$0xff]
    %v132 = vld [vmem:[#allocation4 + $0x140] sm:$0xf]
    %v133 = vld [vmem:[#allocation4 + $0x144] sm:$0xff]
    %v134 = vld [vmem:[#allocation4 + $0x14c] sm:$0xff]
    %v135 = vld [vmem:[#allocation4 + $0x154] sm:$0xff]
    %v136 = vld [vmem:[#allocation4 + $0x15c] sm:$0xff]
    %v137 = vld [vmem:[#allocation4 + $0x164] sm:$0xf]
    %v138 = vld [vmem:[#allocation4 + $0x168] sm:$0xff]
    %v139 = vld [vmem:[#allocation4 + $0x170] sm:$0xff]
    %v140 = vld [vmem:[#allocation4 + $0x178] sm:$0xff]
    %v141 = vld [vmem:[#allocation4 + $0x180] sm:$0xff]
    %v142 = vld [vmem:[#allocation4 + $0x188] sm:$0xf]
    %v143 = vld [vmem:[#allocation4 + $0x18c] sm:$0xff]
    %v144 = vld [vmem:[#allocation4 + $0x194] sm:$0xff]
    %v145 = vld [vmem:[#allocation4 + $0x19c] sm:$0xff]
    %v146 = vld [vmem:[#allocation4 + $0x1a4] sm:$0xff]
    %v147 = vld [vmem:[#allocation4 + $0x1ac] sm:$0xf]
    %v148 = vld [vmem:[#allocation4 + $0x1b0] sm:$0xff]
    %v149 = vld [vmem:[#allocation4 + $0x1b8] sm:$0xff]
    %v150 = vld [vmem:[#allocation4 + $0x1c0] sm:$0xff]
    %v151 = vld [vmem:[#allocation4 + $0x1c8] sm:$0xff]
    %v152 = vld [vmem:[#allocation4 + $0x1d0] sm:$0xf]
    %v153 = vld [vmem:[#allocation4 + $0x1d4] sm:$0xff]
    %v154 = vld [vmem:[#allocation4 + $0x1dc] sm:$0xff]
    %v155 = vld [vmem:[#allocation4 + $0x1e4] sm:$0xff]
    %v156 = vld [vmem:[#allocation4 + $0x1ec] sm:$0xff]
    %v157 = vld [vmem:[#allocation4 + $0x1f4] sm:$0xf]
    %v158 = vld [vmem:[#allocation4 + $0x1f8] sm:$0xff]
    %v159 = vld [vmem:[#allocation4 + $0x200] sm:$0xff]
    %v160 = vld [vmem:[#allocation4 + $0x208] sm:$0xff]
    %v161 = vld [vmem:[#allocation4 + $0x210] sm:$0xff]
    %v162 = vld [vmem:[#allocation4 + $0x218] sm:$0xf]
    %v163 = vld [vmem:[#allocation4 + $0x21c] sm:$0xff]
    %v164 = vld [vmem:[#allocation4 + $0x224] sm:$0xff]
    %v165 = vld [vmem:[#allocation4 + $0x22c] sm:$0xff]
    %v166 = vld [vmem:[#allocation4 + $0x234] sm:$0xff]
    %v167 = vld [vmem:[#allocation4 + $0x23c] sm:$0xf]
    %v168 = vld [vmem:[#allocation4 + $0x240] sm:$0xff]
    %v169 = vld [vmem:[#allocation4 + $0x248] sm:$0xff]
    %v170 = vld [vmem:[#allocation4 + $0x250] sm:$0xff]
    %v171 = vld [vmem:[#allocation4 + $0x258] sm:$0xff]
    %v172 = vld [vmem:[#allocation4 + $0x260] sm:$0xf]
    %v173 = vld [vmem:[#allocation4 + $0x264] sm:$0xff]
    %v174 = vld [vmem:[#allocation4 + $0x26c] sm:$0xff]
    %v175 = vld [vmem:[#allocation4 + $0x274] sm:$0xff]
    %v176 = vld [vmem:[#allocation4 + $0x27c] sm:$0xff]
    %v177 = vld [vmem:[#allocation4 + $0x284] sm:$0xf]
    %v178 = vld [vmem:[#allocation4 + $0x288] sm:$0xff]
    %v179 = vld [vmem:[#allocation4 + $0x290] sm:$0xff]
    %v180 = vld [vmem:[#allocation4 + $0x298] sm:$0xff]
    %v181 = vld [vmem:[#allocation4 + $0x2a0] sm:$0xff]
    %v182 = vld [vmem:[#allocation4 + $0x2a8] sm:$0xf]
    %v183 = vld [vmem:[#allocation4 + $0x2ac] sm:$0xff]
    %v184 = vld [vmem:[#allocation4 + $0x2b4] sm:$0xff]
    %v185 = vld [vmem:[#allocation4 + $0x2bc] sm:$0xff]
    %v186 = vld [vmem:[#allocation4 + $0x2c4] sm:$0xff]
    %v187 = vld [vmem:[#allocation4 + $0x2cc] sm:$0xf]
    %v188 = vld [vmem:[#allocation4 + $0x2d0] sm:$0xff]
    %v189 = vld [vmem:[#allocation4 + $0x2d8] sm:$0xff]
    %v190 = vld [vmem:[#allocation4 + $0x2e0] sm:$0xff]
    %v191 = vld [vmem:[#allocation4 + $0x2e8] sm:$0xff]
    %v192 = vld [vmem:[#allocation4 + $0x2f0] sm:$0xf]
    %v193 = vld [vmem:[#allocation4 + $0x2f4] sm:$0xff]
    %v194 = vld [vmem:[#allocation4 + $0x2fc] sm:$0xff]
    %v195 = vld [vmem:[#allocation4 + $0x304] sm:$0xff]
    %v196 = vld [vmem:[#allocation4 + $0x30c] sm:$0xff]
    %v197 = vld [vmem:[#allocation4 + $0x314] sm:$0xf]
    %v198 = vld [vmem:[#allocation4 + $0x318] sm:$0xff]
    %v199 = vld [vmem:[#allocation4 + $0x320] sm:$0xff]
    %v200 = vld [vmem:[#allocation4 + $0x328] sm:$0xff]
    %v201 = vld [vmem:[#allocation4 + $0x330] sm:$0xff]
    %v202 = vld [vmem:[#allocation4 + $0x338] sm:$0xf]
    %v203 = vld [vmem:[#allocation4 + $0x33c] sm:$0xff]
    %v204 = vld [vmem:[#allocation4 + $0x344] sm:$0xff]
    %v205 = vld [vmem:[#allocation4 + $0x34c] sm:$0xff]
    %v206 = vld [vmem:[#allocation4 + $0x354] sm:$0xff]
    %v207 = vld [vmem:[#allocation4 + $0x35c] sm:$0xf]
    %v208 = vld [vmem:[#allocation4 + $0x360] sm:$0xff]
    %v209 = vld [vmem:[#allocation4 + $0x368] sm:$0xff]
    %v210 = vld [vmem:[#allocation4 + $0x370] sm:$0xff]
    %v211 = vld [vmem:[#allocation4 + $0x378] sm:$0xff]
    %v212 = vld [vmem:[#allocation4 + $0x380] sm:$0xf]
    %v213 = vld [vmem:[#allocation4 + $0x384] sm:$0xff]
    %v214 = vld [vmem:[#allocation4 + $0x38c] sm:$0xff]
    %v215 = vld [vmem:[#allocation4 + $0x394] sm:$0xff]
    %v216 = vld [vmem:[#allocation4 + $0x39c] sm:$0xff]
    %v217 = vld [vmem:[#allocation4 + $0x3a4] sm:$0xf]
    %v218 = vld [vmem:[#allocation4 + $0x3a8] sm:$0xff]
    %v219 = vld [vmem:[#allocation4 + $0x3b0] sm:$0xff]
    %v220 = vld [vmem:[#allocation4 + $0x3b8] sm:$0xff]
    %v221 = vld [vmem:[#allocation4 + $0x3c0] sm:$0xff]
    %v222 = vld [vmem:[#allocation4 + $0x3c8] sm:$0xf]
    %v223 = vld [vmem:[#allocation4 + $0x3cc] sm:$0xff]
    %v224 = vld [vmem:[#allocation4 + $0x3d4] sm:$0xff]
    %v225 = vld [vmem:[#allocation4 + $0x3dc] sm:$0xff]
    %v226 = vld [vmem:[#allocation4 + $0x3e4] sm:$0xff]
    %v227 = vld [vmem:[#allocation4 + $0x3ec] sm:$0xf]
    %v228 = vld [vmem:[#allocation4 + $0x3f0] sm:$0xff]
    %v229 = vld [vmem:[#allocation4 + $0x3f8] sm:$0xff]
    %v230 = vld [vmem:[#allocation4 + $0x400] sm:$0xff]
    %v231 = vld [vmem:[#allocation4 + $0x408] sm:$0xff]
    %v232 = vld [vmem:[#allocation4 + $0x410] sm:$0xf]
    %v233 = vld [vmem:[#allocation4 + $0x414] sm:$0xff]
    %v234 = vld [vmem:[#allocation4 + $0x41c] sm:$0xff]
    %v235 = vld [vmem:[#allocation4 + $0x424] sm:$0xff]
    %v236 = vld [vmem:[#allocation4 + $0x42c] sm:$0xff]
    %v237 = vld [vmem:[#allocation4 + $0x434] sm:$0xf]
    %v238 = vld [vmem:[#allocation4 + $0x438] sm:$0xff]
    %v239 = vld [vmem:[#allocation4 + $0x440] sm:$0xff]
    %v240 = vld [vmem:[#allocation4 + $0x448] sm:$0xff]
    %v241 = vld [vmem:[#allocation4 + $0x450] sm:$0xff]
    %v242 = vld [vmem:[#allocation4 + $0x458] sm:$0xf]
    %v243 = vld [vmem:[#allocation4 + $0x45c] sm:$0xff]
    %v244 = vld [vmem:[#allocation4 + $0x464] sm:$0xff]
    %v245 = vld [vmem:[#allocation4 + $0x46c] sm:$0xff]
    %v246 = vld [vmem:[#allocation4 + $0x474] sm:$0xff]
    %v247 = vld [vmem:[#allocation4 + $0x47c] sm:$0xf]
    %v248 = vld [vmem:[#allocation4 + $0x480] sm:$0xff]
    %v249 = vld [vmem:[#allocation4 + $0x488] sm:$0xff]
    %v250 = vld [vmem:[#allocation4 + $0x490] sm:$0xff]
    %v251 = vld [vmem:[#allocation4 + $0x498] sm:$0xff]
    %v252 = vld [vmem:[#allocation4 + $0x4a0] sm:$0xf]
    %v253 = vld [vmem:[#allocation4 + $0x4a4] sm:$0xff]
    %v254 = vld [vmem:[#allocation4 + $0x4ac] sm:$0xff]
    %v255 = vld [vmem:[#allocation4 + $0x4b4] sm:$0xff]
    %v256 = vld [vmem:[#allocation4 + $0x4bc] sm:$0xff]
    %v257 = vld [vmem:[#allocation4 + $0x4c4] sm:$0xf]
    %v258 = vld [vmem:[#allocation4 + $0x4c8] sm:$0xff]
    %v259 = vld [vmem:[#allocation4 + $0x4d0] sm:$0xff]
    %v260 = vld [vmem:[#allocation4 + $0x4d8] sm:$0xff]
    %v261 = vld [vmem:[#allocation4 + $0x4e0] sm:$0xff]
    %v262 = vld [vmem:[#allocation4 + $0x4e8] sm:$0xf]
    %v263 = vld [vmem:[#allocation4 + $0x4ec] sm:$0xff]
    %v264 = vld [vmem:[#allocation4 + $0x4f4] sm:$0xff]
    %v265 = vld [vmem:[#allocation4 + $0x4fc] sm:$0xff]
    %v266 = vld [vmem:[#allocation4 + $0x504] sm:$0xff]
    %v267 = vld [vmem:[#allocation4 + $0x50c] sm:$0xf]
    %v268 = vld [vmem:[#allocation4 + $0x510] sm:$0xff]
    %v269 = vld [vmem:[#allocation4 + $0x518] sm:$0xff]
    %v270 = vld [vmem:[#allocation4 + $0x520] sm:$0xff]
    %v271 = vld [vmem:[#allocation4 + $0x528] sm:$0xff]
    %v272 = vld [vmem:[#allocation4 + $0x530] sm:$0xf]
    %v273 = vld [vmem:[#allocation4 + $0x534] sm:$0xff]
    %v274 = vld [vmem:[#allocation4 + $0x53c] sm:$0xff]
    %v275 = vld [vmem:[#allocation4 + $0x544] sm:$0xff]
    %v276 = vld [vmem:[#allocation4 + $0x54c] sm:$0xff]
    %v277 = vld [vmem:[#allocation4 + $0x554] sm:$0xf]
    %v278 = vld [vmem:[#allocation4 + $0x558] sm:$0xff]
    %v279 = vld [vmem:[#allocation4 + $0x560] sm:$0xff]
    %v280 = vld [vmem:[#allocation4 + $0x568] sm:$0xff]
    %v281 = vld [vmem:[#allocation4 + $0x570] sm:$0xff]
    %v282 = vld [vmem:[#allocation4 + $0x578] sm:$0xf]
    %v283 = vld [vmem:[#allocation4 + $0x57c] sm:$0xff]
    %v284 = vld [vmem:[#allocation4 + $0x584] sm:$0xff]
    %v285 = vld [vmem:[#allocation4 + $0x58c] sm:$0xff]
    %v286 = vld [vmem:[#allocation4 + $0x594] sm:$0xff]
    %v287 = vld [vmem:[#allocation4 + $0x59c] sm:$0xf]
    %v288 = vld [vmem:[#allocation4 + $0x5a0] sm:$0xff]
    %v289 = vld [vmem:[#allocation4 + $0x5a8] sm:$0xff]
    %v290 = vld [vmem:[#allocation4 + $0x5b0] sm:$0xff]
    %v291 = vld [vmem:[#allocation4 + $0x5b8] sm:$0xff]
    %v292 = vld [vmem:[#allocation4 + $0x5c0] sm:$0xf]
    %v293 = vld [vmem:[#allocation4 + $0x5c4] sm:$0xff]
    %v294 = vld [vmem:[#allocation4 + $0x5cc] sm:$0xff]
    %v295 = vld [vmem:[#allocation4 + $0x5d4] sm:$0xff]
    %v296 = vld [vmem:[#allocation4 + $0x5dc] sm:$0xff]
    %v297 = vld [vmem:[#allocation4 + $0x5e4] sm:$0xf]
    %v298 = vld [vmem:[#allocation4 + $0x5e8] sm:$0xff]
    %v299 = vld [vmem:[#allocation4 + $0x5f0] sm:$0xff]
    %v300 = vld [vmem:[#allocation4 + $0x5f8] sm:$0xff]
    %v301 = vld [vmem:[#allocation4 + $0x600] sm:$0xff]
    %v302 = vld [vmem:[#allocation4 + $0x608] sm:$0xf]
    %v303 = vld [vmem:[#allocation4 + $0x60c] sm:$0xff]
    %v304 = vld [vmem:[#allocation4 + $0x614] sm:$0xff]
    %v305 = vld [vmem:[#allocation4 + $0x61c] sm:$0xff]
    %v306 = vld [vmem:[#allocation4 + $0x624] sm:$0xff]
    %v307 = vld [vmem:[#allocation4 + $0x62c] sm:$0xf]
    %v308 = vld [vmem:[#allocation4 + $0x630] sm:$0xff]
    %v309 = vld [vmem:[#allocation4 + $0x638] sm:$0xff]
    %v310 = vld [vmem:[#allocation4 + $0x640] sm:$0xff]
    %v311 = vld [vmem:[#allocation4 + $0x648] sm:$0xff]
    %v312 = vld [vmem:[#allocation4 + $0x650] sm:$0xf]
    %v313 = vld [vmem:[#allocation4 + $0x654] sm:$0xff]
    %v314 = vld [vmem:[#allocation4 + $0x65c] sm:$0xff]
    %v315 = vld [vmem:[#allocation4 + $0x664] sm:$0xff]
    %v316 = vld [vmem:[#allocation4 + $0x66c] sm:$0xff]
    %v317 = vld [vmem:[#allocation4 + $0x674] sm:$0xf]
    %v318 = vld [vmem:[#allocation4 + $0x678] sm:$0xff]
    %v319 = vld [vmem:[#allocation4 + $0x680] sm:$0xff]
    %v320 = vld [vmem:[#allocation4 + $0x688] sm:$0xff]
    %v321 = vld [vmem:[#allocation4 + $0x690] sm:$0xff]
    %v322 = vld [vmem:[#allocation4 + $0x698] sm:$0xf]
    %v323 = vld [vmem:[#allocation4 + $0x69c] sm:$0xff]
    %v324 = vld [vmem:[#allocation4 + $0x6a4] sm:$0xff]
    %v325 = vld [vmem:[#allocation4 + $0x6ac] sm:$0xff]
    %v326 = vld [vmem:[#allocation4 + $0x6b4] sm:$0xff]
    %v327 = vld [vmem:[#allocation4 + $0x6bc] sm:$0xf]
    %v328 = vld [vmem:[#allocation4 + $0x6c0] sm:$0xff]
    %v329 = vld [vmem:[#allocation4 + $0x6c8] sm:$0xff]
    %v330 = vld [vmem:[#allocation4 + $0x6d0] sm:$0xff]
    %v331 = vld [vmem:[#allocation4 + $0x6d8] sm:$0xff]
    %v332 = vld [vmem:[#allocation4 + $0x6e0] sm:$0xf]
    %v333 = vld [vmem:[#allocation4 + $0x6e4] sm:$0xff]
    %v334 = vld [vmem:[#allocation4 + $0x6ec] sm:$0xff]
    %v335 = vld [vmem:[#allocation4 + $0x6f4] sm:$0xff]
    %v336 = vld [vmem:[#allocation4 + $0x6fc] sm:$0xff]
    %v337 = vld [vmem:[#allocation4 + $0x704] sm:$0xf]
    %v338 = vld [vmem:[#allocation4 + $0x708] sm:$0xff]
    %v339 = vld [vmem:[#allocation4 + $0x710] sm:$0xff]
    %v340 = vld [vmem:[#allocation4 + $0x718] sm:$0xff]
    %v341 = vld [vmem:[#allocation4 + $0x720] sm:$0xff]
    %v342 = vld [vmem:[#allocation4 + $0x728] sm:$0xf]
    %v343 = vld [vmem:[#allocation4 + $0x72c] sm:$0xff]
    %v344 = vld [vmem:[#allocation4 + $0x734] sm:$0xff]
    %v345 = vld [vmem:[#allocation4 + $0x73c] sm:$0xff]
    %v346 = vld [vmem:[#allocation4 + $0x744] sm:$0xff]
    %v347 = vld [vmem:[#allocation4 + $0x74c] sm:$0xf]
    %v348 = vld [vmem:[#allocation4 + $0x750] sm:$0xff]
    %v349 = vld [vmem:[#allocation4 + $0x758] sm:$0xff]
    %v350 = vld [vmem:[#allocation4 + $0x760] sm:$0xff]
    %v351 = vld [vmem:[#allocation4 + $0x768] sm:$0xff]
    %v352 = vld [vmem:[#allocation4 + $0x770] sm:$0xf]
    %v353 = vld [vmem:[#allocation4 + $0x774] sm:$0xff]
    %v354 = vld [vmem:[#allocation4 + $0x77c] sm:$0xff]
    %v355 = vld [vmem:[#allocation4 + $0x784] sm:$0xff]
    %v356 = vld [vmem:[#allocation4 + $0x78c] sm:$0xff]
    %v357 = vld [vmem:[#allocation4 + $0x794] sm:$0xf]
    %v358 = vld [vmem:[#allocation4 + $0x798] sm:$0xff]
    %v359 = vld [vmem:[#allocation4 + $0x7a0] sm:$0xff]
    %v360 = vld [vmem:[#allocation4 + $0x7a8] sm:$0xff]
    %v361 = vld [vmem:[#allocation4 + $0x7b0] sm:$0xff]
    %v362 = vld [vmem:[#allocation4 + $0x7b8] sm:$0xf]
    %v363 = vld [vmem:[#allocation4 + $0x7bc] sm:$0xff]
    %v364 = vld [vmem:[#allocation4 + $0x7c4] sm:$0xff]
    %v365 = vld [vmem:[#allocation4 + $0x7cc] sm:$0xff]
    %v366 = vld [vmem:[#allocation4 + $0x7d4] sm:$0xff]
    %v367 = vld [vmem:[#allocation4 + $0x7dc] sm:$0xf]
    %v368 = vld [vmem:[#allocation4 + $0x7e0] sm:$0xff]
    %v369 = vld [vmem:[#allocation4 + $0x7e8] sm:$0xff]
    %v370 = vld [vmem:[#allocation4 + $0x7f0] sm:$0xff]
    %v371 = vld [vmem:[#allocation4 + $0x7f8] sm:$0xff]
    %v372 = vld [vmem:[#allocation4 + $0x800] sm:$0xf]
    %v373 = vld [vmem:[#allocation4 + $0x804] sm:$0xff]
    %v374 = vld [vmem:[#allocation4 + $0x80c] sm:$0xff]
    %v375 = vld [vmem:[#allocation4 + $0x814] sm:$0xff]
    %v376 = vld [vmem:[#allocation4 + $0x81c] sm:$0xff]
    %v377 = vld [vmem:[#allocation4 + $0x824] sm:$0xf]
    %v378 = vld [vmem:[#allocation4 + $0x828] sm:$0xff]
    %v379 = vld [vmem:[#allocation4 + $0x830] sm:$0xff]
    %v380 = vld [vmem:[#allocation4 + $0x838] sm:$0xff]
    %v381 = vld [vmem:[#allocation4 + $0x840] sm:$0xff]
    %v382 = vld [vmem:[#allocation4 + $0x848] sm:$0xf]
    %v383 = vld [vmem:[#allocation4 + $0x84c] sm:$0xff]
    %v384 = vld [vmem:[#allocation4 + $0x854] sm:$0xff]
    %v385 = vld [vmem:[#allocation4 + $0x85c] sm:$0xff]
    %v386 = vld [vmem:[#allocation4 + $0x864] sm:$0xff]
    %v387 = vld [vmem:[#allocation4 + $0x86c] sm:$0xf]
    %v388 = vld [vmem:[#allocation4 + $0x870] sm:$0xff]
    %v389 = vld [vmem:[#allocation4 + $0x878] sm:$0xff]
    %v390 = vld [vmem:[#allocation4 + $0x880] sm:$0xff]
    %v391 = vld [vmem:[#allocation4 + $0x888] sm:$0xff]
    %v392 = vld [vmem:[#allocation4 + $0x890] sm:$0xf]
    %v393 = vld [vmem:[#allocation4 + $0x894] sm:$0xff]
    %v394 = vld [vmem:[#allocation4 + $0x89c] sm:$0xff]
    %v395 = vld [vmem:[#allocation4 + $0x8a4] sm:$0xff]
    %v396 = vld [vmem:[#allocation4 + $0x8ac] sm:$0xff]
    %v397 = vld [vmem:[#allocation4 + $0x8b4] sm:$0xf]
    %v398 = vld [vmem:[#allocation4 + $0x8b8] sm:$0xff]
    %v399 = vld [vmem:[#allocation4 + $0x8c0] sm:$0xff]
    %v400 = vld [vmem:[#allocation4 + $0x8c8] sm:$0xff]
    %v401 = vld [vmem:[#allocation4 + $0x8d0] sm:$0xff]
    %v402 = vld [vmem:[#allocation4 + $0x8d8] sm:$0xf]
    %v403 = vld [vmem:[#allocation4 + $0x8dc] sm:$0xff]
    %v404 = vld [vmem:[#allocation4 + $0x8e4] sm:$0xff]
    %v405 = vld [vmem:[#allocation4 + $0x8ec] sm:$0xff]
    %v406 = vld [vmem:[#allocation4 + $0x8f4] sm:$0xff]
    %v407 = vld [vmem:[#allocation4 + $0x8fc] sm:$0xf]
    %v408 = vld [vmem:[#allocation4 + $0x900] sm:$0xff]
    %v409 = vld [vmem:[#allocation4 + $0x908] sm:$0xff]
    %v410 = vld [vmem:[#allocation4 + $0x910] sm:$0xff]
    %v411 = vld [vmem:[#allocation4 + $0x918] sm:$0xff]
    %v412 = vld [vmem:[#allocation4 + $0x920] sm:$0xf]
    %v413 = vld [vmem:[#allocation4 + $0x924] sm:$0xff]
    %v414 = vld [vmem:[#allocation4 + $0x92c] sm:$0xff]
    %v415 = vld [vmem:[#allocation4 + $0x934] sm:$0xff]
    %v416 = vld [vmem:[#allocation4 + $0x93c] sm:$0xff]
    %v417 = vld [vmem:[#allocation4 + $0x944] sm:$0xf]
    %v418 = vld [vmem:[#allocation4 + $0x948] sm:$0xff]
    %v419 = vld [vmem:[#allocation4 + $0x950] sm:$0xff]
    %v420 = vld [vmem:[#allocation4 + $0x958] sm:$0xff]
    %v421 = vld [vmem:[#allocation4 + $0x960] sm:$0xff]
    %v422 = vld [vmem:[#allocation4 + $0x968] sm:$0xf]
    %v423 = vld [vmem:[#allocation4 + $0x96c] sm:$0xff]
    %v424 = vld [vmem:[#allocation4 + $0x974] sm:$0xff]
    %v425 = vld [vmem:[#allocation4 + $0x97c] sm:$0xff]
    %v426 = vld [vmem:[#allocation4 + $0x984] sm:$0xff]
    %v427 = vld [vmem:[#allocation4 + $0x98c] sm:$0xf]
    %v428 = vld [vmem:[#allocation4 + $0x990] sm:$0xff]
    %v429 = vld [vmem:[#allocation4 + $0x998] sm:$0xff]
    %v430 = vld [vmem:[#allocation4 + $0x9a0] sm:$0xff]
    %v431 = vld [vmem:[#allocation4 + $0x9a8] sm:$0xff]
    %v432 = vld [vmem:[#allocation4 + $0x9b0] sm:$0xf]
    %v433 = vld [vmem:[#allocation4 + $0x9b4] sm:$0xff]
    %v434 = vld [vmem:[#allocation4 + $0x9bc] sm:$0xff]
    %v435 = vld [vmem:[#allocation4 + $0x9c4] sm:$0xff]
    %v436 = vld [vmem:[#allocation4 + $0x9cc] sm:$0xff]
    %v437 = vld [vmem:[#allocation4 + $0x9d4] sm:$0xf]
    %v438 = vld [vmem:[#allocation4 + $0x9d8] sm:$0xff]
    %v439 = vld [vmem:[#allocation4 + $0x9e0] sm:$0xff]
    %v440 = vld [vmem:[#allocation4 + $0x9e8] sm:$0xff]
    %v441 = vld [vmem:[#allocation4 + $0x9f0] sm:$0xff]
    %v442 = vld [vmem:[#allocation4 + $0x9f8] sm:$0xf]
    %v443 = vld [vmem:[#allocation4 + $0x9fc] sm:$0xff]
    %v444 = vld [vmem:[#allocation4 + $0xa04] sm:$0xff]
    %v445 = vld [vmem:[#allocation4 + $0xa0c] sm:$0xff]
    %v446 = vld [vmem:[#allocation4 + $0xa14] sm:$0xff]
    %v447 = vld [vmem:[#allocation4 + $0xa1c] sm:$0xf]
    %v448 = vld [vmem:[#allocation4 + $0xa20] sm:$0xff]
    %v449 = vld [vmem:[#allocation4 + $0xa28] sm:$0xff]
    %v450 = vld [vmem:[#allocation4 + $0xa30] sm:$0xff]
    %v451 = vld [vmem:[#allocation4 + $0xa38] sm:$0xff]
    %v452 = vld [vmem:[#allocation4 + $0xa40] sm:$0xf]
    %v453 = vld [vmem:[#allocation4 + $0xa44] sm:$0xff]
    %v454 = vld [vmem:[#allocation4 + $0xa4c] sm:$0xff]
    %v455 = vld [vmem:[#allocation4 + $0xa54] sm:$0xff]
    %v456 = vld [vmem:[#allocation4 + $0xa5c] sm:$0xff]
    %v457 = vld [vmem:[#allocation4 + $0xa64] sm:$0xf]
    %v458 = vld [vmem:[#allocation4 + $0xa68] sm:$0xff]
    %v459 = vld [vmem:[#allocation4 + $0xa70] sm:$0xff]
    %v460 = vld [vmem:[#allocation4 + $0xa78] sm:$0xff]
    %v461 = vld [vmem:[#allocation4 + $0xa80] sm:$0xff]
    %v462 = vld [vmem:[#allocation4 + $0xa88] sm:$0xf]
    %v463 = vld [vmem:[#allocation4 + $0xa8c] sm:$0xff]
    %v464 = vld [vmem:[#allocation4 + $0xa94] sm:$0xff]
    %v465 = vld [vmem:[#allocation4 + $0xa9c] sm:$0xff]
    %v466 = vld [vmem:[#allocation4 + $0xaa4] sm:$0xff]
    %v467 = vld [vmem:[#allocation4 + $0xaac] sm:$0xf]
    %v468 = vld [vmem:[#allocation4 + $0xab0] sm:$0xff]
    %v469 = vld [vmem:[#allocation4 + $0xab8] sm:$0xff]
    %v470 = vld [vmem:[#allocation4 + $0xac0] sm:$0xff]
    %v471 = vld [vmem:[#allocation4 + $0xac8] sm:$0xff]
    %v472 = vld [vmem:[#allocation4 + $0xad0] sm:$0xf]
    %v473 = vld [vmem:[#allocation4 + $0xad4] sm:$0xff]
    %v474 = vld [vmem:[#allocation4 + $0xadc] sm:$0xff]
    %v475 = vld [vmem:[#allocation4 + $0xae4] sm:$0xff]
    %v476 = vld [vmem:[#allocation4 + $0xaec] sm:$0xff]
    %v477 = vld [vmem:[#allocation4 + $0xaf4] sm:$0xf]
    %v478 = vld [vmem:[#allocation4 + $0xaf8] sm:$0xff]
    %v479 = vld [vmem:[#allocation4 + $0xb00] sm:$0xff]
    %v480 = vld [vmem:[#allocation4 + $0xb08] sm:$0xff]
    %v481 = vld [vmem:[#allocation4 + $0xb10] sm:$0xff]
    %v482 = vld [vmem:[#allocation4 + $0xb18] sm:$0xf]
    %v483 = vld [vmem:[#allocation4 + $0xb1c] sm:$0xff]
    %v484 = vld [vmem:[#allocation4 + $0xb24] sm:$0xff]
    %v485 = vld [vmem:[#allocation4 + $0xb2c] sm:$0xff]
    %v486 = vld [vmem:[#allocation4 + $0xb34] sm:$0xff]
    %v487 = vld [vmem:[#allocation4 + $0xb3c] sm:$0xf]
    %v488 = vld [vmem:[#allocation4 + $0xb40] sm:$0xff]
    %v489 = vld [vmem:[#allocation4 + $0xb48] sm:$0xff]
    %v490 = vld [vmem:[#allocation4 + $0xb50] sm:$0xff]
    %v491 = vld [vmem:[#allocation4 + $0xb58] sm:$0xff]
    %v492 = vld [vmem:[#allocation4 + $0xb60] sm:$0xf]
    %v493 = vld [vmem:[#allocation4 + $0xb64] sm:$0xff]
    %v494 = vld [vmem:[#allocation4 + $0xb6c] sm:$0xff]
    %v495 = vld [vmem:[#allocation4 + $0xb74] sm:$0xff]
    %v496 = vld [vmem:[#allocation4 + $0xb7c] sm:$0xff]
    %v497 = vld [vmem:[#allocation4 + $0xb84] sm:$0xf]
    %v498 = vld [vmem:[#allocation4 + $0xb88] sm:$0xff]
    %v499 = vld [vmem:[#allocation4 + $0xb90] sm:$0xff]
    %v500 = vld [vmem:[#allocation4 + $0xb98] sm:$0xff]
    %v501 = vld [vmem:[#allocation4 + $0xba0] sm:$0xff]
    %v502 = vld [vmem:[#allocation4 + $0xba8] sm:$0xf]
    %v503 = vld [vmem:[#allocation4 + $0xbac] sm:$0xff]
    %v504 = vld [vmem:[#allocation4 + $0xbb4] sm:$0xff]
    %v505 = vld [vmem:[#allocation4 + $0xbbc] sm:$0xff]
    %v506 = vld [vmem:[#allocation4 + $0xbc4] sm:$0xff]
    %v507 = vld [vmem:[#allocation4 + $0xbcc] sm:$0xf]
    %v508 = vld [vmem:[#allocation4 + $0xbd0] sm:$0xff]
    %v509 = vld [vmem:[#allocation4 + $0xbd8] sm:$0xff]
    %v510 = vld [vmem:[#allocation4 + $0xbe0] sm:$0xff]
    %v511 = vld [vmem:[#allocation4 + $0xbe8] sm:$0xff]
    %v512 = vld [vmem:[#allocation4 + $0xbf0] sm:$0xf]
    %v513 = vld [vmem:[#allocation4 + $0xbf4] sm:$0xff]
    %v514 = vld [vmem:[#allocation4 + $0xbfc] sm:$0xff]
    %v515 = vld [vmem:[#allocation4 + $0xc04] sm:$0xff]
    %v516 = vld [vmem:[#allocation4 + $0xc0c] sm:$0xff]
    %v517 = vld [vmem:[#allocation4 + $0xc14] sm:$0xf]
    %v518 = vld [vmem:[#allocation4 + $0xc18] sm:$0xff]
    %v519 = vld [vmem:[#allocation4 + $0xc20] sm:$0xff]
    %v520 = vld [vmem:[#allocation4 + $0xc28] sm:$0xff]
    %v521 = vld [vmem:[#allocation4 + $0xc30] sm:$0xff]
    %v522 = vld [vmem:[#allocation4 + $0xc38] sm:$0xf]
    %v523 = vld [vmem:[#allocation4 + $0xc3c] sm:$0xff]
    %v524 = vld [vmem:[#allocation4 + $0xc44] sm:$0xff]
    %v525 = vld [vmem:[#allocation4 + $0xc4c] sm:$0xff]
    %v526 = vld [vmem:[#allocation4 + $0xc54] sm:$0xff]
    %v527 = vld [vmem:[#allocation4 + $0xc5c] sm:$0xf]
    %v528 = vld [vmem:[#allocation4 + $0xc60] sm:$0xff]
    %v529 = vld [vmem:[#allocation4 + $0xc68] sm:$0xff]
    %v530 = vld [vmem:[#allocation4 + $0xc70] sm:$0xff]
    %v531 = vld [vmem:[#allocation4 + $0xc78] sm:$0xff]
    %v532 = vld [vmem:[#allocation4 + $0xc80] sm:$0xf]
    %v533 = vld [vmem:[#allocation4 + $0xc84] sm:$0xff]
    %v534 = vld [vmem:[#allocation4 + $0xc8c] sm:$0xff]
    %v535 = vld [vmem:[#allocation4 + $0xc94] sm:$0xff]
    %v536 = vld [vmem:[#allocation4 + $0xc9c] sm:$0xff]
    %v537 = vld [vmem:[#allocation4 + $0xca4] sm:$0xf]
    %v538 = vld [vmem:[#allocation4 + $0xca8] sm:$0xff]
    %v539 = vld [vmem:[#allocation4 + $0xcb0] sm:$0xff]
    %v540 = vld [vmem:[#allocation4 + $0xcb8] sm:$0xff]
    %v541 = vld [vmem:[#allocation4 + $0xcc0] sm:$0xff]
    %v542 = vld [vmem:[#allocation4 + $0xcc8] sm:$0xf]
    %v543 = vld [vmem:[#allocation4 + $0xccc] sm:$0xff]
    %v544 = vld [vmem:[#allocation4 + $0xcd4] sm:$0xff]
    %v545 = vld [vmem:[#allocation4 + $0xcdc] sm:$0xff]
    %v546 = vld [vmem:[#allocation4 + $0xce4] sm:$0xff]
    %v547 = vld [vmem:[#allocation4 + $0xcec] sm:$0xf]
    %v548 = vld [vmem:[#allocation4 + $0xcf0] sm:$0xff]
    %v549 = vld [vmem:[#allocation4 + $0xcf8] sm:$0xff]
    %v550 = vld [vmem:[#allocation4 + $0xd00] sm:$0xff]
    %v551 = vld [vmem:[#allocation4 + $0xd08] sm:$0xff]
    %v552 = vld [vmem:[#allocation4 + $0xd10] sm:$0xf]
    %v553 = vld [vmem:[#allocation4 + $0xd14] sm:$0xff]
    %v554 = vld [vmem:[#allocation4 + $0xd1c] sm:$0xff]
    %v555 = vld [vmem:[#allocation4 + $0xd24] sm:$0xff]
    %v556 = vld [vmem:[#allocation4 + $0xd2c] sm:$0xff]
    %v557 = vld [vmem:[#allocation4 + $0xd34] sm:$0xf]
    %v558 = vld [vmem:[#allocation4 + $0xd38] sm:$0xff]
    %v559 = vld [vmem:[#allocation4 + $0xd40] sm:$0xff]
    %v560 = vld [vmem:[#allocation4 + $0xd48] sm:$0xff]
    %v561 = vld [vmem:[#allocation4 + $0xd50] sm:$0xff]
    %v562 = vld [vmem:[#allocation4 + $0xd58] sm:$0xf]
    %v563 = vld [vmem:[#allocation4 + $0xd5c] sm:$0xff]
    %v564 = vld [vmem:[#allocation4 + $0xd64] sm:$0xff]
    %v565 = vld [vmem:[#allocation4 + $0xd6c] sm:$0xff]
    %v566 = vld [vmem:[#allocation4 + $0xd74] sm:$0xff]
    %v567 = vld [vmem:[#allocation4 + $0xd7c] sm:$0xf]
    %v568 = vld [vmem:[#allocation4 + $0xd80] sm:$0xff]
    %v569 = vld [vmem:[#allocation4 + $0xd88] sm:$0xff]
    %v570 = vld [vmem:[#allocation4 + $0xd90] sm:$0xff]
    %v571 = vld [vmem:[#allocation4 + $0xd98] sm:$0xff]
    %v572 = vld [vmem:[#allocation4 + $0xda0] sm:$0xf]
    %v573 = vld [vmem:[#allocation4 + $0xda4] sm:$0xff]
    %v574 = vld [vmem:[#allocation4 + $0xdac] sm:$0xff]
    %v575 = vld [vmem:[#allocation4 + $0xdb4] sm:$0xff]
    %v576 = vld [vmem:[#allocation4 + $0xdbc] sm:$0xff]
    %v577 = vld [vmem:[#allocation4 + $0xdc4] sm:$0xf]
    %v578 = vld [vmem:[#allocation4 + $0xdc8] sm:$0xff]
    %v579 = vld [vmem:[#allocation4 + $0xdd0] sm:$0xff]
    %v580 = vld [vmem:[#allocation4 + $0xdd8] sm:$0xff]
    %v581 = vld [vmem:[#allocation4 + $0xde0] sm:$0xff]
    %v582 = vld [vmem:[#allocation4 + $0xde8] sm:$0xf]
    %v583 = vld [vmem:[#allocation4 + $0xdec] sm:$0xff]
    %v584 = vld [vmem:[#allocation4 + $0xdf4] sm:$0xff]
    %v585 = vld [vmem:[#allocation4 + $0xdfc] sm:$0xff]
    %v586 = vld [vmem:[#allocation4 + $0xe04] sm:$0xff]
    %v587 = vld [vmem:[#allocation4 + $0xe0c] sm:$0xf]
    %v588 = vld [vmem:[#allocation4 + $0xe10] sm:$0xff]
    %v589 = vld [vmem:[#allocation4 + $0xe18] sm:$0xff]
    %v590 = vld [vmem:[#allocation4 + $0xe20] sm:$0xff]
    %v591 = vld [vmem:[#allocation4 + $0xe28] sm:$0xff]
    %v592 = vld [vmem:[#allocation4 + $0xe30] sm:$0xf]
    %v593 = vld [vmem:[#allocation4 + $0xe34] sm:$0xff]
    %v594 = vld [vmem:[#allocation4 + $0xe3c] sm:$0xff]
    %v595 = vld [vmem:[#allocation4 + $0xe44] sm:$0xff]
    %v596 = vld [vmem:[#allocation4 + $0xe4c] sm:$0xff]
    %v597 = vld [vmem:[#allocation4 + $0xe54] sm:$0xf]
    %v598 = vld [vmem:[#allocation4 + $0xe58] sm:$0xff]
    %v599 = vld [vmem:[#allocation4 + $0xe60] sm:$0xff]
    %v600 = vld [vmem:[#allocation4 + $0xe68] sm:$0xff]
    %v601 = vld [vmem:[#allocation4 + $0xe70] sm:$0xff]
    %v602 = vld [vmem:[#allocation4 + $0xe78] sm:$0xf]
    %v603 = vld [vmem:[#allocation4 + $0xe7c] sm:$0xff]
    %v604 = vld [vmem:[#allocation4 + $0xe84] sm:$0xff]
    %v605 = vld [vmem:[#allocation4 + $0xe8c] sm:$0xff]
    %v606 = vld [vmem:[#allocation4 + $0xe94] sm:$0xff]
    %v607 = vld [vmem:[#allocation4 + $0xe9c] sm:$0xf]
    %v608 = vld [vmem:[#allocation4 + $0xea0] sm:$0xff]
    %v609 = vld [vmem:[#allocation4 + $0xea8] sm:$0xff]
    %v610 = vld [vmem:[#allocation4 + $0xeb0] sm:$0xff]
    %v611 = vld [vmem:[#allocation4 + $0xeb8] sm:$0xff]
    %v612 = vld [vmem:[#allocation4 + $0xec0] sm:$0xf]
    %v613 = vld [vmem:[#allocation4 + $0xec4] sm:$0xff]
    %v614 = vld [vmem:[#allocation4 + $0xecc] sm:$0xff]
    %v615 = vld [vmem:[#allocation4 + $0xed4] sm:$0xff]
    %v616 = vld [vmem:[#allocation4 + $0xedc] sm:$0xff]
    %v617 = vld [vmem:[#allocation4 + $0xee4] sm:$0xf]
    %v618 = vld [vmem:[#allocation4 + $0xee8] sm:$0xff]
    %v619 = vld [vmem:[#allocation4 + $0xef0] sm:$0xff]
    %v620 = vld [vmem:[#allocation4 + $0xef8] sm:$0xff]
    %v621 = vld [vmem:[#allocation4 + $0xf00] sm:$0xff]
    %v622 = vld [vmem:[#allocation4 + $0xf08] sm:$0xf]
    %v623 = vld [vmem:[#allocation4 + $0xf0c] sm:$0xff]
    %v624 = vld [vmem:[#allocation4 + $0xf14] sm:$0xff]
    %v625 = vld [vmem:[#allocation4 + $0xf1c] sm:$0xff]
    %v626 = vld [vmem:[#allocation4 + $0xf24] sm:$0xff]
    %v627 = vld [vmem:[#allocation4 + $0xf2c] sm:$0xf]
    %v628 = vld [vmem:[#allocation4 + $0xf30] sm:$0xff]
    %v629 = vld [vmem:[#allocation4 + $0xf38] sm:$0xff]
    %v630 = vld [vmem:[#allocation4 + $0xf40] sm:$0xff]
    %v631 = vld [vmem:[#allocation4 + $0xf48] sm:$0xff]
    %v632 = vld [vmem:[#allocation4 + $0xf50] sm:$0xf]
    %v633 = vld [vmem:[#allocation4 + $0xf54] sm:$0xff]
    %v634 = vld [vmem:[#allocation4 + $0xf5c] sm:$0xff]
    %v635 = vld [vmem:[#allocation4 + $0xf64] sm:$0xff]
    %v636 = vld [vmem:[#allocation4 + $0xf6c] sm:$0xff]
    %v637 = vld [vmem:[#allocation4 + $0xf74] sm:$0xf]
    %v638 = vld [vmem:[#allocation4 + $0xf78] sm:$0xff]
    %v639 = vld [vmem:[#allocation4 + $0xf80] sm:$0xff]
    %v640 = vld [vmem:[#allocation4 + $0xf88] sm:$0xff]
    %v641 = vld [vmem:[#allocation4 + $0xf90] sm:$0xff]
    %v642 = vld [vmem:[#allocation4 + $0xf98] sm:$0xf]
    %v643 = vld [vmem:[#allocation4 + $0xf9c] sm:$0xff]
    %v644 = vld [vmem:[#allocation4 + $0xfa4] sm:$0xff]
    %v645 = vld [vmem:[#allocation4 + $0xfac] sm:$0xff]
    %v646 = vld [vmem:[#allocation4 + $0xfb4] sm:$0xff]
    %v647 = vld [vmem:[#allocation4 + $0xfbc] sm:$0xf]
    %v648 = vld [vmem:[#allocation4 + $0xfc0] sm:$0xff]
    %v649 = vld [vmem:[#allocation4 + $0xfc8] sm:$0xff]
    %v650 = vld [vmem:[#allocation4 + $0xfd0] sm:$0xff]
    %v651 = vld [vmem:[#allocation4 + $0xfd8] sm:$0xff]
    %v652 = vld [vmem:[#allocation4 + $0xfe0] sm:$0xf]
    %v653 = vld [vmem:[#allocation4 + $0xfe4] sm:$0xff]
    %v654 = vld [vmem:[#allocation4 + $0xfec] sm:$0xff]
    %v655 = vld [vmem:[#allocation4 + $0xff4] sm:$0xff]
    %v656 = vld [vmem:[#allocation4 + $0xffc] sm:$0xff]
    %v657 = vld [vmem:[#allocation4 + $0x1004] sm:$0xf]
    %v658 = vld [vmem:[#allocation4 + $0x1008] sm:$0xff]
    %v659 = vld [vmem:[#allocation4 + $0x1010] sm:$0xff]
    %v660 = vld [vmem:[#allocation4 + $0x1018] sm:$0xff]
    %v661 = vld [vmem:[#allocation4 + $0x1020] sm:$0xff]
    %v662 = vld [vmem:[#allocation4 + $0x1028] sm:$0xf]
    %v663 = vld [vmem:[#allocation4 + $0x102c] sm:$0xff]
    %v664 = vld [vmem:[#allocation4 + $0x1034] sm:$0xff]
    %v665 = vld [vmem:[#allocation4 + $0x103c] sm:$0xff]
    %v666 = vld [vmem:[#allocation4 + $0x1044] sm:$0xff]
    %v667 = vld [vmem:[#allocation4 + $0x104c] sm:$0xf]
    %v668 = vld [vmem:[#allocation4 + $0x1050] sm:$0xff]
    %v669 = vld [vmem:[#allocation4 + $0x1058] sm:$0xff]
    %v670 = vld [vmem:[#allocation4 + $0x1060] sm:$0xff]
    %v671 = vld [vmem:[#allocation4 + $0x1068] sm:$0xff]
    %v672 = vld [vmem:[#allocation4 + $0x1070] sm:$0xf]
    %v673 = vld [vmem:[#allocation4 + $0x1074] sm:$0xff]
    %v674 = vld [vmem:[#allocation4 + $0x107c] sm:$0xff]
    %v675 = vld [vmem:[#allocation4 + $0x1084] sm:$0xff]
    %v676 = vld [vmem:[#allocation4 + $0x108c] sm:$0xff]
    %v677 = vld [vmem:[#allocation4 + $0x1094] sm:$0xf]
    %v678 = vld [vmem:[#allocation4 + $0x1098] sm:$0xff]
    %v679 = vld [vmem:[#allocation4 + $0x10a0] sm:$0xff]
    %v680 = vld [vmem:[#allocation4 + $0x10a8] sm:$0xff]
    %v681 = vld [vmem:[#allocation4 + $0x10b0] sm:$0xff]
    %v682 = vld [vmem:[#allocation4 + $0x10b8] sm:$0xf]
    %v683 = vld [vmem:[#allocation4 + $0x10bc] sm:$0xff]
    %v684 = vld [vmem:[#allocation4 + $0x10c4] sm:$0xff]
    %v685 = vld [vmem:[#allocation4 + $0x10cc] sm:$0xff]
    %v686 = vld [vmem:[#allocation4 + $0x10d4] sm:$0xff]
    %v687 = vld [vmem:[#allocation4 + $0x10dc] sm:$0xf]
    %v688 = vld [vmem:[#allocation4 + $0x10e0] sm:$0xff]
    %v689 = vld [vmem:[#allocation4 + $0x10e8] sm:$0xff]
    %v690 = vld [vmem:[#allocation4 + $0x10f0] sm:$0xff]
    %v691 = vld [vmem:[#allocation4 + $0x10f8] sm:$0xff]
    %v692 = vld [vmem:[#allocation4 + $0x1100] sm:$0xf]
    %v693 = vld [vmem:[#allocation4 + $0x1104] sm:$0xff]
    %v694 = vld [vmem:[#allocation4 + $0x110c] sm:$0xff]
    %v695 = vld [vmem:[#allocation4 + $0x1114] sm:$0xff]
    %v696 = vld [vmem:[#allocation4 + $0x111c] sm:$0xff]
    %v697 = vld [vmem:[#allocation4 + $0x1124] sm:$0xf]
    %v698 = vld [vmem:[#allocation4 + $0x1128] sm:$0xff]
    %v699 = vld [vmem:[#allocation4 + $0x1130] sm:$0xff]
    %v700 = vld [vmem:[#allocation4 + $0x1138] sm:$0xff]
    %v701 = vld [vmem:[#allocation4 + $0x1140] sm:$0xff]
    %v702 = vld [vmem:[#allocation4 + $0x1148] sm:$0xf]
    %v703 = vld [vmem:[#allocation4 + $0x114c] sm:$0xff]
    %v704 = vld [vmem:[#allocation4 + $0x1154] sm:$0xff]
    %v705 = vld [vmem:[#allocation4 + $0x115c] sm:$0xff]
    %v706 = vld [vmem:[#allocation4 + $0x1164] sm:$0xff]
    %v707 = vld [vmem:[#allocation4 + $0x116c] sm:$0xf]
    %v708 = vld [vmem:[#allocation4 + $0x1170] sm:$0xff]
    %v709 = vld [vmem:[#allocation4 + $0x1178] sm:$0xff]
    %v710 = vld [vmem:[#allocation4 + $0x1180] sm:$0xff]
    %v711 = vld [vmem:[#allocation4 + $0x1188] sm:$0xff]
    %v712 = vld [vmem:[#allocation4 + $0x1190] sm:$0xf]
    %v713 = vld [vmem:[#allocation4 + $0x1194] sm:$0xff]
    %v714 = vld [vmem:[#allocation4 + $0x119c] sm:$0xff]
    %v715 = vld [vmem:[#allocation4 + $0x11a4] sm:$0xff]
    %v716 = vld [vmem:[#allocation4 + $0x11ac] sm:$0xff]
    %v717 = vld [vmem:[#allocation4 + $0x11b4] sm:$0xf]
    %v718 = vld [vmem:[#allocation4 + $0x11b8] sm:$0xff]
    %v719 = vld [vmem:[#allocation4 + $0x11c0] sm:$0xff]
    %v720 = vld [vmem:[#allocation4 + $0x11c8] sm:$0xff]
    %v721 = vld [vmem:[#allocation4 + $0x11d0] sm:$0xff]
    %v722 = vld [vmem:[#allocation4 + $0x11d8] sm:$0xf]
    %v723 = vld [vmem:[#allocation4 + $0x11dc] sm:$0xff]
    %v724 = vld [vmem:[#allocation4 + $0x11e4] sm:$0xff]
    %v725 = vld [vmem:[#allocation4 + $0x11ec] sm:$0xff]
    %v726 = vld [vmem:[#allocation4 + $0x11f4] sm:$0xff]
    %v727 = vld [vmem:[#allocation4 + $0x11fc] sm:$0xf]
    %v1368 = vunpack.c.l.b16 %v88
    %v1369 = vunpack.c.h.b16 %v88
    %v1370 = vunpack.c.l.b16 %v89
    %v1371 = vunpack.c.h.b16 %v89
    %v1372 = vunpack.c.l.b16 %v90
    %v1373 = vunpack.c.h.b16 %v90
    %v1374 = vunpack.c.l.b16 %v91
    %v1375 = vunpack.c.h.b16 %v91
    %v1376 = vunpack.c.l.b16 %v92
    %v1377 = vunpack.c.l.b16 %v93
    %v1378 = vunpack.c.h.b16 %v93
    %v1379 = vunpack.c.l.b16 %v94
    %v1380 = vunpack.c.h.b16 %v94
    %v1381 = vunpack.c.l.b16 %v95
    %v1382 = vunpack.c.h.b16 %v95
    %v1383 = vunpack.c.l.b16 %v96
    %v1384 = vunpack.c.h.b16 %v96
    %v1385 = vunpack.c.l.b16 %v97
    %v1386 = vunpack.c.l.b16 %v98
    %v1387 = vunpack.c.h.b16 %v98
    %v1388 = vunpack.c.l.b16 %v99
    %v1389 = vunpack.c.h.b16 %v99
    %v1390 = vunpack.c.l.b16 %v100
    %v1391 = vunpack.c.h.b16 %v100
    %v1392 = vunpack.c.l.b16 %v101
    %v1393 = vunpack.c.h.b16 %v101
    %v1394 = vunpack.c.l.b16 %v102
    %v1395 = vunpack.c.l.b16 %v103
    %v1396 = vunpack.c.h.b16 %v103
    %v1397 = vunpack.c.l.b16 %v104
    %v1398 = vunpack.c.h.b16 %v104
    %v1399 = vunpack.c.l.b16 %v105
    %v1400 = vunpack.c.h.b16 %v105
    %v1401 = vunpack.c.l.b16 %v106
    %v1402 = vunpack.c.h.b16 %v106
    %v1403 = vunpack.c.l.b16 %v107
    %v1404 = vunpack.c.l.b16 %v108
    %v1405 = vunpack.c.h.b16 %v108
    %v1406 = vunpack.c.l.b16 %v109
    %v1407 = vunpack.c.h.b16 %v109
    %v1408 = vunpack.c.l.b16 %v110
    %v1409 = vunpack.c.h.b16 %v110
    %v1410 = vunpack.c.l.b16 %v111
    %v1411 = vunpack.c.h.b16 %v111
    %v1412 = vunpack.c.l.b16 %v112
    %v1413 = vunpack.c.l.b16 %v113
    %v1414 = vunpack.c.h.b16 %v113
    %v1415 = vunpack.c.l.b16 %v114
    %v1416 = vunpack.c.h.b16 %v114
    %v1417 = vunpack.c.l.b16 %v115
    %v1418 = vunpack.c.h.b16 %v115
    %v1419 = vunpack.c.l.b16 %v116
    %v1420 = vunpack.c.h.b16 %v116
    %v1421 = vunpack.c.l.b16 %v117
    %v1422 = vunpack.c.l.b16 %v118
    %v1423 = vunpack.c.h.b16 %v118
    %v1424 = vunpack.c.l.b16 %v119
    %v1425 = vunpack.c.h.b16 %v119
    %v1426 = vunpack.c.l.b16 %v120
    %v1427 = vunpack.c.h.b16 %v120
    %v1428 = vunpack.c.l.b16 %v121
    %v1429 = vunpack.c.h.b16 %v121
    %v1430 = vunpack.c.l.b16 %v122
    %v1431 = vunpack.c.l.b16 %v123
    %v1432 = vunpack.c.h.b16 %v123
    %v1433 = vunpack.c.l.b16 %v124
    %v1434 = vunpack.c.h.b16 %v124
    %v1435 = vunpack.c.l.b16 %v125
    %v1436 = vunpack.c.h.b16 %v125
    %v1437 = vunpack.c.l.b16 %v126
    %v1438 = vunpack.c.h.b16 %v126
    %v1439 = vunpack.c.l.b16 %v127
    %v1440 = vunpack.c.l.b16 %v128
    %v1441 = vunpack.c.h.b16 %v128
    %v1442 = vunpack.c.l.b16 %v129
    %v1443 = vunpack.c.h.b16 %v129
    %v1444 = vunpack.c.l.b16 %v130
    %v1445 = vunpack.c.h.b16 %v130
    %v1446 = vunpack.c.l.b16 %v131
    %v1447 = vunpack.c.h.b16 %v131
    %v1448 = vunpack.c.l.b16 %v132
    %v1449 = vunpack.c.l.b16 %v133
    %v1450 = vunpack.c.h.b16 %v133
    %v1451 = vunpack.c.l.b16 %v134
    %v1452 = vunpack.c.h.b16 %v134
    %v1453 = vunpack.c.l.b16 %v135
    %v1454 = vunpack.c.h.b16 %v135
    %v1455 = vunpack.c.l.b16 %v136
    %v1456 = vunpack.c.h.b16 %v136
    %v1457 = vunpack.c.l.b16 %v137
    %v1458 = vunpack.c.l.b16 %v138
    %v1459 = vunpack.c.h.b16 %v138
    %v1460 = vunpack.c.l.b16 %v139
    %v1461 = vunpack.c.h.b16 %v139
    %v1462 = vunpack.c.l.b16 %v140
    %v1463 = vunpack.c.h.b16 %v140
    %v1464 = vunpack.c.l.b16 %v141
    %v1465 = vunpack.c.h.b16 %v141
    %v1466 = vunpack.c.l.b16 %v142
    %v1467 = vunpack.c.l.b16 %v143
    %v1468 = vunpack.c.h.b16 %v143
    %v1469 = vunpack.c.l.b16 %v144
    %v1470 = vunpack.c.h.b16 %v144
    %v1471 = vunpack.c.l.b16 %v145
    %v1472 = vunpack.c.h.b16 %v145
    %v1473 = vunpack.c.l.b16 %v146
    %v1474 = vunpack.c.h.b16 %v146
    %v1475 = vunpack.c.l.b16 %v147
    %v1476 = vunpack.c.l.b16 %v148
    %v1477 = vunpack.c.h.b16 %v148
    %v1478 = vunpack.c.l.b16 %v149
    %v1479 = vunpack.c.h.b16 %v149
    %v1480 = vunpack.c.l.b16 %v150
    %v1481 = vunpack.c.h.b16 %v150
    %v1482 = vunpack.c.l.b16 %v151
    %v1483 = vunpack.c.h.b16 %v151
    %v1484 = vunpack.c.l.b16 %v152
    %v1485 = vunpack.c.l.b16 %v153
    %v1486 = vunpack.c.h.b16 %v153
    %v1487 = vunpack.c.l.b16 %v154
    %v1488 = vunpack.c.h.b16 %v154
    %v1489 = vunpack.c.l.b16 %v155
    %v1490 = vunpack.c.h.b16 %v155
    %v1491 = vunpack.c.l.b16 %v156
    %v1492 = vunpack.c.h.b16 %v156
    %v1493 = vunpack.c.l.b16 %v157
    %v1494 = vunpack.c.l.b16 %v158
    %v1495 = vunpack.c.h.b16 %v158
    %v1496 = vunpack.c.l.b16 %v159
    %v1497 = vunpack.c.h.b16 %v159
    %v1498 = vunpack.c.l.b16 %v160
    %v1499 = vunpack.c.h.b16 %v160
    %v1500 = vunpack.c.l.b16 %v161
    %v1501 = vunpack.c.h.b16 %v161
    %v1502 = vunpack.c.l.b16 %v162
    %v1503 = vunpack.c.l.b16 %v163
    %v1504 = vunpack.c.h.b16 %v163
    %v1505 = vunpack.c.l.b16 %v164
    %v1506 = vunpack.c.h.b16 %v164
    %v1507 = vunpack.c.l.b16 %v165
    %v1508 = vunpack.c.h.b16 %v165
    %v1509 = vunpack.c.l.b16 %v166
    %v1510 = vunpack.c.h.b16 %v166
    %v1511 = vunpack.c.l.b16 %v167
    %v1512 = vunpack.c.l.b16 %v168
    %v1513 = vunpack.c.h.b16 %v168
    %v1514 = vunpack.c.l.b16 %v169
    %v1515 = vunpack.c.h.b16 %v169
    %v1516 = vunpack.c.l.b16 %v170
    %v1517 = vunpack.c.h.b16 %v170
    %v1518 = vunpack.c.l.b16 %v171
    %v1519 = vunpack.c.h.b16 %v171
    %v1520 = vunpack.c.l.b16 %v172
    %v1521 = vunpack.c.l.b16 %v173
    %v1522 = vunpack.c.h.b16 %v173
    %v1523 = vunpack.c.l.b16 %v174
    %v1524 = vunpack.c.h.b16 %v174
    %v1525 = vunpack.c.l.b16 %v175
    %v1526 = vunpack.c.h.b16 %v175
    %v1527 = vunpack.c.l.b16 %v176
    %v1528 = vunpack.c.h.b16 %v176
    %v1529 = vunpack.c.l.b16 %v177
    %v1530 = vunpack.c.l.b16 %v178
    %v1531 = vunpack.c.h.b16 %v178
    %v1532 = vunpack.c.l.b16 %v179
    %v1533 = vunpack.c.h.b16 %v179
    %v1534 = vunpack.c.l.b16 %v180
    %v1535 = vunpack.c.h.b16 %v180
    %v1536 = vunpack.c.l.b16 %v181
    %v1537 = vunpack.c.h.b16 %v181
    %v1538 = vunpack.c.l.b16 %v182
    %v1539 = vunpack.c.l.b16 %v183
    %v1540 = vunpack.c.h.b16 %v183
    %v1541 = vunpack.c.l.b16 %v184
    %v1542 = vunpack.c.h.b16 %v184
    %v1543 = vunpack.c.l.b16 %v185
    %v1544 = vunpack.c.h.b16 %v185
    %v1545 = vunpack.c.l.b16 %v186
    %v1546 = vunpack.c.h.b16 %v186
    %v1547 = vunpack.c.l.b16 %v187
    %v1548 = vunpack.c.l.b16 %v188
    %v1549 = vunpack.c.h.b16 %v188
    %v1550 = vunpack.c.l.b16 %v189
    %v1551 = vunpack.c.h.b16 %v189
    %v1552 = vunpack.c.l.b16 %v190
    %v1553 = vunpack.c.h.b16 %v190
    %v1554 = vunpack.c.l.b16 %v191
    %v1555 = vunpack.c.h.b16 %v191
    %v1556 = vunpack.c.l.b16 %v192
    %v1557 = vunpack.c.l.b16 %v193
    %v1558 = vunpack.c.h.b16 %v193
    %v1559 = vunpack.c.l.b16 %v194
    %v1560 = vunpack.c.h.b16 %v194
    %v1561 = vunpack.c.l.b16 %v195
    %v1562 = vunpack.c.h.b16 %v195
    %v1563 = vunpack.c.l.b16 %v196
    %v1564 = vunpack.c.h.b16 %v196
    %v1565 = vunpack.c.l.b16 %v197
    %v1566 = vunpack.c.l.b16 %v198
    %v1567 = vunpack.c.h.b16 %v198
    %v1568 = vunpack.c.l.b16 %v199
    %v1569 = vunpack.c.h.b16 %v199
    %v1570 = vunpack.c.l.b16 %v200
    %v1571 = vunpack.c.h.b16 %v200
    %v1572 = vunpack.c.l.b16 %v201
    %v1573 = vunpack.c.h.b16 %v201
    %v1574 = vunpack.c.l.b16 %v202
    %v1575 = vunpack.c.l.b16 %v203
    %v1576 = vunpack.c.h.b16 %v203
    %v1577 = vunpack.c.l.b16 %v204
    %v1578 = vunpack.c.h.b16 %v204
    %v1579 = vunpack.c.l.b16 %v205
    %v1580 = vunpack.c.h.b16 %v205
    %v1581 = vunpack.c.l.b16 %v206
    %v1582 = vunpack.c.h.b16 %v206
    %v1583 = vunpack.c.l.b16 %v207
    %v1584 = vunpack.c.l.b16 %v208
    %v1585 = vunpack.c.h.b16 %v208
    %v1586 = vunpack.c.l.b16 %v209
    %v1587 = vunpack.c.h.b16 %v209
    %v1588 = vunpack.c.l.b16 %v210
    %v1589 = vunpack.c.h.b16 %v210
    %v1590 = vunpack.c.l.b16 %v211
    %v1591 = vunpack.c.h.b16 %v211
    %v1592 = vunpack.c.l.b16 %v212
    %v1593 = vunpack.c.l.b16 %v213
    %v1594 = vunpack.c.h.b16 %v213
    %v1595 = vunpack.c.l.b16 %v214
    %v1596 = vunpack.c.h.b16 %v214
    %v1597 = vunpack.c.l.b16 %v215
    %v1598 = vunpack.c.h.b16 %v215
    %v1599 = vunpack.c.l.b16 %v216
    %v1600 = vunpack.c.h.b16 %v216
    %v1601 = vunpack.c.l.b16 %v217
    %v1602 = vunpack.c.l.b16 %v218
    %v1603 = vunpack.c.h.b16 %v218
    %v1604 = vunpack.c.l.b16 %v219
    %v1605 = vunpack.c.h.b16 %v219
    %v1606 = vunpack.c.l.b16 %v220
    %v1607 = vunpack.c.h.b16 %v220
    %v1608 = vunpack.c.l.b16 %v221
    %v1609 = vunpack.c.h.b16 %v221
    %v1610 = vunpack.c.l.b16 %v222
    %v1611 = vunpack.c.l.b16 %v223
    %v1612 = vunpack.c.h.b16 %v223
    %v1613 = vunpack.c.l.b16 %v224
    %v1614 = vunpack.c.h.b16 %v224
    %v1615 = vunpack.c.l.b16 %v225
    %v1616 = vunpack.c.h.b16 %v225
    %v1617 = vunpack.c.l.b16 %v226
    %v1618 = vunpack.c.h.b16 %v226
    %v1619 = vunpack.c.l.b16 %v227
    %v1620 = vunpack.c.l.b16 %v228
    %v1621 = vunpack.c.h.b16 %v228
    %v1622 = vunpack.c.l.b16 %v229
    %v1623 = vunpack.c.h.b16 %v229
    %v1624 = vunpack.c.l.b16 %v230
    %v1625 = vunpack.c.h.b16 %v230
    %v1626 = vunpack.c.l.b16 %v231
    %v1627 = vunpack.c.h.b16 %v231
    %v1628 = vunpack.c.l.b16 %v232
    %v1629 = vunpack.c.l.b16 %v233
    %v1630 = vunpack.c.h.b16 %v233
    %v1631 = vunpack.c.l.b16 %v234
    %v1632 = vunpack.c.h.b16 %v234
    %v1633 = vunpack.c.l.b16 %v235
    %v1634 = vunpack.c.h.b16 %v235
    %v1635 = vunpack.c.l.b16 %v236
    %v1636 = vunpack.c.h.b16 %v236
    %v1637 = vunpack.c.l.b16 %v237
    %v1638 = vunpack.c.l.b16 %v238
    %v1639 = vunpack.c.h.b16 %v238
    %v1640 = vunpack.c.l.b16 %v239
    %v1641 = vunpack.c.h.b16 %v239
    %v1642 = vunpack.c.l.b16 %v240
    %v1643 = vunpack.c.h.b16 %v240
    %v1644 = vunpack.c.l.b16 %v241
    %v1645 = vunpack.c.h.b16 %v241
    %v1646 = vunpack.c.l.b16 %v242
    %v1647 = vunpack.c.l.b16 %v243
    %v1648 = vunpack.c.h.b16 %v243
    %v1649 = vunpack.c.l.b16 %v244
    %v1650 = vunpack.c.h.b16 %v244
    %v1651 = vunpack.c.l.b16 %v245
    %v1652 = vunpack.c.h.b16 %v245
    %v1653 = vunpack.c.l.b16 %v246
    %v1654 = vunpack.c.h.b16 %v246
    %v1655 = vunpack.c.l.b16 %v247
    %v1656 = vunpack.c.l.b16 %v248
    %v1657 = vunpack.c.h.b16 %v248
    %v1658 = vunpack.c.l.b16 %v249
    %v1659 = vunpack.c.h.b16 %v249
    %v1660 = vunpack.c.l.b16 %v250
    %v1661 = vunpack.c.h.b16 %v250
    %v1662 = vunpack.c.l.b16 %v251
    %v1663 = vunpack.c.h.b16 %v251
    %v1664 = vunpack.c.l.b16 %v252
    %v1665 = vunpack.c.l.b16 %v253
    %v1666 = vunpack.c.h.b16 %v253
    %v1667 = vunpack.c.l.b16 %v254
    %v1668 = vunpack.c.h.b16 %v254
    %v1669 = vunpack.c.l.b16 %v255
    %v1670 = vunpack.c.h.b16 %v255
    %v1671 = vunpack.c.l.b16 %v256
    %v1672 = vunpack.c.h.b16 %v256
    %v1673 = vunpack.c.l.b16 %v257
    %v1674 = vunpack.c.l.b16 %v258
    %v1675 = vunpack.c.h.b16 %v258
    %v1676 = vunpack.c.l.b16 %v259
    %v1677 = vunpack.c.h.b16 %v259
    %v1678 = vunpack.c.l.b16 %v260
    %v1679 = vunpack.c.h.b16 %v260
    %v1680 = vunpack.c.l.b16 %v261
    %v1681 = vunpack.c.h.b16 %v261
    %v1682 = vunpack.c.l.b16 %v262
    %v1683 = vunpack.c.l.b16 %v263
    %v1684 = vunpack.c.h.b16 %v263
    %v1685 = vunpack.c.l.b16 %v264
    %v1686 = vunpack.c.h.b16 %v264
    %v1687 = vunpack.c.l.b16 %v265
    %v1688 = vunpack.c.h.b16 %v265
    %v1689 = vunpack.c.l.b16 %v266
    %v1690 = vunpack.c.h.b16 %v266
    %v1691 = vunpack.c.l.b16 %v267
    %v1692 = vunpack.c.l.b16 %v268
    %v1693 = vunpack.c.h.b16 %v268
    %v1694 = vunpack.c.l.b16 %v269
    %v1695 = vunpack.c.h.b16 %v269
    %v1696 = vunpack.c.l.b16 %v270
    %v1697 = vunpack.c.h.b16 %v270
    %v1698 = vunpack.c.l.b16 %v271
    %v1699 = vunpack.c.h.b16 %v271
    %v1700 = vunpack.c.l.b16 %v272
    %v1701 = vunpack.c.l.b16 %v273
    %v1702 = vunpack.c.h.b16 %v273
    %v1703 = vunpack.c.l.b16 %v274
    %v1704 = vunpack.c.h.b16 %v274
    %v1705 = vunpack.c.l.b16 %v275
    %v1706 = vunpack.c.h.b16 %v275
    %v1707 = vunpack.c.l.b16 %v276
    %v1708 = vunpack.c.h.b16 %v276
    %v1709 = vunpack.c.l.b16 %v277
    %v1710 = vunpack.c.l.b16 %v278
    %v1711 = vunpack.c.h.b16 %v278
    %v1712 = vunpack.c.l.b16 %v279
    %v1713 = vunpack.c.h.b16 %v279
    %v1714 = vunpack.c.l.b16 %v280
    %v1715 = vunpack.c.h.b16 %v280
    %v1716 = vunpack.c.l.b16 %v281
    %v1717 = vunpack.c.h.b16 %v281
    %v1718 = vunpack.c.l.b16 %v282
    %v1719 = vunpack.c.l.b16 %v283
    %v1720 = vunpack.c.h.b16 %v283
    %v1721 = vunpack.c.l.b16 %v284
    %v1722 = vunpack.c.h.b16 %v284
    %v1723 = vunpack.c.l.b16 %v285
    %v1724 = vunpack.c.h.b16 %v285
    %v1725 = vunpack.c.l.b16 %v286
    %v1726 = vunpack.c.h.b16 %v286
    %v1727 = vunpack.c.l.b16 %v287
    %v1728 = vunpack.c.l.b16 %v288
    %v1729 = vunpack.c.h.b16 %v288
    %v1730 = vunpack.c.l.b16 %v289
    %v1731 = vunpack.c.h.b16 %v289
    %v1732 = vunpack.c.l.b16 %v290
    %v1733 = vunpack.c.h.b16 %v290
    %v1734 = vunpack.c.l.b16 %v291
    %v1735 = vunpack.c.h.b16 %v291
    %v1736 = vunpack.c.l.b16 %v292
    %v1737 = vunpack.c.l.b16 %v293
    %v1738 = vunpack.c.h.b16 %v293
    %v1739 = vunpack.c.l.b16 %v294
    %v1740 = vunpack.c.h.b16 %v294
    %v1741 = vunpack.c.l.b16 %v295
    %v1742 = vunpack.c.h.b16 %v295
    %v1743 = vunpack.c.l.b16 %v296
    %v1744 = vunpack.c.h.b16 %v296
    %v1745 = vunpack.c.l.b16 %v297
    %v1746 = vunpack.c.l.b16 %v298
    %v1747 = vunpack.c.h.b16 %v298
    %v1748 = vunpack.c.l.b16 %v299
    %v1749 = vunpack.c.h.b16 %v299
    %v1750 = vunpack.c.l.b16 %v300
    %v1751 = vunpack.c.h.b16 %v300
    %v1752 = vunpack.c.l.b16 %v301
    %v1753 = vunpack.c.h.b16 %v301
    %v1754 = vunpack.c.l.b16 %v302
    %v1755 = vunpack.c.l.b16 %v303
    %v1756 = vunpack.c.h.b16 %v303
    %v1757 = vunpack.c.l.b16 %v304
    %v1758 = vunpack.c.h.b16 %v304
    %v1759 = vunpack.c.l.b16 %v305
    %v1760 = vunpack.c.h.b16 %v305
    %v1761 = vunpack.c.l.b16 %v306
    %v1762 = vunpack.c.h.b16 %v306
    %v1763 = vunpack.c.l.b16 %v307
    %v1764 = vunpack.c.l.b16 %v308
    %v1765 = vunpack.c.h.b16 %v308
    %v1766 = vunpack.c.l.b16 %v309
    %v1767 = vunpack.c.h.b16 %v309
    %v1768 = vunpack.c.l.b16 %v310
    %v1769 = vunpack.c.h.b16 %v310
    %v1770 = vunpack.c.l.b16 %v311
    %v1771 = vunpack.c.h.b16 %v311
    %v1772 = vunpack.c.l.b16 %v312
    %v1773 = vunpack.c.l.b16 %v313
    %v1774 = vunpack.c.h.b16 %v313
    %v1775 = vunpack.c.l.b16 %v314
    %v1776 = vunpack.c.h.b16 %v314
    %v1777 = vunpack.c.l.b16 %v315
    %v1778 = vunpack.c.h.b16 %v315
    %v1779 = vunpack.c.l.b16 %v316
    %v1780 = vunpack.c.h.b16 %v316
    %v1781 = vunpack.c.l.b16 %v317
    %v1782 = vunpack.c.l.b16 %v318
    %v1783 = vunpack.c.h.b16 %v318
    %v1784 = vunpack.c.l.b16 %v319
    %v1785 = vunpack.c.h.b16 %v319
    %v1786 = vunpack.c.l.b16 %v320
    %v1787 = vunpack.c.h.b16 %v320
    %v1788 = vunpack.c.l.b16 %v321
    %v1789 = vunpack.c.h.b16 %v321
    %v1790 = vunpack.c.l.b16 %v322
    %v1791 = vunpack.c.l.b16 %v323
    %v1792 = vunpack.c.h.b16 %v323
    %v1793 = vunpack.c.l.b16 %v324
    %v1794 = vunpack.c.h.b16 %v324
    %v1795 = vunpack.c.l.b16 %v325
    %v1796 = vunpack.c.h.b16 %v325
    %v1797 = vunpack.c.l.b16 %v326
    %v1798 = vunpack.c.h.b16 %v326
    %v1799 = vunpack.c.l.b16 %v327
    %v1800 = vunpack.c.l.b16 %v328
    %v1801 = vunpack.c.h.b16 %v328
    %v1802 = vunpack.c.l.b16 %v329
    %v1803 = vunpack.c.h.b16 %v329
    %v1804 = vunpack.c.l.b16 %v330
    %v1805 = vunpack.c.h.b16 %v330
    %v1806 = vunpack.c.l.b16 %v331
    %v1807 = vunpack.c.h.b16 %v331
    %v1808 = vunpack.c.l.b16 %v332
    %v1809 = vunpack.c.l.b16 %v333
    %v1810 = vunpack.c.h.b16 %v333
    %v1811 = vunpack.c.l.b16 %v334
    %v1812 = vunpack.c.h.b16 %v334
    %v1813 = vunpack.c.l.b16 %v335
    %v1814 = vunpack.c.h.b16 %v335
    %v1815 = vunpack.c.l.b16 %v336
    %v1816 = vunpack.c.h.b16 %v336
    %v1817 = vunpack.c.l.b16 %v337
    %v1818 = vunpack.c.l.b16 %v338
    %v1819 = vunpack.c.h.b16 %v338
    %v1820 = vunpack.c.l.b16 %v339
    %v1821 = vunpack.c.h.b16 %v339
    %v1822 = vunpack.c.l.b16 %v340
    %v1823 = vunpack.c.h.b16 %v340
    %v1824 = vunpack.c.l.b16 %v341
    %v1825 = vunpack.c.h.b16 %v341
    %v1826 = vunpack.c.l.b16 %v342
    %v1827 = vunpack.c.l.b16 %v343
    %v1828 = vunpack.c.h.b16 %v343
    %v1829 = vunpack.c.l.b16 %v344
    %v1830 = vunpack.c.h.b16 %v344
    %v1831 = vunpack.c.l.b16 %v345
    %v1832 = vunpack.c.h.b16 %v345
    %v1833 = vunpack.c.l.b16 %v346
    %v1834 = vunpack.c.h.b16 %v346
    %v1835 = vunpack.c.l.b16 %v347
    %v1836 = vunpack.c.l.b16 %v348
    %v1837 = vunpack.c.h.b16 %v348
    %v1838 = vunpack.c.l.b16 %v349
    %v1839 = vunpack.c.h.b16 %v349
    %v1840 = vunpack.c.l.b16 %v350
    %v1841 = vunpack.c.h.b16 %v350
    %v1842 = vunpack.c.l.b16 %v351
    %v1843 = vunpack.c.h.b16 %v351
    %v1844 = vunpack.c.l.b16 %v352
    %v1845 = vunpack.c.l.b16 %v353
    %v1846 = vunpack.c.h.b16 %v353
    %v1847 = vunpack.c.l.b16 %v354
    %v1848 = vunpack.c.h.b16 %v354
    %v1849 = vunpack.c.l.b16 %v355
    %v1850 = vunpack.c.h.b16 %v355
    %v1851 = vunpack.c.l.b16 %v356
    %v1852 = vunpack.c.h.b16 %v356
    %v1853 = vunpack.c.l.b16 %v357
    %v1854 = vunpack.c.l.b16 %v358
    %v1855 = vunpack.c.h.b16 %v358
    %v1856 = vunpack.c.l.b16 %v359
    %v1857 = vunpack.c.h.b16 %v359
    %v1858 = vunpack.c.l.b16 %v360
    %v1859 = vunpack.c.h.b16 %v360
    %v1860 = vunpack.c.l.b16 %v361
    %v1861 = vunpack.c.h.b16 %v361
    %v1862 = vunpack.c.l.b16 %v362
    %v1863 = vunpack.c.l.b16 %v363
    %v1864 = vunpack.c.h.b16 %v363
    %v1865 = vunpack.c.l.b16 %v364
    %v1866 = vunpack.c.h.b16 %v364
    %v1867 = vunpack.c.l.b16 %v365
    %v1868 = vunpack.c.h.b16 %v365
    %v1869 = vunpack.c.l.b16 %v366
    %v1870 = vunpack.c.h.b16 %v366
    %v1871 = vunpack.c.l.b16 %v367
    %v1872 = vunpack.c.l.b16 %v368
    %v1873 = vunpack.c.h.b16 %v368
    %v1874 = vunpack.c.l.b16 %v369
    %v1875 = vunpack.c.h.b16 %v369
    %v1876 = vunpack.c.l.b16 %v370
    %v1877 = vunpack.c.h.b16 %v370
    %v1878 = vunpack.c.l.b16 %v371
    %v1879 = vunpack.c.h.b16 %v371
    %v1880 = vunpack.c.l.b16 %v372
    %v1881 = vunpack.c.l.b16 %v373
    %v1882 = vunpack.c.h.b16 %v373
    %v1883 = vunpack.c.l.b16 %v374
    %v1884 = vunpack.c.h.b16 %v374
    %v1885 = vunpack.c.l.b16 %v375
    %v1886 = vunpack.c.h.b16 %v375
    %v1887 = vunpack.c.l.b16 %v376
    %v1888 = vunpack.c.h.b16 %v376
    %v1889 = vunpack.c.l.b16 %v377
    %v1890 = vunpack.c.l.b16 %v378
    %v1891 = vunpack.c.h.b16 %v378
    %v1892 = vunpack.c.l.b16 %v379
    %v1893 = vunpack.c.h.b16 %v379
    %v1894 = vunpack.c.l.b16 %v380
    %v1895 = vunpack.c.h.b16 %v380
    %v1896 = vunpack.c.l.b16 %v381
    %v1897 = vunpack.c.h.b16 %v381
    %v1898 = vunpack.c.l.b16 %v382
    %v1899 = vunpack.c.l.b16 %v383
    %v1900 = vunpack.c.h.b16 %v383
    %v1901 = vunpack.c.l.b16 %v384
    %v1902 = vunpack.c.h.b16 %v384
    %v1903 = vunpack.c.l.b16 %v385
    %v1904 = vunpack.c.h.b16 %v385
    %v1905 = vunpack.c.l.b16 %v386
    %v1906 = vunpack.c.h.b16 %v386
    %v1907 = vunpack.c.l.b16 %v387
    %v1908 = vunpack.c.l.b16 %v388
    %v1909 = vunpack.c.h.b16 %v388
    %v1910 = vunpack.c.l.b16 %v389
    %v1911 = vunpack.c.h.b16 %v389
    %v1912 = vunpack.c.l.b16 %v390
    %v1913 = vunpack.c.h.b16 %v390
    %v1914 = vunpack.c.l.b16 %v391
    %v1915 = vunpack.c.h.b16 %v391
    %v1916 = vunpack.c.l.b16 %v392
    %v1917 = vunpack.c.l.b16 %v393
    %v1918 = vunpack.c.h.b16 %v393
    %v1919 = vunpack.c.l.b16 %v394
    %v1920 = vunpack.c.h.b16 %v394
    %v1921 = vunpack.c.l.b16 %v395
    %v1922 = vunpack.c.h.b16 %v395
    %v1923 = vunpack.c.l.b16 %v396
    %v1924 = vunpack.c.h.b16 %v396
    %v1925 = vunpack.c.l.b16 %v397
    %v1926 = vunpack.c.l.b16 %v398
    %v1927 = vunpack.c.h.b16 %v398
    %v1928 = vunpack.c.l.b16 %v399
    %v1929 = vunpack.c.h.b16 %v399
    %v1930 = vunpack.c.l.b16 %v400
    %v1931 = vunpack.c.h.b16 %v400
    %v1932 = vunpack.c.l.b16 %v401
    %v1933 = vunpack.c.h.b16 %v401
    %v1934 = vunpack.c.l.b16 %v402
    %v1935 = vunpack.c.l.b16 %v403
    %v1936 = vunpack.c.h.b16 %v403
    %v1937 = vunpack.c.l.b16 %v404
    %v1938 = vunpack.c.h.b16 %v404
    %v1939 = vunpack.c.l.b16 %v405
    %v1940 = vunpack.c.h.b16 %v405
    %v1941 = vunpack.c.l.b16 %v406
    %v1942 = vunpack.c.h.b16 %v406
    %v1943 = vunpack.c.l.b16 %v407
    %v1944 = vunpack.c.l.b16 %v408
    %v1945 = vunpack.c.h.b16 %v408
    %v1946 = vunpack.c.l.b16 %v409
    %v1947 = vunpack.c.h.b16 %v409
    %v1948 = vunpack.c.l.b16 %v410
    %v1949 = vunpack.c.h.b16 %v410
    %v1950 = vunpack.c.l.b16 %v411
    %v1951 = vunpack.c.h.b16 %v411
    %v1952 = vunpack.c.l.b16 %v412
    %v1953 = vunpack.c.l.b16 %v413
    %v1954 = vunpack.c.h.b16 %v413
    %v1955 = vunpack.c.l.b16 %v414
    %v1956 = vunpack.c.h.b16 %v414
    %v1957 = vunpack.c.l.b16 %v415
    %v1958 = vunpack.c.h.b16 %v415
    %v1959 = vunpack.c.l.b16 %v416
    %v1960 = vunpack.c.h.b16 %v416
    %v1961 = vunpack.c.l.b16 %v417
    %v1962 = vunpack.c.l.b16 %v418
    %v1963 = vunpack.c.h.b16 %v418
    %v1964 = vunpack.c.l.b16 %v419
    %v1965 = vunpack.c.h.b16 %v419
    %v1966 = vunpack.c.l.b16 %v420
    %v1967 = vunpack.c.h.b16 %v420
    %v1968 = vunpack.c.l.b16 %v421
    %v1969 = vunpack.c.h.b16 %v421
    %v1970 = vunpack.c.l.b16 %v422
    %v1971 = vunpack.c.l.b16 %v423
    %v1972 = vunpack.c.h.b16 %v423
    %v1973 = vunpack.c.l.b16 %v424
    %v1974 = vunpack.c.h.b16 %v424
    %v1975 = vunpack.c.l.b16 %v425
    %v1976 = vunpack.c.h.b16 %v425
    %v1977 = vunpack.c.l.b16 %v426
    %v1978 = vunpack.c.h.b16 %v426
    %v1979 = vunpack.c.l.b16 %v427
    %v1980 = vunpack.c.l.b16 %v428
    %v1981 = vunpack.c.h.b16 %v428
    %v1982 = vunpack.c.l.b16 %v429
    %v1983 = vunpack.c.h.b16 %v429
    %v1984 = vunpack.c.l.b16 %v430
    %v1985 = vunpack.c.h.b16 %v430
    %v1986 = vunpack.c.l.b16 %v431
    %v1987 = vunpack.c.h.b16 %v431
    %v1988 = vunpack.c.l.b16 %v432
    %v1989 = vunpack.c.l.b16 %v433
    %v1990 = vunpack.c.h.b16 %v433
    %v1991 = vunpack.c.l.b16 %v434
    %v1992 = vunpack.c.h.b16 %v434
    %v1993 = vunpack.c.l.b16 %v435
    %v1994 = vunpack.c.h.b16 %v435
    %v1995 = vunpack.c.l.b16 %v436
    %v1996 = vunpack.c.h.b16 %v436
    %v1997 = vunpack.c.l.b16 %v437
    %v1998 = vunpack.c.l.b16 %v438
    %v1999 = vunpack.c.h.b16 %v438
    %v2000 = vunpack.c.l.b16 %v439
    %v2001 = vunpack.c.h.b16 %v439
    %v2002 = vunpack.c.l.b16 %v440
    %v2003 = vunpack.c.h.b16 %v440
    %v2004 = vunpack.c.l.b16 %v441
    %v2005 = vunpack.c.h.b16 %v441
    %v2006 = vunpack.c.l.b16 %v442
    %v2007 = vunpack.c.l.b16 %v443
    %v2008 = vunpack.c.h.b16 %v443
    %v2009 = vunpack.c.l.b16 %v444
    %v2010 = vunpack.c.h.b16 %v444
    %v2011 = vunpack.c.l.b16 %v445
    %v2012 = vunpack.c.h.b16 %v445
    %v2013 = vunpack.c.l.b16 %v446
    %v2014 = vunpack.c.h.b16 %v446
    %v2015 = vunpack.c.l.b16 %v447
    %v2016 = vunpack.c.l.b16 %v448
    %v2017 = vunpack.c.h.b16 %v448
    %v2018 = vunpack.c.l.b16 %v449
    %v2019 = vunpack.c.h.b16 %v449
    %v2020 = vunpack.c.l.b16 %v450
    %v2021 = vunpack.c.h.b16 %v450
    %v2022 = vunpack.c.l.b16 %v451
    %v2023 = vunpack.c.h.b16 %v451
    %v2024 = vunpack.c.l.b16 %v452
    %v2025 = vunpack.c.l.b16 %v453
    %v2026 = vunpack.c.h.b16 %v453
    %v2027 = vunpack.c.l.b16 %v454
    %v2028 = vunpack.c.h.b16 %v454
    %v2029 = vunpack.c.l.b16 %v455
    %v2030 = vunpack.c.h.b16 %v455
    %v2031 = vunpack.c.l.b16 %v456
    %v2032 = vunpack.c.h.b16 %v456
    %v2033 = vunpack.c.l.b16 %v457
    %v2034 = vunpack.c.l.b16 %v458
    %v2035 = vunpack.c.h.b16 %v458
    %v2036 = vunpack.c.l.b16 %v459
    %v2037 = vunpack.c.h.b16 %v459
    %v2038 = vunpack.c.l.b16 %v460
    %v2039 = vunpack.c.h.b16 %v460
    %v2040 = vunpack.c.l.b16 %v461
    %v2041 = vunpack.c.h.b16 %v461
    %v2042 = vunpack.c.l.b16 %v462
    %v2043 = vunpack.c.l.b16 %v463
    %v2044 = vunpack.c.h.b16 %v463
    %v2045 = vunpack.c.l.b16 %v464
    %v2046 = vunpack.c.h.b16 %v464
    %v2047 = vunpack.c.l.b16 %v465
    %v2048 = vunpack.c.h.b16 %v465
    %v2049 = vunpack.c.l.b16 %v466
    %v2050 = vunpack.c.h.b16 %v466
    %v2051 = vunpack.c.l.b16 %v467
    %v2052 = vunpack.c.l.b16 %v468
    %v2053 = vunpack.c.h.b16 %v468
    %v2054 = vunpack.c.l.b16 %v469
    %v2055 = vunpack.c.h.b16 %v469
    %v2056 = vunpack.c.l.b16 %v470
    %v2057 = vunpack.c.h.b16 %v470
    %v2058 = vunpack.c.l.b16 %v471
    %v2059 = vunpack.c.h.b16 %v471
    %v2060 = vunpack.c.l.b16 %v472
    %v2061 = vunpack.c.l.b16 %v473
    %v2062 = vunpack.c.h.b16 %v473
    %v2063 = vunpack.c.l.b16 %v474
    %v2064 = vunpack.c.h.b16 %v474
    %v2065 = vunpack.c.l.b16 %v475
    %v2066 = vunpack.c.h.b16 %v475
    %v2067 = vunpack.c.l.b16 %v476
    %v2068 = vunpack.c.h.b16 %v476
    %v2069 = vunpack.c.l.b16 %v477
    %v2070 = vunpack.c.l.b16 %v478
    %v2071 = vunpack.c.h.b16 %v478
    %v2072 = vunpack.c.l.b16 %v479
    %v2073 = vunpack.c.h.b16 %v479
    %v2074 = vunpack.c.l.b16 %v480
    %v2075 = vunpack.c.h.b16 %v480
    %v2076 = vunpack.c.l.b16 %v481
    %v2077 = vunpack.c.h.b16 %v481
    %v2078 = vunpack.c.l.b16 %v482
    %v2079 = vunpack.c.l.b16 %v483
    %v2080 = vunpack.c.h.b16 %v483
    %v2081 = vunpack.c.l.b16 %v484
    %v2082 = vunpack.c.h.b16 %v484
    %v2083 = vunpack.c.l.b16 %v485
    %v2084 = vunpack.c.h.b16 %v485
    %v2085 = vunpack.c.l.b16 %v486
    %v2086 = vunpack.c.h.b16 %v486
    %v2087 = vunpack.c.l.b16 %v487
    %v2088 = vunpack.c.l.b16 %v488
    %v2089 = vunpack.c.h.b16 %v488
    %v2090 = vunpack.c.l.b16 %v489
    %v2091 = vunpack.c.h.b16 %v489
    %v2092 = vunpack.c.l.b16 %v490
    %v2093 = vunpack.c.h.b16 %v490
    %v2094 = vunpack.c.l.b16 %v491
    %v2095 = vunpack.c.h.b16 %v491
    %v2096 = vunpack.c.l.b16 %v492
    %v2097 = vunpack.c.l.b16 %v493
    %v2098 = vunpack.c.h.b16 %v493
    %v2099 = vunpack.c.l.b16 %v494
    %v2100 = vunpack.c.h.b16 %v494
    %v2101 = vunpack.c.l.b16 %v495
    %v2102 = vunpack.c.h.b16 %v495
    %v2103 = vunpack.c.l.b16 %v496
    %v2104 = vunpack.c.h.b16 %v496
    %v2105 = vunpack.c.l.b16 %v497
    %v2106 = vunpack.c.l.b16 %v498
    %v2107 = vunpack.c.h.b16 %v498
    %v2108 = vunpack.c.l.b16 %v499
    %v2109 = vunpack.c.h.b16 %v499
    %v2110 = vunpack.c.l.b16 %v500
    %v2111 = vunpack.c.h.b16 %v500
    %v2112 = vunpack.c.l.b16 %v501
    %v2113 = vunpack.c.h.b16 %v501
    %v2114 = vunpack.c.l.b16 %v502
    %v2115 = vunpack.c.l.b16 %v503
    %v2116 = vunpack.c.h.b16 %v503
    %v2117 = vunpack.c.l.b16 %v504
    %v2118 = vunpack.c.h.b16 %v504
    %v2119 = vunpack.c.l.b16 %v505
    %v2120 = vunpack.c.h.b16 %v505
    %v2121 = vunpack.c.l.b16 %v506
    %v2122 = vunpack.c.h.b16 %v506
    %v2123 = vunpack.c.l.b16 %v507
    %v2124 = vunpack.c.l.b16 %v508
    %v2125 = vunpack.c.h.b16 %v508
    %v2126 = vunpack.c.l.b16 %v509
    %v2127 = vunpack.c.h.b16 %v509
    %v2128 = vunpack.c.l.b16 %v510
    %v2129 = vunpack.c.h.b16 %v510
    %v2130 = vunpack.c.l.b16 %v511
    %v2131 = vunpack.c.h.b16 %v511
    %v2132 = vunpack.c.l.b16 %v512
    %v2133 = vunpack.c.l.b16 %v513
    %v2134 = vunpack.c.h.b16 %v513
    %v2135 = vunpack.c.l.b16 %v514
    %v2136 = vunpack.c.h.b16 %v514
    %v2137 = vunpack.c.l.b16 %v515
    %v2138 = vunpack.c.h.b16 %v515
    %v2139 = vunpack.c.l.b16 %v516
    %v2140 = vunpack.c.h.b16 %v516
    %v2141 = vunpack.c.l.b16 %v517
    %v2142 = vunpack.c.l.b16 %v518
    %v2143 = vunpack.c.h.b16 %v518
    %v2144 = vunpack.c.l.b16 %v519
    %v2145 = vunpack.c.h.b16 %v519
    %v2146 = vunpack.c.l.b16 %v520
    %v2147 = vunpack.c.h.b16 %v520
    %v2148 = vunpack.c.l.b16 %v521
    %v2149 = vunpack.c.h.b16 %v521
    %v2150 = vunpack.c.l.b16 %v522
    %v2151 = vunpack.c.l.b16 %v523
    %v2152 = vunpack.c.h.b16 %v523
    %v2153 = vunpack.c.l.b16 %v524
    %v2154 = vunpack.c.h.b16 %v524
    %v2155 = vunpack.c.l.b16 %v525
    %v2156 = vunpack.c.h.b16 %v525
    %v2157 = vunpack.c.l.b16 %v526
    %v2158 = vunpack.c.h.b16 %v526
    %v2159 = vunpack.c.l.b16 %v527
    %v2160 = vunpack.c.l.b16 %v528
    %v2161 = vunpack.c.h.b16 %v528
    %v2162 = vunpack.c.l.b16 %v529
    %v2163 = vunpack.c.h.b16 %v529
    %v2164 = vunpack.c.l.b16 %v530
    %v2165 = vunpack.c.h.b16 %v530
    %v2166 = vunpack.c.l.b16 %v531
    %v2167 = vunpack.c.h.b16 %v531
    %v2168 = vunpack.c.l.b16 %v532
    %v2169 = vunpack.c.l.b16 %v533
    %v2170 = vunpack.c.h.b16 %v533
    %v2171 = vunpack.c.l.b16 %v534
    %v2172 = vunpack.c.h.b16 %v534
    %v2173 = vunpack.c.l.b16 %v535
    %v2174 = vunpack.c.h.b16 %v535
    %v2175 = vunpack.c.l.b16 %v536
    %v2176 = vunpack.c.h.b16 %v536
    %v2177 = vunpack.c.l.b16 %v537
    %v2178 = vunpack.c.l.b16 %v538
    %v2179 = vunpack.c.h.b16 %v538
    %v2180 = vunpack.c.l.b16 %v539
    %v2181 = vunpack.c.h.b16 %v539
    %v2182 = vunpack.c.l.b16 %v540
    %v2183 = vunpack.c.h.b16 %v540
    %v2184 = vunpack.c.l.b16 %v541
    %v2185 = vunpack.c.h.b16 %v541
    %v2186 = vunpack.c.l.b16 %v542
    %v2187 = vunpack.c.l.b16 %v543
    %v2188 = vunpack.c.h.b16 %v543
    %v2189 = vunpack.c.l.b16 %v544
    %v2190 = vunpack.c.h.b16 %v544
    %v2191 = vunpack.c.l.b16 %v545
    %v2192 = vunpack.c.h.b16 %v545
    %v2193 = vunpack.c.l.b16 %v546
    %v2194 = vunpack.c.h.b16 %v546
    %v2195 = vunpack.c.l.b16 %v547
    %v2196 = vunpack.c.l.b16 %v548
    %v2197 = vunpack.c.h.b16 %v548
    %v2198 = vunpack.c.l.b16 %v549
    %v2199 = vunpack.c.h.b16 %v549
    %v2200 = vunpack.c.l.b16 %v550
    %v2201 = vunpack.c.h.b16 %v550
    %v2202 = vunpack.c.l.b16 %v551
    %v2203 = vunpack.c.h.b16 %v551
    %v2204 = vunpack.c.l.b16 %v552
    %v2205 = vunpack.c.l.b16 %v553
    %v2206 = vunpack.c.h.b16 %v553
    %v2207 = vunpack.c.l.b16 %v554
    %v2208 = vunpack.c.h.b16 %v554
    %v2209 = vunpack.c.l.b16 %v555
    %v2210 = vunpack.c.h.b16 %v555
    %v2211 = vunpack.c.l.b16 %v556
    %v2212 = vunpack.c.h.b16 %v556
    %v2213 = vunpack.c.l.b16 %v557
    %v2214 = vunpack.c.l.b16 %v558
    %v2215 = vunpack.c.h.b16 %v558
    %v2216 = vunpack.c.l.b16 %v559
    %v2217 = vunpack.c.h.b16 %v559
    %v2218 = vunpack.c.l.b16 %v560
    %v2219 = vunpack.c.h.b16 %v560
    %v2220 = vunpack.c.l.b16 %v561
    %v2221 = vunpack.c.h.b16 %v561
    %v2222 = vunpack.c.l.b16 %v562
    %v2223 = vunpack.c.l.b16 %v563
    %v2224 = vunpack.c.h.b16 %v563
    %v2225 = vunpack.c.l.b16 %v564
    %v2226 = vunpack.c.h.b16 %v564
    %v2227 = vunpack.c.l.b16 %v565
    %v2228 = vunpack.c.h.b16 %v565
    %v2229 = vunpack.c.l.b16 %v566
    %v2230 = vunpack.c.h.b16 %v566
    %v2231 = vunpack.c.l.b16 %v567
    %v2232 = vunpack.c.l.b16 %v568
    %v2233 = vunpack.c.h.b16 %v568
    %v2234 = vunpack.c.l.b16 %v569
    %v2235 = vunpack.c.h.b16 %v569
    %v2236 = vunpack.c.l.b16 %v570
    %v2237 = vunpack.c.h.b16 %v570
    %v2238 = vunpack.c.l.b16 %v571
    %v2239 = vunpack.c.h.b16 %v571
    %v2240 = vunpack.c.l.b16 %v572
    %v2241 = vunpack.c.l.b16 %v573
    %v2242 = vunpack.c.h.b16 %v573
    %v2243 = vunpack.c.l.b16 %v574
    %v2244 = vunpack.c.h.b16 %v574
    %v2245 = vunpack.c.l.b16 %v575
    %v2246 = vunpack.c.h.b16 %v575
    %v2247 = vunpack.c.l.b16 %v576
    %v2248 = vunpack.c.h.b16 %v576
    %v2249 = vunpack.c.l.b16 %v577
    %v2250 = vunpack.c.l.b16 %v578
    %v2251 = vunpack.c.h.b16 %v578
    %v2252 = vunpack.c.l.b16 %v579
    %v2253 = vunpack.c.h.b16 %v579
    %v2254 = vunpack.c.l.b16 %v580
    %v2255 = vunpack.c.h.b16 %v580
    %v2256 = vunpack.c.l.b16 %v581
    %v2257 = vunpack.c.h.b16 %v581
    %v2258 = vunpack.c.l.b16 %v582
    %v2259 = vunpack.c.l.b16 %v583
    %v2260 = vunpack.c.h.b16 %v583
    %v2261 = vunpack.c.l.b16 %v584
    %v2262 = vunpack.c.h.b16 %v584
    %v2263 = vunpack.c.l.b16 %v585
    %v2264 = vunpack.c.h.b16 %v585
    %v2265 = vunpack.c.l.b16 %v586
    %v2266 = vunpack.c.h.b16 %v586
    %v2267 = vunpack.c.l.b16 %v587
    %v2268 = vunpack.c.l.b16 %v588
    %v2269 = vunpack.c.h.b16 %v588
    %v2270 = vunpack.c.l.b16 %v589
    %v2271 = vunpack.c.h.b16 %v589
    %v2272 = vunpack.c.l.b16 %v590
    %v2273 = vunpack.c.h.b16 %v590
    %v2274 = vunpack.c.l.b16 %v591
    %v2275 = vunpack.c.h.b16 %v591
    %v2276 = vunpack.c.l.b16 %v592
    %v2277 = vunpack.c.l.b16 %v593
    %v2278 = vunpack.c.h.b16 %v593
    %v2279 = vunpack.c.l.b16 %v594
    %v2280 = vunpack.c.h.b16 %v594
    %v2281 = vunpack.c.l.b16 %v595
    %v2282 = vunpack.c.h.b16 %v595
    %v2283 = vunpack.c.l.b16 %v596
    %v2284 = vunpack.c.h.b16 %v596
    %v2285 = vunpack.c.l.b16 %v597
    %v2286 = vunpack.c.l.b16 %v598
    %v2287 = vunpack.c.h.b16 %v598
    %v2288 = vunpack.c.l.b16 %v599
    %v2289 = vunpack.c.h.b16 %v599
    %v2290 = vunpack.c.l.b16 %v600
    %v2291 = vunpack.c.h.b16 %v600
    %v2292 = vunpack.c.l.b16 %v601
    %v2293 = vunpack.c.h.b16 %v601
    %v2294 = vunpack.c.l.b16 %v602
    %v2295 = vunpack.c.l.b16 %v603
    %v2296 = vunpack.c.h.b16 %v603
    %v2297 = vunpack.c.l.b16 %v604
    %v2298 = vunpack.c.h.b16 %v604
    %v2299 = vunpack.c.l.b16 %v605
    %v2300 = vunpack.c.h.b16 %v605
    %v2301 = vunpack.c.l.b16 %v606
    %v2302 = vunpack.c.h.b16 %v606
    %v2303 = vunpack.c.l.b16 %v607
    %v2304 = vunpack.c.l.b16 %v608
    %v2305 = vunpack.c.h.b16 %v608
    %v2306 = vunpack.c.l.b16 %v609
    %v2307 = vunpack.c.h.b16 %v609
    %v2308 = vunpack.c.l.b16 %v610
    %v2309 = vunpack.c.h.b16 %v610
    %v2310 = vunpack.c.l.b16 %v611
    %v2311 = vunpack.c.h.b16 %v611
    %v2312 = vunpack.c.l.b16 %v612
    %v2313 = vunpack.c.l.b16 %v613
    %v2314 = vunpack.c.h.b16 %v613
    %v2315 = vunpack.c.l.b16 %v614
    %v2316 = vunpack.c.h.b16 %v614
    %v2317 = vunpack.c.l.b16 %v615
    %v2318 = vunpack.c.h.b16 %v615
    %v2319 = vunpack.c.l.b16 %v616
    %v2320 = vunpack.c.h.b16 %v616
    %v2321 = vunpack.c.l.b16 %v617
    %v2322 = vunpack.c.l.b16 %v618
    %v2323 = vunpack.c.h.b16 %v618
    %v2324 = vunpack.c.l.b16 %v619
    %v2325 = vunpack.c.h.b16 %v619
    %v2326 = vunpack.c.l.b16 %v620
    %v2327 = vunpack.c.h.b16 %v620
    %v2328 = vunpack.c.l.b16 %v621
    %v2329 = vunpack.c.h.b16 %v621
    %v2330 = vunpack.c.l.b16 %v622
    %v2331 = vunpack.c.l.b16 %v623
    %v2332 = vunpack.c.h.b16 %v623
    %v2333 = vunpack.c.l.b16 %v624
    %v2334 = vunpack.c.h.b16 %v624
    %v2335 = vunpack.c.l.b16 %v625
    %v2336 = vunpack.c.h.b16 %v625
    %v2337 = vunpack.c.l.b16 %v626
    %v2338 = vunpack.c.h.b16 %v626
    %v2339 = vunpack.c.l.b16 %v627
    %v2340 = vunpack.c.l.b16 %v628
    %v2341 = vunpack.c.h.b16 %v628
    %v2342 = vunpack.c.l.b16 %v629
    %v2343 = vunpack.c.h.b16 %v629
    %v2344 = vunpack.c.l.b16 %v630
    %v2345 = vunpack.c.h.b16 %v630
    %v2346 = vunpack.c.l.b16 %v631
    %v2347 = vunpack.c.h.b16 %v631
    %v2348 = vunpack.c.l.b16 %v632
    %v2349 = vunpack.c.l.b16 %v633
    %v2350 = vunpack.c.h.b16 %v633
    %v2351 = vunpack.c.l.b16 %v634
    %v2352 = vunpack.c.h.b16 %v634
    %v2353 = vunpack.c.l.b16 %v635
    %v2354 = vunpack.c.h.b16 %v635
    %v2355 = vunpack.c.l.b16 %v636
    %v2356 = vunpack.c.h.b16 %v636
    %v2357 = vunpack.c.l.b16 %v637
    %v2358 = vunpack.c.l.b16 %v638
    %v2359 = vunpack.c.h.b16 %v638
    %v2360 = vunpack.c.l.b16 %v639
    %v2361 = vunpack.c.h.b16 %v639
    %v2362 = vunpack.c.l.b16 %v640
    %v2363 = vunpack.c.h.b16 %v640
    %v2364 = vunpack.c.l.b16 %v641
    %v2365 = vunpack.c.h.b16 %v641
    %v2366 = vunpack.c.l.b16 %v642
    %v2367 = vunpack.c.l.b16 %v643
    %v2368 = vunpack.c.h.b16 %v643
    %v2369 = vunpack.c.l.b16 %v644
    %v2370 = vunpack.c.h.b16 %v644
    %v2371 = vunpack.c.l.b16 %v645
    %v2372 = vunpack.c.h.b16 %v645
    %v2373 = vunpack.c.l.b16 %v646
    %v2374 = vunpack.c.h.b16 %v646
    %v2375 = vunpack.c.l.b16 %v647
    %v2376 = vunpack.c.l.b16 %v648
    %v2377 = vunpack.c.h.b16 %v648
    %v2378 = vunpack.c.l.b16 %v649
    %v2379 = vunpack.c.h.b16 %v649
    %v2380 = vunpack.c.l.b16 %v650
    %v2381 = vunpack.c.h.b16 %v650
    %v2382 = vunpack.c.l.b16 %v651
    %v2383 = vunpack.c.h.b16 %v651
    %v2384 = vunpack.c.l.b16 %v652
    %v2385 = vunpack.c.l.b16 %v653
    %v2386 = vunpack.c.h.b16 %v653
    %v2387 = vunpack.c.l.b16 %v654
    %v2388 = vunpack.c.h.b16 %v654
    %v2389 = vunpack.c.l.b16 %v655
    %v2390 = vunpack.c.h.b16 %v655
    %v2391 = vunpack.c.l.b16 %v656
    %v2392 = vunpack.c.h.b16 %v656
    %v2393 = vunpack.c.l.b16 %v657
    %v2394 = vunpack.c.l.b16 %v658
    %v2395 = vunpack.c.h.b16 %v658
    %v2396 = vunpack.c.l.b16 %v659
    %v2397 = vunpack.c.h.b16 %v659
    %v2398 = vunpack.c.l.b16 %v660
    %v2399 = vunpack.c.h.b16 %v660
    %v2400 = vunpack.c.l.b16 %v661
    %v2401 = vunpack.c.h.b16 %v661
    %v2402 = vunpack.c.l.b16 %v662
    %v2403 = vunpack.c.l.b16 %v663
    %v2404 = vunpack.c.h.b16 %v663
    %v2405 = vunpack.c.l.b16 %v664
    %v2406 = vunpack.c.h.b16 %v664
    %v2407 = vunpack.c.l.b16 %v665
    %v2408 = vunpack.c.h.b16 %v665
    %v2409 = vunpack.c.l.b16 %v666
    %v2410 = vunpack.c.h.b16 %v666
    %v2411 = vunpack.c.l.b16 %v667
    %v2412 = vunpack.c.l.b16 %v668
    %v2413 = vunpack.c.h.b16 %v668
    %v2414 = vunpack.c.l.b16 %v669
    %v2415 = vunpack.c.h.b16 %v669
    %v2416 = vunpack.c.l.b16 %v670
    %v2417 = vunpack.c.h.b16 %v670
    %v2418 = vunpack.c.l.b16 %v671
    %v2419 = vunpack.c.h.b16 %v671
    %v2420 = vunpack.c.l.b16 %v672
    %v2421 = vunpack.c.l.b16 %v673
    %v2422 = vunpack.c.h.b16 %v673
    %v2423 = vunpack.c.l.b16 %v674
    %v2424 = vunpack.c.h.b16 %v674
    %v2425 = vunpack.c.l.b16 %v675
    %v2426 = vunpack.c.h.b16 %v675
    %v2427 = vunpack.c.l.b16 %v676
    %v2428 = vunpack.c.h.b16 %v676
    %v2429 = vunpack.c.l.b16 %v677
    %v2430 = vunpack.c.l.b16 %v678
    %v2431 = vunpack.c.h.b16 %v678
    %v2432 = vunpack.c.l.b16 %v679
    %v2433 = vunpack.c.h.b16 %v679
    %v2434 = vunpack.c.l.b16 %v680
    %v2435 = vunpack.c.h.b16 %v680
    %v2436 = vunpack.c.l.b16 %v681
    %v2437 = vunpack.c.h.b16 %v681
    %v2438 = vunpack.c.l.b16 %v682
    %v2439 = vunpack.c.l.b16 %v683
    %v2440 = vunpack.c.h.b16 %v683
    %v2441 = vunpack.c.l.b16 %v684
    %v2442 = vunpack.c.h.b16 %v684
    %v2443 = vunpack.c.l.b16 %v685
    %v2444 = vunpack.c.h.b16 %v685
    %v2445 = vunpack.c.l.b16 %v686
    %v2446 = vunpack.c.h.b16 %v686
    %v2447 = vunpack.c.l.b16 %v687
    %v2448 = vunpack.c.l.b16 %v688
    %v2449 = vunpack.c.h.b16 %v688
    %v2450 = vunpack.c.l.b16 %v689
    %v2451 = vunpack.c.h.b16 %v689
    %v2452 = vunpack.c.l.b16 %v690
    %v2453 = vunpack.c.h.b16 %v690
    %v2454 = vunpack.c.l.b16 %v691
    %v2455 = vunpack.c.h.b16 %v691
    %v2456 = vunpack.c.l.b16 %v692
    %v2457 = vunpack.c.l.b16 %v693
    %v2458 = vunpack.c.h.b16 %v693
    %v2459 = vunpack.c.l.b16 %v694
    %v2460 = vunpack.c.h.b16 %v694
    %v2461 = vunpack.c.l.b16 %v695
    %v2462 = vunpack.c.h.b16 %v695
    %v2463 = vunpack.c.l.b16 %v696
    %v2464 = vunpack.c.h.b16 %v696
    %v2465 = vunpack.c.l.b16 %v697
    %v2466 = vunpack.c.l.b16 %v698
    %v2467 = vunpack.c.h.b16 %v698
    %v2468 = vunpack.c.l.b16 %v699
    %v2469 = vunpack.c.h.b16 %v699
    %v2470 = vunpack.c.l.b16 %v700
    %v2471 = vunpack.c.h.b16 %v700
    %v2472 = vunpack.c.l.b16 %v701
    %v2473 = vunpack.c.h.b16 %v701
    %v2474 = vunpack.c.l.b16 %v702
    %v2475 = vunpack.c.l.b16 %v703
    %v2476 = vunpack.c.h.b16 %v703
    %v2477 = vunpack.c.l.b16 %v704
    %v2478 = vunpack.c.h.b16 %v704
    %v2479 = vunpack.c.l.b16 %v705
    %v2480 = vunpack.c.h.b16 %v705
    %v2481 = vunpack.c.l.b16 %v706
    %v2482 = vunpack.c.h.b16 %v706
    %v2483 = vunpack.c.l.b16 %v707
    %v2484 = vunpack.c.l.b16 %v708
    %v2485 = vunpack.c.h.b16 %v708
    %v2486 = vunpack.c.l.b16 %v709
    %v2487 = vunpack.c.h.b16 %v709
    %v2488 = vunpack.c.l.b16 %v710
    %v2489 = vunpack.c.h.b16 %v710
    %v2490 = vunpack.c.l.b16 %v711
    %v2491 = vunpack.c.h.b16 %v711
    %v2492 = vunpack.c.l.b16 %v712
    %v2493 = vunpack.c.l.b16 %v713
    %v2494 = vunpack.c.h.b16 %v713
    %v2495 = vunpack.c.l.b16 %v714
    %v2496 = vunpack.c.h.b16 %v714
    %v2497 = vunpack.c.l.b16 %v715
    %v2498 = vunpack.c.h.b16 %v715
    %v2499 = vunpack.c.l.b16 %v716
    %v2500 = vunpack.c.h.b16 %v716
    %v2501 = vunpack.c.l.b16 %v717
    %v2502 = vunpack.c.l.b16 %v718
    %v2503 = vunpack.c.h.b16 %v718
    %v2504 = vunpack.c.l.b16 %v719
    %v2505 = vunpack.c.h.b16 %v719
    %v2506 = vunpack.c.l.b16 %v720
    %v2507 = vunpack.c.h.b16 %v720
    %v2508 = vunpack.c.l.b16 %v721
    %v2509 = vunpack.c.h.b16 %v721
    %v2510 = vunpack.c.l.b16 %v722
    %v2511 = vunpack.c.l.b16 %v723
    %v2512 = vunpack.c.h.b16 %v723
    %v2513 = vunpack.c.l.b16 %v724
    %v2514 = vunpack.c.h.b16 %v724
    %v2515 = vunpack.c.l.b16 %v725
    %v2516 = vunpack.c.h.b16 %v725
    %v2517 = vunpack.c.l.b16 %v726
    %v2518 = vunpack.c.h.b16 %v726
    %v2519 = vunpack.c.l.b16 %v727
    %v2520 = vpack.c.b16 %v1377, %v1368
    %v2521 = vpack.c.b16 %v1378, %v1369
    %v2522 = vpack.c.b16 %v1379, %v1370
    %v2523 = vpack.c.b16 %v1380, %v1371
    %v2524 = vpack.c.b16 %v1381, %v1372
    %v2525 = vpack.c.b16 %v1382, %v1373
    %v2526 = vpack.c.b16 %v1383, %v1374
    %v2527 = vpack.c.b16 %v1384, %v1375
    %v2528 = vpack.c.b16 %v1385, %v1376
    %v2529 = vpack.c.b16 %v1395, %v1386
    %v2530 = vpack.c.b16 %v1396, %v1387
    %v2531 = vpack.c.b16 %v1397, %v1388
    %v2532 = vpack.c.b16 %v1398, %v1389
    %v2533 = vpack.c.b16 %v1399, %v1390
    %v2534 = vpack.c.b16 %v1400, %v1391
    %v2535 = vpack.c.b16 %v1401, %v1392
    %v2536 = vpack.c.b16 %v1402, %v1393
    %v2537 = vpack.c.b16 %v1403, %v1394
    %v2538 = vpack.c.b16 %v1413, %v1404
    %v2539 = vpack.c.b16 %v1414, %v1405
    %v2540 = vpack.c.b16 %v1415, %v1406
    %v2541 = vpack.c.b16 %v1416, %v1407
    %v2542 = vpack.c.b16 %v1417, %v1408
    %v2543 = vpack.c.b16 %v1418, %v1409
    %v2544 = vpack.c.b16 %v1419, %v1410
    %v2545 = vpack.c.b16 %v1420, %v1411
    %v2546 = vpack.c.b16 %v1421, %v1412
    %v2547 = vpack.c.b16 %v1431, %v1422
    %v2548 = vpack.c.b16 %v1432, %v1423
    %v2549 = vpack.c.b16 %v1433, %v1424
    %v2550 = vpack.c.b16 %v1434, %v1425
    %v2551 = vpack.c.b16 %v1435, %v1426
    %v2552 = vpack.c.b16 %v1436, %v1427
    %v2553 = vpack.c.b16 %v1437, %v1428
    %v2554 = vpack.c.b16 %v1438, %v1429
    %v2555 = vpack.c.b16 %v1439, %v1430
    %v2556 = vpack.c.b16 %v1449, %v1440
    %v2557 = vpack.c.b16 %v1450, %v1441
    %v2558 = vpack.c.b16 %v1451, %v1442
    %v2559 = vpack.c.b16 %v1452, %v1443
    %v2560 = vpack.c.b16 %v1453, %v1444
    %v2561 = vpack.c.b16 %v1454, %v1445
    %v2562 = vpack.c.b16 %v1455, %v1446
    %v2563 = vpack.c.b16 %v1456, %v1447
    %v2564 = vpack.c.b16 %v1457, %v1448
    %v2565 = vpack.c.b16 %v1467, %v1458
    %v2566 = vpack.c.b16 %v1468, %v1459
    %v2567 = vpack.c.b16 %v1469, %v1460
    %v2568 = vpack.c.b16 %v1470, %v1461
    %v2569 = vpack.c.b16 %v1471, %v1462
    %v2570 = vpack.c.b16 %v1472, %v1463
    %v2571 = vpack.c.b16 %v1473, %v1464
    %v2572 = vpack.c.b16 %v1474, %v1465
    %v2573 = vpack.c.b16 %v1475, %v1466
    %v2574 = vpack.c.b16 %v1485, %v1476
    %v2575 = vpack.c.b16 %v1486, %v1477
    %v2576 = vpack.c.b16 %v1487, %v1478
    %v2577 = vpack.c.b16 %v1488, %v1479
    %v2578 = vpack.c.b16 %v1489, %v1480
    %v2579 = vpack.c.b16 %v1490, %v1481
    %v2580 = vpack.c.b16 %v1491, %v1482
    %v2581 = vpack.c.b16 %v1492, %v1483
    %v2582 = vpack.c.b16 %v1493, %v1484
    %v2583 = vpack.c.b16 %v1503, %v1494
    %v2584 = vpack.c.b16 %v1504, %v1495
    %v2585 = vpack.c.b16 %v1505, %v1496
    %v2586 = vpack.c.b16 %v1506, %v1497
    %v2587 = vpack.c.b16 %v1507, %v1498
    %v2588 = vpack.c.b16 %v1508, %v1499
    %v2589 = vpack.c.b16 %v1509, %v1500
    %v2590 = vpack.c.b16 %v1510, %v1501
    %v2591 = vpack.c.b16 %v1511, %v1502
    %v2592 = vpack.c.b16 %v1521, %v1512
    %v2593 = vpack.c.b16 %v1522, %v1513
    %v2594 = vpack.c.b16 %v1523, %v1514
    %v2595 = vpack.c.b16 %v1524, %v1515
    %v2596 = vpack.c.b16 %v1525, %v1516
    %v2597 = vpack.c.b16 %v1526, %v1517
    %v2598 = vpack.c.b16 %v1527, %v1518
    %v2599 = vpack.c.b16 %v1528, %v1519
    %v2600 = vpack.c.b16 %v1529, %v1520
    %v2601 = vpack.c.b16 %v1539, %v1530
    %v2602 = vpack.c.b16 %v1540, %v1531
    %v2603 = vpack.c.b16 %v1541, %v1532
    %v2604 = vpack.c.b16 %v1542, %v1533
    %v2605 = vpack.c.b16 %v1543, %v1534
    %v2606 = vpack.c.b16 %v1544, %v1535
    %v2607 = vpack.c.b16 %v1545, %v1536
    %v2608 = vpack.c.b16 %v1546, %v1537
    %v2609 = vpack.c.b16 %v1547, %v1538
    %v2610 = vpack.c.b16 %v1557, %v1548
    %v2611 = vpack.c.b16 %v1558, %v1549
    %v2612 = vpack.c.b16 %v1559, %v1550
    %v2613 = vpack.c.b16 %v1560, %v1551
    %v2614 = vpack.c.b16 %v1561, %v1552
    %v2615 = vpack.c.b16 %v1562, %v1553
    %v2616 = vpack.c.b16 %v1563, %v1554
    %v2617 = vpack.c.b16 %v1564, %v1555
    %v2618 = vpack.c.b16 %v1565, %v1556
    %v2619 = vpack.c.b16 %v1575, %v1566
    %v2620 = vpack.c.b16 %v1576, %v1567
    %v2621 = vpack.c.b16 %v1577, %v1568
    %v2622 = vpack.c.b16 %v1578, %v1569
    %v2623 = vpack.c.b16 %v1579, %v1570
    %v2624 = vpack.c.b16 %v1580, %v1571
    %v2625 = vpack.c.b16 %v1581, %v1572
    %v2626 = vpack.c.b16 %v1582, %v1573
    %v2627 = vpack.c.b16 %v1583, %v1574
    %v2628 = vpack.c.b16 %v1593, %v1584
    %v2629 = vpack.c.b16 %v1594, %v1585
    %v2630 = vpack.c.b16 %v1595, %v1586
    %v2631 = vpack.c.b16 %v1596, %v1587
    %v2632 = vpack.c.b16 %v1597, %v1588
    %v2633 = vpack.c.b16 %v1598, %v1589
    %v2634 = vpack.c.b16 %v1599, %v1590
    %v2635 = vpack.c.b16 %v1600, %v1591
    %v2636 = vpack.c.b16 %v1601, %v1592
    %v2637 = vpack.c.b16 %v1611, %v1602
    %v2638 = vpack.c.b16 %v1612, %v1603
    %v2639 = vpack.c.b16 %v1613, %v1604
    %v2640 = vpack.c.b16 %v1614, %v1605
    %v2641 = vpack.c.b16 %v1615, %v1606
    %v2642 = vpack.c.b16 %v1616, %v1607
    %v2643 = vpack.c.b16 %v1617, %v1608
    %v2644 = vpack.c.b16 %v1618, %v1609
    %v2645 = vpack.c.b16 %v1619, %v1610
    %v2646 = vpack.c.b16 %v1629, %v1620
    %v2647 = vpack.c.b16 %v1630, %v1621
    %v2648 = vpack.c.b16 %v1631, %v1622
    %v2649 = vpack.c.b16 %v1632, %v1623
    %v2650 = vpack.c.b16 %v1633, %v1624
    %v2651 = vpack.c.b16 %v1634, %v1625
    %v2652 = vpack.c.b16 %v1635, %v1626
    %v2653 = vpack.c.b16 %v1636, %v1627
    %v2654 = vpack.c.b16 %v1637, %v1628
    %v2655 = vpack.c.b16 %v1647, %v1638
    %v2656 = vpack.c.b16 %v1648, %v1639
    %v2657 = vpack.c.b16 %v1649, %v1640
    %v2658 = vpack.c.b16 %v1650, %v1641
    %v2659 = vpack.c.b16 %v1651, %v1642
    %v2660 = vpack.c.b16 %v1652, %v1643
    %v2661 = vpack.c.b16 %v1653, %v1644
    %v2662 = vpack.c.b16 %v1654, %v1645
    %v2663 = vpack.c.b16 %v1655, %v1646
    %v2664 = vpack.c.b16 %v1665, %v1656
    %v2665 = vpack.c.b16 %v1666, %v1657
    %v2666 = vpack.c.b16 %v1667, %v1658
    %v2667 = vpack.c.b16 %v1668, %v1659
    %v2668 = vpack.c.b16 %v1669, %v1660
    %v2669 = vpack.c.b16 %v1670, %v1661
    %v2670 = vpack.c.b16 %v1671, %v1662
    %v2671 = vpack.c.b16 %v1672, %v1663
    %v2672 = vpack.c.b16 %v1673, %v1664
    %v2673 = vpack.c.b16 %v1683, %v1674
    %v2674 = vpack.c.b16 %v1684, %v1675
    %v2675 = vpack.c.b16 %v1685, %v1676
    %v2676 = vpack.c.b16 %v1686, %v1677
    %v2677 = vpack.c.b16 %v1687, %v1678
    %v2678 = vpack.c.b16 %v1688, %v1679
    %v2679 = vpack.c.b16 %v1689, %v1680
    %v2680 = vpack.c.b16 %v1690, %v1681
    %v2681 = vpack.c.b16 %v1691, %v1682
    %v2682 = vpack.c.b16 %v1701, %v1692
    %v2683 = vpack.c.b16 %v1702, %v1693
    %v2684 = vpack.c.b16 %v1703, %v1694
    %v2685 = vpack.c.b16 %v1704, %v1695
    %v2686 = vpack.c.b16 %v1705, %v1696
    %v2687 = vpack.c.b16 %v1706, %v1697
    %v2688 = vpack.c.b16 %v1707, %v1698
    %v2689 = vpack.c.b16 %v1708, %v1699
    %v2690 = vpack.c.b16 %v1709, %v1700
    %v2691 = vpack.c.b16 %v1719, %v1710
    %v2692 = vpack.c.b16 %v1720, %v1711
    %v2693 = vpack.c.b16 %v1721, %v1712
    %v2694 = vpack.c.b16 %v1722, %v1713
    %v2695 = vpack.c.b16 %v1723, %v1714
    %v2696 = vpack.c.b16 %v1724, %v1715
    %v2697 = vpack.c.b16 %v1725, %v1716
    %v2698 = vpack.c.b16 %v1726, %v1717
    %v2699 = vpack.c.b16 %v1727, %v1718
    %v2700 = vpack.c.b16 %v1737, %v1728
    %v2701 = vpack.c.b16 %v1738, %v1729
    %v2702 = vpack.c.b16 %v1739, %v1730
    %v2703 = vpack.c.b16 %v1740, %v1731
    %v2704 = vpack.c.b16 %v1741, %v1732
    %v2705 = vpack.c.b16 %v1742, %v1733
    %v2706 = vpack.c.b16 %v1743, %v1734
    %v2707 = vpack.c.b16 %v1744, %v1735
    %v2708 = vpack.c.b16 %v1745, %v1736
    %v2709 = vpack.c.b16 %v1755, %v1746
    %v2710 = vpack.c.b16 %v1756, %v1747
    %v2711 = vpack.c.b16 %v1757, %v1748
    %v2712 = vpack.c.b16 %v1758, %v1749
    %v2713 = vpack.c.b16 %v1759, %v1750
    %v2714 = vpack.c.b16 %v1760, %v1751
    %v2715 = vpack.c.b16 %v1761, %v1752
    %v2716 = vpack.c.b16 %v1762, %v1753
    %v2717 = vpack.c.b16 %v1763, %v1754
    %v2718 = vpack.c.b16 %v1773, %v1764
    %v2719 = vpack.c.b16 %v1774, %v1765
    %v2720 = vpack.c.b16 %v1775, %v1766
    %v2721 = vpack.c.b16 %v1776, %v1767
    %v2722 = vpack.c.b16 %v1777, %v1768
    %v2723 = vpack.c.b16 %v1778, %v1769
    %v2724 = vpack.c.b16 %v1779, %v1770
    %v2725 = vpack.c.b16 %v1780, %v1771
    %v2726 = vpack.c.b16 %v1781, %v1772
    %v2727 = vpack.c.b16 %v1791, %v1782
    %v2728 = vpack.c.b16 %v1792, %v1783
    %v2729 = vpack.c.b16 %v1793, %v1784
    %v2730 = vpack.c.b16 %v1794, %v1785
    %v2731 = vpack.c.b16 %v1795, %v1786
    %v2732 = vpack.c.b16 %v1796, %v1787
    %v2733 = vpack.c.b16 %v1797, %v1788
    %v2734 = vpack.c.b16 %v1798, %v1789
    %v2735 = vpack.c.b16 %v1799, %v1790
    %v2736 = vpack.c.b16 %v1809, %v1800
    %v2737 = vpack.c.b16 %v1810, %v1801
    %v2738 = vpack.c.b16 %v1811, %v1802
    %v2739 = vpack.c.b16 %v1812, %v1803
    %v2740 = vpack.c.b16 %v1813, %v1804
    %v2741 = vpack.c.b16 %v1814, %v1805
    %v2742 = vpack.c.b16 %v1815, %v1806
    %v2743 = vpack.c.b16 %v1816, %v1807
    %v2744 = vpack.c.b16 %v1817, %v1808
    %v2745 = vpack.c.b16 %v1827, %v1818
    %v2746 = vpack.c.b16 %v1828, %v1819
    %v2747 = vpack.c.b16 %v1829, %v1820
    %v2748 = vpack.c.b16 %v1830, %v1821
    %v2749 = vpack.c.b16 %v1831, %v1822
    %v2750 = vpack.c.b16 %v1832, %v1823
    %v2751 = vpack.c.b16 %v1833, %v1824
    %v2752 = vpack.c.b16 %v1834, %v1825
    %v2753 = vpack.c.b16 %v1835, %v1826
    %v2754 = vpack.c.b16 %v1845, %v1836
    %v2755 = vpack.c.b16 %v1846, %v1837
    %v2756 = vpack.c.b16 %v1847, %v1838
    %v2757 = vpack.c.b16 %v1848, %v1839
    %v2758 = vpack.c.b16 %v1849, %v1840
    %v2759 = vpack.c.b16 %v1850, %v1841
    %v2760 = vpack.c.b16 %v1851, %v1842
    %v2761 = vpack.c.b16 %v1852, %v1843
    %v2762 = vpack.c.b16 %v1853, %v1844
    %v2763 = vpack.c.b16 %v1863, %v1854
    %v2764 = vpack.c.b16 %v1864, %v1855
    %v2765 = vpack.c.b16 %v1865, %v1856
    %v2766 = vpack.c.b16 %v1866, %v1857
    %v2767 = vpack.c.b16 %v1867, %v1858
    %v2768 = vpack.c.b16 %v1868, %v1859
    %v2769 = vpack.c.b16 %v1869, %v1860
    %v2770 = vpack.c.b16 %v1870, %v1861
    %v2771 = vpack.c.b16 %v1871, %v1862
    %v2772 = vpack.c.b16 %v1881, %v1872
    %v2773 = vpack.c.b16 %v1882, %v1873
    %v2774 = vpack.c.b16 %v1883, %v1874
    %v2775 = vpack.c.b16 %v1884, %v1875
    %v2776 = vpack.c.b16 %v1885, %v1876
    %v2777 = vpack.c.b16 %v1886, %v1877
    %v2778 = vpack.c.b16 %v1887, %v1878
    %v2779 = vpack.c.b16 %v1888, %v1879
    %v2780 = vpack.c.b16 %v1889, %v1880
    %v2781 = vpack.c.b16 %v1899, %v1890
    %v2782 = vpack.c.b16 %v1900, %v1891
    %v2783 = vpack.c.b16 %v1901, %v1892
    %v2784 = vpack.c.b16 %v1902, %v1893
    %v2785 = vpack.c.b16 %v1903, %v1894
    %v2786 = vpack.c.b16 %v1904, %v1895
    %v2787 = vpack.c.b16 %v1905, %v1896
    %v2788 = vpack.c.b16 %v1906, %v1897
    %v2789 = vpack.c.b16 %v1907, %v1898
    %v2790 = vpack.c.b16 %v1917, %v1908
    %v2791 = vpack.c.b16 %v1918, %v1909
    %v2792 = vpack.c.b16 %v1919, %v1910
    %v2793 = vpack.c.b16 %v1920, %v1911
    %v2794 = vpack.c.b16 %v1921, %v1912
    %v2795 = vpack.c.b16 %v1922, %v1913
    %v2796 = vpack.c.b16 %v1923, %v1914
    %v2797 = vpack.c.b16 %v1924, %v1915
    %v2798 = vpack.c.b16 %v1925, %v1916
    %v2799 = vpack.c.b16 %v1935, %v1926
    %v2800 = vpack.c.b16 %v1936, %v1927
    %v2801 = vpack.c.b16 %v1937, %v1928
    %v2802 = vpack.c.b16 %v1938, %v1929
    %v2803 = vpack.c.b16 %v1939, %v1930
    %v2804 = vpack.c.b16 %v1940, %v1931
    %v2805 = vpack.c.b16 %v1941, %v1932
    %v2806 = vpack.c.b16 %v1942, %v1933
    %v2807 = vpack.c.b16 %v1943, %v1934
    %v2808 = vpack.c.b16 %v1953, %v1944
    %v2809 = vpack.c.b16 %v1954, %v1945
    %v2810 = vpack.c.b16 %v1955, %v1946
    %v2811 = vpack.c.b16 %v1956, %v1947
    %v2812 = vpack.c.b16 %v1957, %v1948
    %v2813 = vpack.c.b16 %v1958, %v1949
    %v2814 = vpack.c.b16 %v1959, %v1950
    %v2815 = vpack.c.b16 %v1960, %v1951
    %v2816 = vpack.c.b16 %v1961, %v1952
    %v2817 = vpack.c.b16 %v1971, %v1962
    %v2818 = vpack.c.b16 %v1972, %v1963
    %v2819 = vpack.c.b16 %v1973, %v1964
    %v2820 = vpack.c.b16 %v1974, %v1965
    %v2821 = vpack.c.b16 %v1975, %v1966
    %v2822 = vpack.c.b16 %v1976, %v1967
    %v2823 = vpack.c.b16 %v1977, %v1968
    %v2824 = vpack.c.b16 %v1978, %v1969
    %v2825 = vpack.c.b16 %v1979, %v1970
    %v2826 = vpack.c.b16 %v1989, %v1980
    %v2827 = vpack.c.b16 %v1990, %v1981
    %v2828 = vpack.c.b16 %v1991, %v1982
    %v2829 = vpack.c.b16 %v1992, %v1983
    %v2830 = vpack.c.b16 %v1993, %v1984
    %v2831 = vpack.c.b16 %v1994, %v1985
    %v2832 = vpack.c.b16 %v1995, %v1986
    %v2833 = vpack.c.b16 %v1996, %v1987
    %v2834 = vpack.c.b16 %v1997, %v1988
    %v2835 = vpack.c.b16 %v2007, %v1998
    %v2836 = vpack.c.b16 %v2008, %v1999
    %v2837 = vpack.c.b16 %v2009, %v2000
    %v2838 = vpack.c.b16 %v2010, %v2001
    %v2839 = vpack.c.b16 %v2011, %v2002
    %v2840 = vpack.c.b16 %v2012, %v2003
    %v2841 = vpack.c.b16 %v2013, %v2004
    %v2842 = vpack.c.b16 %v2014, %v2005
    %v2843 = vpack.c.b16 %v2015, %v2006
    %v2844 = vpack.c.b16 %v2025, %v2016
    %v2845 = vpack.c.b16 %v2026, %v2017
    %v2846 = vpack.c.b16 %v2027, %v2018
    %v2847 = vpack.c.b16 %v2028, %v2019
    %v2848 = vpack.c.b16 %v2029, %v2020
    %v2849 = vpack.c.b16 %v2030, %v2021
    %v2850 = vpack.c.b16 %v2031, %v2022
    %v2851 = vpack.c.b16 %v2032, %v2023
    %v2852 = vpack.c.b16 %v2033, %v2024
    %v2853 = vpack.c.b16 %v2043, %v2034
    %v2854 = vpack.c.b16 %v2044, %v2035
    %v2855 = vpack.c.b16 %v2045, %v2036
    %v2856 = vpack.c.b16 %v2046, %v2037
    %v2857 = vpack.c.b16 %v2047, %v2038
    %v2858 = vpack.c.b16 %v2048, %v2039
    %v2859 = vpack.c.b16 %v2049, %v2040
    %v2860 = vpack.c.b16 %v2050, %v2041
    %v2861 = vpack.c.b16 %v2051, %v2042
    %v2862 = vpack.c.b16 %v2061, %v2052
    %v2863 = vpack.c.b16 %v2062, %v2053
    %v2864 = vpack.c.b16 %v2063, %v2054
    %v2865 = vpack.c.b16 %v2064, %v2055
    %v2866 = vpack.c.b16 %v2065, %v2056
    %v2867 = vpack.c.b16 %v2066, %v2057
    %v2868 = vpack.c.b16 %v2067, %v2058
    %v2869 = vpack.c.b16 %v2068, %v2059
    %v2870 = vpack.c.b16 %v2069, %v2060
    %v2871 = vpack.c.b16 %v2079, %v2070
    %v2872 = vpack.c.b16 %v2080, %v2071
    %v2873 = vpack.c.b16 %v2081, %v2072
    %v2874 = vpack.c.b16 %v2082, %v2073
    %v2875 = vpack.c.b16 %v2083, %v2074
    %v2876 = vpack.c.b16 %v2084, %v2075
    %v2877 = vpack.c.b16 %v2085, %v2076
    %v2878 = vpack.c.b16 %v2086, %v2077
    %v2879 = vpack.c.b16 %v2087, %v2078
    %v2880 = vpack.c.b16 %v2097, %v2088
    %v2881 = vpack.c.b16 %v2098, %v2089
    %v2882 = vpack.c.b16 %v2099, %v2090
    %v2883 = vpack.c.b16 %v2100, %v2091
    %v2884 = vpack.c.b16 %v2101, %v2092
    %v2885 = vpack.c.b16 %v2102, %v2093
    %v2886 = vpack.c.b16 %v2103, %v2094
    %v2887 = vpack.c.b16 %v2104, %v2095
    %v2888 = vpack.c.b16 %v2105, %v2096
    %v2889 = vpack.c.b16 %v2115, %v2106
    %v2890 = vpack.c.b16 %v2116, %v2107
    %v2891 = vpack.c.b16 %v2117, %v2108
    %v2892 = vpack.c.b16 %v2118, %v2109
    %v2893 = vpack.c.b16 %v2119, %v2110
    %v2894 = vpack.c.b16 %v2120, %v2111
    %v2895 = vpack.c.b16 %v2121, %v2112
    %v2896 = vpack.c.b16 %v2122, %v2113
    %v2897 = vpack.c.b16 %v2123, %v2114
    %v2898 = vpack.c.b16 %v2133, %v2124
    %v2899 = vpack.c.b16 %v2134, %v2125
    %v2900 = vpack.c.b16 %v2135, %v2126
    %v2901 = vpack.c.b16 %v2136, %v2127
    %v2902 = vpack.c.b16 %v2137, %v2128
    %v2903 = vpack.c.b16 %v2138, %v2129
    %v2904 = vpack.c.b16 %v2139, %v2130
    %v2905 = vpack.c.b16 %v2140, %v2131
    %v2906 = vpack.c.b16 %v2141, %v2132
    %v2907 = vpack.c.b16 %v2151, %v2142
    %v2908 = vpack.c.b16 %v2152, %v2143
    %v2909 = vpack.c.b16 %v2153, %v2144
    %v2910 = vpack.c.b16 %v2154, %v2145
    %v2911 = vpack.c.b16 %v2155, %v2146
    %v2912 = vpack.c.b16 %v2156, %v2147
    %v2913 = vpack.c.b16 %v2157, %v2148
    %v2914 = vpack.c.b16 %v2158, %v2149
    %v2915 = vpack.c.b16 %v2159, %v2150
    %v2916 = vpack.c.b16 %v2169, %v2160
    %v2917 = vpack.c.b16 %v2170, %v2161
    %v2918 = vpack.c.b16 %v2171, %v2162
    %v2919 = vpack.c.b16 %v2172, %v2163
    %v2920 = vpack.c.b16 %v2173, %v2164
    %v2921 = vpack.c.b16 %v2174, %v2165
    %v2922 = vpack.c.b16 %v2175, %v2166
    %v2923 = vpack.c.b16 %v2176, %v2167
    %v2924 = vpack.c.b16 %v2177, %v2168
    %v2925 = vpack.c.b16 %v2187, %v2178
    %v2926 = vpack.c.b16 %v2188, %v2179
    %v2927 = vpack.c.b16 %v2189, %v2180
    %v2928 = vpack.c.b16 %v2190, %v2181
    %v2929 = vpack.c.b16 %v2191, %v2182
    %v2930 = vpack.c.b16 %v2192, %v2183
    %v2931 = vpack.c.b16 %v2193, %v2184
    %v2932 = vpack.c.b16 %v2194, %v2185
    %v2933 = vpack.c.b16 %v2195, %v2186
    %v2934 = vpack.c.b16 %v2205, %v2196
    %v2935 = vpack.c.b16 %v2206, %v2197
    %v2936 = vpack.c.b16 %v2207, %v2198
    %v2937 = vpack.c.b16 %v2208, %v2199
    %v2938 = vpack.c.b16 %v2209, %v2200
    %v2939 = vpack.c.b16 %v2210, %v2201
    %v2940 = vpack.c.b16 %v2211, %v2202
    %v2941 = vpack.c.b16 %v2212, %v2203
    %v2942 = vpack.c.b16 %v2213, %v2204
    %v2943 = vpack.c.b16 %v2223, %v2214
    %v2944 = vpack.c.b16 %v2224, %v2215
    %v2945 = vpack.c.b16 %v2225, %v2216
    %v2946 = vpack.c.b16 %v2226, %v2217
    %v2947 = vpack.c.b16 %v2227, %v2218
    %v2948 = vpack.c.b16 %v2228, %v2219
    %v2949 = vpack.c.b16 %v2229, %v2220
    %v2950 = vpack.c.b16 %v2230, %v2221
    %v2951 = vpack.c.b16 %v2231, %v2222
    %v2952 = vpack.c.b16 %v2241, %v2232
    %v2953 = vpack.c.b16 %v2242, %v2233
    %v2954 = vpack.c.b16 %v2243, %v2234
    %v2955 = vpack.c.b16 %v2244, %v2235
    %v2956 = vpack.c.b16 %v2245, %v2236
    %v2957 = vpack.c.b16 %v2246, %v2237
    %v2958 = vpack.c.b16 %v2247, %v2238
    %v2959 = vpack.c.b16 %v2248, %v2239
    %v2960 = vpack.c.b16 %v2249, %v2240
    %v2961 = vpack.c.b16 %v2259, %v2250
    %v2962 = vpack.c.b16 %v2260, %v2251
    %v2963 = vpack.c.b16 %v2261, %v2252
    %v2964 = vpack.c.b16 %v2262, %v2253
    %v2965 = vpack.c.b16 %v2263, %v2254
    %v2966 = vpack.c.b16 %v2264, %v2255
    %v2967 = vpack.c.b16 %v2265, %v2256
    %v2968 = vpack.c.b16 %v2266, %v2257
    %v2969 = vpack.c.b16 %v2267, %v2258
    %v2970 = vpack.c.b16 %v2277, %v2268
    %v2971 = vpack.c.b16 %v2278, %v2269
    %v2972 = vpack.c.b16 %v2279, %v2270
    %v2973 = vpack.c.b16 %v2280, %v2271
    %v2974 = vpack.c.b16 %v2281, %v2272
    %v2975 = vpack.c.b16 %v2282, %v2273
    %v2976 = vpack.c.b16 %v2283, %v2274
    %v2977 = vpack.c.b16 %v2284, %v2275
    %v2978 = vpack.c.b16 %v2285, %v2276
    %v2979 = vpack.c.b16 %v2295, %v2286
    %v2980 = vpack.c.b16 %v2296, %v2287
    %v2981 = vpack.c.b16 %v2297, %v2288
    %v2982 = vpack.c.b16 %v2298, %v2289
    %v2983 = vpack.c.b16 %v2299, %v2290
    %v2984 = vpack.c.b16 %v2300, %v2291
    %v2985 = vpack.c.b16 %v2301, %v2292
    %v2986 = vpack.c.b16 %v2302, %v2293
    %v2987 = vpack.c.b16 %v2303, %v2294
    %v2988 = vpack.c.b16 %v2313, %v2304
    %v2989 = vpack.c.b16 %v2314, %v2305
    %v2990 = vpack.c.b16 %v2315, %v2306
    %v2991 = vpack.c.b16 %v2316, %v2307
    %v2992 = vpack.c.b16 %v2317, %v2308
    %v2993 = vpack.c.b16 %v2318, %v2309
    %v2994 = vpack.c.b16 %v2319, %v2310
    %v2995 = vpack.c.b16 %v2320, %v2311
    %v2996 = vpack.c.b16 %v2321, %v2312
    %v2997 = vpack.c.b16 %v2331, %v2322
    %v2998 = vpack.c.b16 %v2332, %v2323
    %v2999 = vpack.c.b16 %v2333, %v2324
    %v3000 = vpack.c.b16 %v2334, %v2325
    %v3001 = vpack.c.b16 %v2335, %v2326
    %v3002 = vpack.c.b16 %v2336, %v2327
    %v3003 = vpack.c.b16 %v2337, %v2328
    %v3004 = vpack.c.b16 %v2338, %v2329
    %v3005 = vpack.c.b16 %v2339, %v2330
    %v3006 = vpack.c.b16 %v2349, %v2340
    %v3007 = vpack.c.b16 %v2350, %v2341
    %v3008 = vpack.c.b16 %v2351, %v2342
    %v3009 = vpack.c.b16 %v2352, %v2343
    %v3010 = vpack.c.b16 %v2353, %v2344
    %v3011 = vpack.c.b16 %v2354, %v2345
    %v3012 = vpack.c.b16 %v2355, %v2346
    %v3013 = vpack.c.b16 %v2356, %v2347
    %v3014 = vpack.c.b16 %v2357, %v2348
    %v3015 = vpack.c.b16 %v2367, %v2358
    %v3016 = vpack.c.b16 %v2368, %v2359
    %v3017 = vpack.c.b16 %v2369, %v2360
    %v3018 = vpack.c.b16 %v2370, %v2361
    %v3019 = vpack.c.b16 %v2371, %v2362
    %v3020 = vpack.c.b16 %v2372, %v2363
    %v3021 = vpack.c.b16 %v2373, %v2364
    %v3022 = vpack.c.b16 %v2374, %v2365
    %v3023 = vpack.c.b16 %v2375, %v2366
    %v3024 = vpack.c.b16 %v2385, %v2376
    %v3025 = vpack.c.b16 %v2386, %v2377
    %v3026 = vpack.c.b16 %v2387, %v2378
    %v3027 = vpack.c.b16 %v2388, %v2379
    %v3028 = vpack.c.b16 %v2389, %v2380
    %v3029 = vpack.c.b16 %v2390, %v2381
    %v3030 = vpack.c.b16 %v2391, %v2382
    %v3031 = vpack.c.b16 %v2392, %v2383
    %v3032 = vpack.c.b16 %v2393, %v2384
    %v3033 = vpack.c.b16 %v2403, %v2394
    %v3034 = vpack.c.b16 %v2404, %v2395
    %v3035 = vpack.c.b16 %v2405, %v2396
    %v3036 = vpack.c.b16 %v2406, %v2397
    %v3037 = vpack.c.b16 %v2407, %v2398
    %v3038 = vpack.c.b16 %v2408, %v2399
    %v3039 = vpack.c.b16 %v2409, %v2400
    %v3040 = vpack.c.b16 %v2410, %v2401
    %v3041 = vpack.c.b16 %v2411, %v2402
    %v3042 = vpack.c.b16 %v2421, %v2412
    %v3043 = vpack.c.b16 %v2422, %v2413
    %v3044 = vpack.c.b16 %v2423, %v2414
    %v3045 = vpack.c.b16 %v2424, %v2415
    %v3046 = vpack.c.b16 %v2425, %v2416
    %v3047 = vpack.c.b16 %v2426, %v2417
    %v3048 = vpack.c.b16 %v2427, %v2418
    %v3049 = vpack.c.b16 %v2428, %v2419
    %v3050 = vpack.c.b16 %v2429, %v2420
    %v3051 = vpack.c.b16 %v2439, %v2430
    %v3052 = vpack.c.b16 %v2440, %v2431
    %v3053 = vpack.c.b16 %v2441, %v2432
    %v3054 = vpack.c.b16 %v2442, %v2433
    %v3055 = vpack.c.b16 %v2443, %v2434
    %v3056 = vpack.c.b16 %v2444, %v2435
    %v3057 = vpack.c.b16 %v2445, %v2436
    %v3058 = vpack.c.b16 %v2446, %v2437
    %v3059 = vpack.c.b16 %v2447, %v2438
    %v3060 = vpack.c.b16 %v2457, %v2448
    %v3061 = vpack.c.b16 %v2458, %v2449
    %v3062 = vpack.c.b16 %v2459, %v2450
    %v3063 = vpack.c.b16 %v2460, %v2451
    %v3064 = vpack.c.b16 %v2461, %v2452
    %v3065 = vpack.c.b16 %v2462, %v2453
    %v3066 = vpack.c.b16 %v2463, %v2454
    %v3067 = vpack.c.b16 %v2464, %v2455
    %v3068 = vpack.c.b16 %v2465, %v2456
    %v3069 = vpack.c.b16 %v2475, %v2466
    %v3070 = vpack.c.b16 %v2476, %v2467
    %v3071 = vpack.c.b16 %v2477, %v2468
    %v3072 = vpack.c.b16 %v2478, %v2469
    %v3073 = vpack.c.b16 %v2479, %v2470
    %v3074 = vpack.c.b16 %v2480, %v2471
    %v3075 = vpack.c.b16 %v2481, %v2472
    %v3076 = vpack.c.b16 %v2482, %v2473
    %v3077 = vpack.c.b16 %v2483, %v2474
    %v3078 = vpack.c.b16 %v2493, %v2484
    %v3079 = vpack.c.b16 %v2494, %v2485
    %v3080 = vpack.c.b16 %v2495, %v2486
    %v3081 = vpack.c.b16 %v2496, %v2487
    %v3082 = vpack.c.b16 %v2497, %v2488
    %v3083 = vpack.c.b16 %v2498, %v2489
    %v3084 = vpack.c.b16 %v2499, %v2490
    %v3085 = vpack.c.b16 %v2500, %v2491
    %v3086 = vpack.c.b16 %v2501, %v2492
    %v3087 = vpack.c.b16 %v2511, %v2502
    %v3088 = vpack.c.b16 %v2512, %v2503
    %v3089 = vpack.c.b16 %v2513, %v2504
    %v3090 = vpack.c.b16 %v2514, %v2505
    %v3091 = vpack.c.b16 %v2515, %v2506
    %v3092 = vpack.c.b16 %v2516, %v2507
    %v3093 = vpack.c.b16 %v2517, %v2508
    %v3094 = vpack.c.b16 %v2518, %v2509
    %v3095 = vpack.c.b16 %v2519, %v2510
    %3672 = vmatprep.subr.bf16.mxu0 %v2584
    %3673 = vmatpush1.bf16.msra.mxu0 %v2583
    %3674 = vmatprep.subr.bf16.mxu0 %v2575
    %3675 = vmatpush1.bf16.msra.mxu0 %v2574
    %3676 = vmatprep.subr.bf16.mxu0 %v2566
    %3677 = vmatpush1.bf16.msra.mxu0 %v2565
    %3678 = vmatprep.subr.bf16.mxu0 %v2557
    %3679 = vmatpush1.bf16.msra.mxu0 %v2556
    %3680 = vmatprep.subr.bf16.mxu0 %v2548
    %3681 = vmatpush1.bf16.msra.mxu0 %v2547
    %3682 = vmatprep.subr.bf16.mxu0 %v2539
    %3683 = vmatpush1.bf16.msra.mxu0 %v2538
    %3684 = vmatprep.subr.bf16.mxu0 %v2530
    %3685 = vmatpush1.bf16.msra.mxu0 %v2529
    %3686 = vmatprep.subr.bf16.mxu0 %v2521
    %3687 = vmatpush1.bf16.msra.mxu0 %v2520
    %3688 = vmatprep.subr.bf16.mxu0 %v2656
    %3689 = vmatpush2.bf16.msra.mxu0 %v2655
    %3690 = vmatprep.subr.bf16.mxu0 %v2647
    %3691 = vmatpush2.bf16.msra.mxu0 %v2646
    %3692 = vmatprep.subr.bf16.mxu0 %v2638
    %3693 = vmatpush2.bf16.msra.mxu0 %v2637
    %3694 = vmatprep.subr.bf16.mxu0 %v2629
    %3695 = vmatpush2.bf16.msra.mxu0 %v2628
    %3696 = vmatprep.subr.bf16.mxu0 %v2620
    %3697 = vmatpush2.bf16.msra.mxu0 %v2619
    %3698 = vmatprep.subr.bf16.mxu0 %v2611
    %3699 = vmatpush2.bf16.msra.mxu0 %v2610
    %3700 = vmatprep.subr.bf16.mxu0 %v2602
    %3701 = vmatpush2.bf16.msra.mxu0 %v2601
    %3702 = vmatprep.subr.bf16.mxu0 %v2593
    %3703 = vmatpush2.bf16.msra.mxu0 %v2592
    %3704 = vmatprep.mubr.bf16.mxu0 %v73
    %3705 = vmatmul.mubr.bf16.gmra.mxu0 %v72
    %v3706 = vpop.f32.mrf.mxu0
    %v3707 = vadd.f32 0.0, %v3706
    %v3708 = vpop.f32.mrf.mxu0
    %v3709 = vadd.f32 0.0, %v3708
    %v3710 = vpop.f32.mrf.mxu0
    %v3711 = vadd.f32 0.0, %v3710
    %v3712 = vpop.f32.mrf.mxu0
    %v3713 = vadd.f32 0.0, %v3712
    %3714 = vmatprep.mubr.bf16.mxu0 %v81
    %3715 = vmatmul.mubr.bf16.gmra.mxu0 %v80
    %v3716 = vpop.f32.mrf.mxu0
    %v3717 = vadd.f32 0.0, %v3716
    %v3718 = vpop.f32.mrf.mxu0
    %v3719 = vadd.f32 0.0, %v3718
    %v3720 = vpop.f32.mrf.mxu0
    %v3721 = vadd.f32 0.0, %v3720
    %v3722 = vpop.f32.mrf.mxu0
    %v3723 = vadd.f32 0.0, %v3722
    %3724 = vdwg.mxu0
    %3725 = vmatprep.subr.bf16.mxu0 %v2728
    %3726 = vmatpush1.bf16.msra.mxu0 %v2727
    %3727 = vmatprep.subr.bf16.mxu0 %v2719
    %3728 = vmatpush1.bf16.msra.mxu0 %v2718
    %3729 = vmatprep.subr.bf16.mxu0 %v2710
    %3730 = vmatpush1.bf16.msra.mxu0 %v2709
    %3731 = vmatprep.subr.bf16.mxu0 %v2701
    %3732 = vmatpush1.bf16.msra.mxu0 %v2700
    %3733 = vmatprep.subr.bf16.mxu0 %v2692
    %3734 = vmatpush1.bf16.msra.mxu0 %v2691
    %3735 = vmatprep.subr.bf16.mxu0 %v2683
    %3736 = vmatpush1.bf16.msra.mxu0 %v2682
    %3737 = vmatprep.subr.bf16.mxu0 %v2674
    %3738 = vmatpush1.bf16.msra.mxu0 %v2673
    %3739 = vmatprep.subr.bf16.mxu0 %v2665
    %3740 = vmatpush1.bf16.msra.mxu0 %v2664
    %3741 = vmatprep.subr.bf16.mxu0 %v2800
    %3742 = vmatpush2.bf16.msra.mxu0 %v2799
    %3743 = vmatprep.subr.bf16.mxu0 %v2791
    %3744 = vmatpush2.bf16.msra.mxu0 %v2790
    %3745 = vmatprep.subr.bf16.mxu0 %v2782
    %3746 = vmatpush2.bf16.msra.mxu0 %v2781
    %3747 = vmatprep.subr.bf16.mxu0 %v2773
    %3748 = vmatpush2.bf16.msra.mxu0 %v2772
    %3749 = vmatprep.subr.bf16.mxu0 %v2764
    %3750 = vmatpush2.bf16.msra.mxu0 %v2763
    %3751 = vmatprep.subr.bf16.mxu0 %v2755
    %3752 = vmatpush2.bf16.msra.mxu0 %v2754
    %3753 = vmatprep.subr.bf16.mxu0 %v2746
    %3754 = vmatpush2.bf16.msra.mxu0 %v2745
    %3755 = vmatprep.subr.bf16.mxu0 %v2737
    %3756 = vmatpush2.bf16.msra.mxu0 %v2736
    %3757 = vmatprep.mubr.bf16.mxu0 %v75
    %3758 = vmatmul.mubr.bf16.gmra.mxu0 %v74
    %v3759 = vpop.f32.mrf.mxu0
    %v3760 = vadd.f32 %v3707, %v3759
    %v3761 = vpop.f32.mrf.mxu0
    %v3762 = vadd.f32 %v3709, %v3761
    %v3763 = vpop.f32.mrf.mxu0
    %v3764 = vadd.f32 %v3711, %v3763
    %v3765 = vpop.f32.mrf.mxu0
    %v3766 = vadd.f32 %v3713, %v3765
    %3767 = vmatprep.mubr.bf16.mxu0 %v83
    %3768 = vmatmul.mubr.bf16.gmra.mxu0 %v82
    %v3769 = vpop.f32.mrf.mxu0
    %v3770 = vadd.f32 %v3717, %v3769
    %v3771 = vpop.f32.mrf.mxu0
    %v3772 = vadd.f32 %v3719, %v3771
    %v3773 = vpop.f32.mrf.mxu0
    %v3774 = vadd.f32 %v3721, %v3773
    %v3775 = vpop.f32.mrf.mxu0
    %v3776 = vadd.f32 %v3723, %v3775
    %3777 = vdwg.mxu0
    %3778 = vmatprep.subr.bf16.mxu0 %v2872
    %3779 = vmatpush1.bf16.msra.mxu0 %v2871
    %3780 = vmatprep.subr.bf16.mxu0 %v2863
    %3781 = vmatpush1.bf16.msra.mxu0 %v2862
    %3782 = vmatprep.subr.bf16.mxu0 %v2854
    %3783 = vmatpush1.bf16.msra.mxu0 %v2853
    %3784 = vmatprep.subr.bf16.mxu0 %v2845
    %3785 = vmatpush1.bf16.msra.mxu0 %v2844
    %3786 = vmatprep.subr.bf16.mxu0 %v2836
    %3787 = vmatpush1.bf16.msra.mxu0 %v2835
    %3788 = vmatprep.subr.bf16.mxu0 %v2827
    %3789 = vmatpush1.bf16.msra.mxu0 %v2826
    %3790 = vmatprep.subr.bf16.mxu0 %v2818
    %3791 = vmatpush1.bf16.msra.mxu0 %v2817
    %3792 = vmatprep.subr.bf16.mxu0 %v2809
    %3793 = vmatpush1.bf16.msra.mxu0 %v2808
    %3794 = vmatprep.subr.bf16.mxu0 %v2944
    %3795 = vmatpush2.bf16.msra.mxu0 %v2943
    %3796 = vmatprep.subr.bf16.mxu0 %v2935
    %3797 = vmatpush2.bf16.msra.mxu0 %v2934
    %3798 = vmatprep.subr.bf16.mxu0 %v2926
    %3799 = vmatpush2.bf16.msra.mxu0 %v2925
    %3800 = vmatprep.subr.bf16.mxu0 %v2917
    %3801 = vmatpush2.bf16.msra.mxu0 %v2916
    %3802 = vmatprep.subr.bf16.mxu0 %v2908
    %3803 = vmatpush2.bf16.msra.mxu0 %v2907
    %3804 = vmatprep.subr.bf16.mxu0 %v2899
    %3805 = vmatpush2.bf16.msra.mxu0 %v2898
    %3806 = vmatprep.subr.bf16.mxu0 %v2890
    %3807 = vmatpush2.bf16.msra.mxu0 %v2889
    %3808 = vmatprep.subr.bf16.mxu0 %v2881
    %3809 = vmatpush2.bf16.msra.mxu0 %v2880
    %3810 = vmatprep.mubr.bf16.mxu0 %v77
    %3811 = vmatmul.mubr.bf16.gmra.mxu0 %v76
    %v3812 = vpop.f32.mrf.mxu0
    %v3813 = vadd.f32 %v3760, %v3812
    %v3814 = vpop.f32.mrf.mxu0
    %v3815 = vadd.f32 %v3762, %v3814
    %v3816 = vpop.f32.mrf.mxu0
    %v3817 = vadd.f32 %v3764, %v3816
    %v3818 = vpop.f32.mrf.mxu0
    %v3819 = vadd.f32 %v3766, %v3818
    %3820 = vmatprep.mubr.bf16.mxu0 %v85
    %3821 = vmatmul.mubr.bf16.gmra.mxu0 %v84
    %v3822 = vpop.f32.mrf.mxu0
    %v3823 = vadd.f32 %v3770, %v3822
    %v3824 = vpop.f32.mrf.mxu0
    %v3825 = vadd.f32 %v3772, %v3824
    %v3826 = vpop.f32.mrf.mxu0
    %v3827 = vadd.f32 %v3774, %v3826
    %v3828 = vpop.f32.mrf.mxu0
    %v3829 = vadd.f32 %v3776, %v3828
    %3830 = vdwg.mxu0
    %3831 = vmatprep.subr.bf16.mxu0 %v3016
    %3832 = vmatpush1.bf16.msra.mxu0 %v3015
    %3833 = vmatprep.subr.bf16.mxu0 %v3007
    %3834 = vmatpush1.bf16.msra.mxu0 %v3006
    %3835 = vmatprep.subr.bf16.mxu0 %v2998
    %3836 = vmatpush1.bf16.msra.mxu0 %v2997
    %3837 = vmatprep.subr.bf16.mxu0 %v2989
    %3838 = vmatpush1.bf16.msra.mxu0 %v2988
    %3839 = vmatprep.subr.bf16.mxu0 %v2980
    %3840 = vmatpush1.bf16.msra.mxu0 %v2979
    %3841 = vmatprep.subr.bf16.mxu0 %v2971
    %3842 = vmatpush1.bf16.msra.mxu0 %v2970
    %3843 = vmatprep.subr.bf16.mxu0 %v2962
    %3844 = vmatpush1.bf16.msra.mxu0 %v2961
    %3845 = vmatprep.subr.bf16.mxu0 %v2953
    %3846 = vmatpush1.bf16.msra.mxu0 %v2952
    %3847 = vmatprep.subr.bf16.mxu0 %v3088
    %3848 = vmatpush2.bf16.msra.mxu0 %v3087
    %3849 = vmatprep.subr.bf16.mxu0 %v3079
    %3850 = vmatpush2.bf16.msra.mxu0 %v3078
    %3851 = vmatprep.subr.bf16.mxu0 %v3070
    %3852 = vmatpush2.bf16.msra.mxu0 %v3069
    %3853 = vmatprep.subr.bf16.mxu0 %v3061
    %3854 = vmatpush2.bf16.msra.mxu0 %v3060
    %3855 = vmatprep.subr.bf16.mxu0 %v3052
    %3856 = vmatpush2.bf16.msra.mxu0 %v3051
    %3857 = vmatprep.subr.bf16.mxu0 %v3043
    %3858 = vmatpush2.bf16.msra.mxu0 %v3042
    %3859 = vmatprep.subr.bf16.mxu0 %v3034
    %3860 = vmatpush2.bf16.msra.mxu0 %v3033
    %3861 = vmatprep.subr.bf16.mxu0 %v3025
    %3862 = vmatpush2.bf16.msra.mxu0 %v3024
    %3863 = vmatprep.mubr.bf16.mxu0 %v79
    %3864 = vmatmul.mubr.bf16.gmra.mxu0 %v78
    %v3865 = vpop.f32.mrf.mxu0
    %v3866 = vadd.f32 %v3813, %v3865
    %v3867 = vpop.f32.mrf.mxu0
    %v3868 = vadd.f32 %v3815, %v3867
    %v3869 = vpop.f32.mrf.mxu0
    %v3870 = vadd.f32 %v3817, %v3869
    %v3871 = vpop.f32.mrf.mxu0
    %v3872 = vadd.f32 %v3819, %v3871
    %3873 = vmatprep.mubr.bf16.mxu0 %v87
    %3874 = vmatmul.mubr.bf16.gmra.mxu0 %v86
    %v3875 = vpop.f32.mrf.mxu0
    %v3876 = vadd.f32 %v3823, %v3875
    %v3877 = vpop.f32.mrf.mxu0
    %v3878 = vadd.f32 %v3825, %v3877
    %v3879 = vpop.f32.mrf.mxu0
    %v3880 = vadd.f32 %v3827, %v3879
    %v3881 = vpop.f32.mrf.mxu0
    %v3882 = vadd.f32 %v3829, %v3881
    %3883 = vdwg.mxu0
    %3884 = vmatprep.subr.bf16.mxu0 %v2586
    %3885 = vmatpush1.bf16.msra.mxu0 %v2585
    %3886 = vmatprep.subr.bf16.mxu0 %v2577
    %3887 = vmatpush1.bf16.msra.mxu0 %v2576
    %3888 = vmatprep.subr.bf16.mxu0 %v2568
    %3889 = vmatpush1.bf16.msra.mxu0 %v2567
    %3890 = vmatprep.subr.bf16.mxu0 %v2559
    %3891 = vmatpush1.bf16.msra.mxu0 %v2558
    %3892 = vmatprep.subr.bf16.mxu0 %v2550
    %3893 = vmatpush1.bf16.msra.mxu0 %v2549
    %3894 = vmatprep.subr.bf16.mxu0 %v2541
    %3895 = vmatpush1.bf16.msra.mxu0 %v2540
    %3896 = vmatprep.subr.bf16.mxu0 %v2532
    %3897 = vmatpush1.bf16.msra.mxu0 %v2531
    %3898 = vmatprep.subr.bf16.mxu0 %v2523
    %3899 = vmatpush1.bf16.msra.mxu0 %v2522
    %3900 = vmatprep.subr.bf16.mxu0 %v2658
    %3901 = vmatpush2.bf16.msra.mxu0 %v2657
    %3902 = vmatprep.subr.bf16.mxu0 %v2649
    %3903 = vmatpush2.bf16.msra.mxu0 %v2648
    %3904 = vmatprep.subr.bf16.mxu0 %v2640
    %3905 = vmatpush2.bf16.msra.mxu0 %v2639
    %3906 = vmatprep.subr.bf16.mxu0 %v2631
    %3907 = vmatpush2.bf16.msra.mxu0 %v2630
    %3908 = vmatprep.subr.bf16.mxu0 %v2622
    %3909 = vmatpush2.bf16.msra.mxu0 %v2621
    %3910 = vmatprep.subr.bf16.mxu0 %v2613
    %3911 = vmatpush2.bf16.msra.mxu0 %v2612
    %3912 = vmatprep.subr.bf16.mxu0 %v2604
    %3913 = vmatpush2.bf16.msra.mxu0 %v2603
    %3914 = vmatprep.subr.bf16.mxu0 %v2595
    %3915 = vmatpush2.bf16.msra.mxu0 %v2594
    %3916 = vmatprep.mubr.bf16.mxu0 %v73
    %3917 = vmatmul.mubr.bf16.gmra.mxu0 %v72
    %v3918 = vpop.f32.mrf.mxu0
    %v3919 = vadd.f32 0.0, %v3918
    %v3920 = vpop.f32.mrf.mxu0
    %v3921 = vadd.f32 0.0, %v3920
    %v3922 = vpop.f32.mrf.mxu0
    %v3923 = vadd.f32 0.0, %v3922
    %v3924 = vpop.f32.mrf.mxu0
    %v3925 = vadd.f32 0.0, %v3924
    %3926 = vmatprep.mubr.bf16.mxu0 %v81
    %3927 = vmatmul.mubr.bf16.gmra.mxu0 %v80
    %v3928 = vpop.f32.mrf.mxu0
    %v3929 = vadd.f32 0.0, %v3928
    %v3930 = vpop.f32.mrf.mxu0
    %v3931 = vadd.f32 0.0, %v3930
    %v3932 = vpop.f32.mrf.mxu0
    %v3933 = vadd.f32 0.0, %v3932
    %v3934 = vpop.f32.mrf.mxu0
    %v3935 = vadd.f32 0.0, %v3934
    %3936 = vdwg.mxu0
    %3937 = vmatprep.subr.bf16.mxu0 %v2730
    %3938 = vmatpush1.bf16.msra.mxu0 %v2729
    %3939 = vmatprep.subr.bf16.mxu0 %v2721
    %3940 = vmatpush1.bf16.msra.mxu0 %v2720
    %3941 = vmatprep.subr.bf16.mxu0 %v2712
    %3942 = vmatpush1.bf16.msra.mxu0 %v2711
    %3943 = vmatprep.subr.bf16.mxu0 %v2703
    %3944 = vmatpush1.bf16.msra.mxu0 %v2702
    %3945 = vmatprep.subr.bf16.mxu0 %v2694
    %3946 = vmatpush1.bf16.msra.mxu0 %v2693
    %3947 = vmatprep.subr.bf16.mxu0 %v2685
    %3948 = vmatpush1.bf16.msra.mxu0 %v2684
    %3949 = vmatprep.subr.bf16.mxu0 %v2676
    %3950 = vmatpush1.bf16.msra.mxu0 %v2675
    %3951 = vmatprep.subr.bf16.mxu0 %v2667
    %3952 = vmatpush1.bf16.msra.mxu0 %v2666
    %3953 = vmatprep.subr.bf16.mxu0 %v2802
    %3954 = vmatpush2.bf16.msra.mxu0 %v2801
    %3955 = vmatprep.subr.bf16.mxu0 %v2793
    %3956 = vmatpush2.bf16.msra.mxu0 %v2792
    %3957 = vmatprep.subr.bf16.mxu0 %v2784
    %3958 = vmatpush2.bf16.msra.mxu0 %v2783
    %3959 = vmatprep.subr.bf16.mxu0 %v2775
    %3960 = vmatpush2.bf16.msra.mxu0 %v2774
    %3961 = vmatprep.subr.bf16.mxu0 %v2766
    %3962 = vmatpush2.bf16.msra.mxu0 %v2765
    %3963 = vmatprep.subr.bf16.mxu0 %v2757
    %3964 = vmatpush2.bf16.msra.mxu0 %v2756
    %3965 = vmatprep.subr.bf16.mxu0 %v2748
    %3966 = vmatpush2.bf16.msra.mxu0 %v2747
    %3967 = vmatprep.subr.bf16.mxu0 %v2739
    %3968 = vmatpush2.bf16.msra.mxu0 %v2738
    %3969 = vmatprep.mubr.bf16.mxu0 %v75
    %3970 = vmatmul.mubr.bf16.gmra.mxu0 %v74
    %v3971 = vpop.f32.mrf.mxu0
    %v3972 = vadd.f32 %v3919, %v3971
    %v3973 = vpop.f32.mrf.mxu0
    %v3974 = vadd.f32 %v3921, %v3973
    %v3975 = vpop.f32.mrf.mxu0
    %v3976 = vadd.f32 %v3923, %v3975
    %v3977 = vpop.f32.mrf.mxu0
    %v3978 = vadd.f32 %v3925, %v3977
    %3979 = vmatprep.mubr.bf16.mxu0 %v83
    %3980 = vmatmul.mubr.bf16.gmra.mxu0 %v82
    %v3981 = vpop.f32.mrf.mxu0
    %v3982 = vadd.f32 %v3929, %v3981
    %v3983 = vpop.f32.mrf.mxu0
    %v3984 = vadd.f32 %v3931, %v3983
    %v3985 = vpop.f32.mrf.mxu0
    %v3986 = vadd.f32 %v3933, %v3985
    %v3987 = vpop.f32.mrf.mxu0
    %v3988 = vadd.f32 %v3935, %v3987
    %3989 = vdwg.mxu0
    %3990 = vmatprep.subr.bf16.mxu0 %v2874
    %3991 = vmatpush1.bf16.msra.mxu0 %v2873
    %3992 = vmatprep.subr.bf16.mxu0 %v2865
    %3993 = vmatpush1.bf16.msra.mxu0 %v2864
    %3994 = vmatprep.subr.bf16.mxu0 %v2856
    %3995 = vmatpush1.bf16.msra.mxu0 %v2855
    %3996 = vmatprep.subr.bf16.mxu0 %v2847
    %3997 = vmatpush1.bf16.msra.mxu0 %v2846
    %3998 = vmatprep.subr.bf16.mxu0 %v2838
    %3999 = vmatpush1.bf16.msra.mxu0 %v2837
    %4000 = vmatprep.subr.bf16.mxu0 %v2829
    %4001 = vmatpush1.bf16.msra.mxu0 %v2828
    %4002 = vmatprep.subr.bf16.mxu0 %v2820
    %4003 = vmatpush1.bf16.msra.mxu0 %v2819
    %4004 = vmatprep.subr.bf16.mxu0 %v2811
    %4005 = vmatpush1.bf16.msra.mxu0 %v2810
    %4006 = vmatprep.subr.bf16.mxu0 %v2946
    %4007 = vmatpush2.bf16.msra.mxu0 %v2945
    %4008 = vmatprep.subr.bf16.mxu0 %v2937
    %4009 = vmatpush2.bf16.msra.mxu0 %v2936
    %4010 = vmatprep.subr.bf16.mxu0 %v2928
    %4011 = vmatpush2.bf16.msra.mxu0 %v2927
    %4012 = vmatprep.subr.bf16.mxu0 %v2919
    %4013 = vmatpush2.bf16.msra.mxu0 %v2918
    %4014 = vmatprep.subr.bf16.mxu0 %v2910
    %4015 = vmatpush2.bf16.msra.mxu0 %v2909
    %4016 = vmatprep.subr.bf16.mxu0 %v2901
    %4017 = vmatpush2.bf16.msra.mxu0 %v2900
    %4018 = vmatprep.subr.bf16.mxu0 %v2892
    %4019 = vmatpush2.bf16.msra.mxu0 %v2891
    %4020 = vmatprep.subr.bf16.mxu0 %v2883
    %4021 = vmatpush2.bf16.msra.mxu0 %v2882
    %4022 = vmatprep.mubr.bf16.mxu0 %v77
    %4023 = vmatmul.mubr.bf16.gmra.mxu0 %v76
    %v4024 = vpop.f32.mrf.mxu0
    %v4025 = vadd.f32 %v3972, %v4024
    %v4026 = vpop.f32.mrf.mxu0
    %v4027 = vadd.f32 %v3974, %v4026
    %v4028 = vpop.f32.mrf.mxu0
    %v4029 = vadd.f32 %v3976, %v4028
    %v4030 = vpop.f32.mrf.mxu0
    %v4031 = vadd.f32 %v3978, %v4030
    %4032 = vmatprep.mubr.bf16.mxu0 %v85
    %4033 = vmatmul.mubr.bf16.gmra.mxu0 %v84
    %v4034 = vpop.f32.mrf.mxu0
    %v4035 = vadd.f32 %v3982, %v4034
    %v4036 = vpop.f32.mrf.mxu0
    %v4037 = vadd.f32 %v3984, %v4036
    %v4038 = vpop.f32.mrf.mxu0
    %v4039 = vadd.f32 %v3986, %v4038
    %v4040 = vpop.f32.mrf.mxu0
    %v4041 = vadd.f32 %v3988, %v4040
    %4042 = vdwg.mxu0
    %4043 = vmatprep.subr.bf16.mxu0 %v3018
    %4044 = vmatpush1.bf16.msra.mxu0 %v3017
    %4045 = vmatprep.subr.bf16.mxu0 %v3009
    %4046 = vmatpush1.bf16.msra.mxu0 %v3008
    %4047 = vmatprep.subr.bf16.mxu0 %v3000
    %4048 = vmatpush1.bf16.msra.mxu0 %v2999
    %4049 = vmatprep.subr.bf16.mxu0 %v2991
    %4050 = vmatpush1.bf16.msra.mxu0 %v2990
    %4051 = vmatprep.subr.bf16.mxu0 %v2982
    %4052 = vmatpush1.bf16.msra.mxu0 %v2981
    %4053 = vmatprep.subr.bf16.mxu0 %v2973
    %4054 = vmatpush1.bf16.msra.mxu0 %v2972
    %4055 = vmatprep.subr.bf16.mxu0 %v2964
    %4056 = vmatpush1.bf16.msra.mxu0 %v2963
    %4057 = vmatprep.subr.bf16.mxu0 %v2955
    %4058 = vmatpush1.bf16.msra.mxu0 %v2954
    %4059 = vmatprep.subr.bf16.mxu0 %v3090
    %4060 = vmatpush2.bf16.msra.mxu0 %v3089
    %4061 = vmatprep.subr.bf16.mxu0 %v3081
    %4062 = vmatpush2.bf16.msra.mxu0 %v3080
    %4063 = vmatprep.subr.bf16.mxu0 %v3072
    %4064 = vmatpush2.bf16.msra.mxu0 %v3071
    %4065 = vmatprep.subr.bf16.mxu0 %v3063
    %4066 = vmatpush2.bf16.msra.mxu0 %v3062
    %4067 = vmatprep.subr.bf16.mxu0 %v3054
    %4068 = vmatpush2.bf16.msra.mxu0 %v3053
    %4069 = vmatprep.subr.bf16.mxu0 %v3045
    %4070 = vmatpush2.bf16.msra.mxu0 %v3044
    %4071 = vmatprep.subr.bf16.mxu0 %v3036
    %4072 = vmatpush2.bf16.msra.mxu0 %v3035
    %4073 = vmatprep.subr.bf16.mxu0 %v3027
    %4074 = vmatpush2.bf16.msra.mxu0 %v3026
    %4075 = vmatprep.mubr.bf16.mxu0 %v79
    %4076 = vmatmul.mubr.bf16.gmra.mxu0 %v78
    %v4077 = vpop.f32.mrf.mxu0
    %v4078 = vadd.f32 %v4025, %v4077
    %v4079 = vpop.f32.mrf.mxu0
    %v4080 = vadd.f32 %v4027, %v4079
    %v4081 = vpop.f32.mrf.mxu0
    %v4082 = vadd.f32 %v4029, %v4081
    %v4083 = vpop.f32.mrf.mxu0
    %v4084 = vadd.f32 %v4031, %v4083
    %4085 = vmatprep.mubr.bf16.mxu0 %v87
    %4086 = vmatmul.mubr.bf16.gmra.mxu0 %v86
    %v4087 = vpop.f32.mrf.mxu0
    %v4088 = vadd.f32 %v4035, %v4087
    %v4089 = vpop.f32.mrf.mxu0
    %v4090 = vadd.f32 %v4037, %v4089
    %v4091 = vpop.f32.mrf.mxu0
    %v4092 = vadd.f32 %v4039, %v4091
    %v4093 = vpop.f32.mrf.mxu0
    %v4094 = vadd.f32 %v4041, %v4093
    %4095 = vdwg.mxu0
    %4096 = vmatprep.subr.bf16.mxu0 %v2588
    %4097 = vmatpush1.bf16.msra.mxu0 %v2587
    %4098 = vmatprep.subr.bf16.mxu0 %v2579
    %4099 = vmatpush1.bf16.msra.mxu0 %v2578
    %4100 = vmatprep.subr.bf16.mxu0 %v2570
    %4101 = vmatpush1.bf16.msra.mxu0 %v2569
    %4102 = vmatprep.subr.bf16.mxu0 %v2561
    %4103 = vmatpush1.bf16.msra.mxu0 %v2560
    %4104 = vmatprep.subr.bf16.mxu0 %v2552
    %4105 = vmatpush1.bf16.msra.mxu0 %v2551
    %4106 = vmatprep.subr.bf16.mxu0 %v2543
    %4107 = vmatpush1.bf16.msra.mxu0 %v2542
    %4108 = vmatprep.subr.bf16.mxu0 %v2534
    %4109 = vmatpush1.bf16.msra.mxu0 %v2533
    %4110 = vmatprep.subr.bf16.mxu0 %v2525
    %4111 = vmatpush1.bf16.msra.mxu0 %v2524
    %4112 = vmatprep.subr.bf16.mxu0 %v2660
    %4113 = vmatpush2.bf16.msra.mxu0 %v2659
    %4114 = vmatprep.subr.bf16.mxu0 %v2651
    %4115 = vmatpush2.bf16.msra.mxu0 %v2650
    %4116 = vmatprep.subr.bf16.mxu0 %v2642
    %4117 = vmatpush2.bf16.msra.mxu0 %v2641
    %4118 = vmatprep.subr.bf16.mxu0 %v2633
    %4119 = vmatpush2.bf16.msra.mxu0 %v2632
    %4120 = vmatprep.subr.bf16.mxu0 %v2624
    %4121 = vmatpush2.bf16.msra.mxu0 %v2623
    %4122 = vmatprep.subr.bf16.mxu0 %v2615
    %4123 = vmatpush2.bf16.msra.mxu0 %v2614
    %4124 = vmatprep.subr.bf16.mxu0 %v2606
    %4125 = vmatpush2.bf16.msra.mxu0 %v2605
    %4126 = vmatprep.subr.bf16.mxu0 %v2597
    %4127 = vmatpush2.bf16.msra.mxu0 %v2596
    %4128 = vmatprep.mubr.bf16.mxu0 %v73
    %4129 = vmatmul.mubr.bf16.gmra.mxu0 %v72
    %v4130 = vpop.f32.mrf.mxu0
    %v4131 = vadd.f32 0.0, %v4130
    %v4132 = vpop.f32.mrf.mxu0
    %v4133 = vadd.f32 0.0, %v4132
    %v4134 = vpop.f32.mrf.mxu0
    %v4135 = vadd.f32 0.0, %v4134
    %v4136 = vpop.f32.mrf.mxu0
    %v4137 = vadd.f32 0.0, %v4136
    %4138 = vmatprep.mubr.bf16.mxu0 %v81
    %4139 = vmatmul.mubr.bf16.gmra.mxu0 %v80
    %v4140 = vpop.f32.mrf.mxu0
    %v4141 = vadd.f32 0.0, %v4140
    %v4142 = vpop.f32.mrf.mxu0
    %v4143 = vadd.f32 0.0, %v4142
    %v4144 = vpop.f32.mrf.mxu0
    %v4145 = vadd.f32 0.0, %v4144
    %v4146 = vpop.f32.mrf.mxu0
    %v4147 = vadd.f32 0.0, %v4146
    %4148 = vdwg.mxu0
    %4149 = vmatprep.subr.bf16.mxu0 %v2732
    %4150 = vmatpush1.bf16.msra.mxu0 %v2731
    %4151 = vmatprep.subr.bf16.mxu0 %v2723
    %4152 = vmatpush1.bf16.msra.mxu0 %v2722
    %4153 = vmatprep.subr.bf16.mxu0 %v2714
    %4154 = vmatpush1.bf16.msra.mxu0 %v2713
    %4155 = vmatprep.subr.bf16.mxu0 %v2705
    %4156 = vmatpush1.bf16.msra.mxu0 %v2704
    %4157 = vmatprep.subr.bf16.mxu0 %v2696
    %4158 = vmatpush1.bf16.msra.mxu0 %v2695
    %4159 = vmatprep.subr.bf16.mxu0 %v2687
    %4160 = vmatpush1.bf16.msra.mxu0 %v2686
    %4161 = vmatprep.subr.bf16.mxu0 %v2678
    %4162 = vmatpush1.bf16.msra.mxu0 %v2677
    %4163 = vmatprep.subr.bf16.mxu0 %v2669
    %4164 = vmatpush1.bf16.msra.mxu0 %v2668
    %4165 = vmatprep.subr.bf16.mxu0 %v2804
    %4166 = vmatpush2.bf16.msra.mxu0 %v2803
    %4167 = vmatprep.subr.bf16.mxu0 %v2795
    %4168 = vmatpush2.bf16.msra.mxu0 %v2794
    %4169 = vmatprep.subr.bf16.mxu0 %v2786
    %4170 = vmatpush2.bf16.msra.mxu0 %v2785
    %4171 = vmatprep.subr.bf16.mxu0 %v2777
    %4172 = vmatpush2.bf16.msra.mxu0 %v2776
    %4173 = vmatprep.subr.bf16.mxu0 %v2768
    %4174 = vmatpush2.bf16.msra.mxu0 %v2767
    %4175 = vmatprep.subr.bf16.mxu0 %v2759
    %4176 = vmatpush2.bf16.msra.mxu0 %v2758
    %4177 = vmatprep.subr.bf16.mxu0 %v2750
    %4178 = vmatpush2.bf16.msra.mxu0 %v2749
    %4179 = vmatprep.subr.bf16.mxu0 %v2741
    %4180 = vmatpush2.bf16.msra.mxu0 %v2740
    %4181 = vmatprep.mubr.bf16.mxu0 %v75
    %4182 = vmatmul.mubr.bf16.gmra.mxu0 %v74
    %v4183 = vpop.f32.mrf.mxu0
    %v4184 = vadd.f32 %v4131, %v4183
    %v4185 = vpop.f32.mrf.mxu0
    %v4186 = vadd.f32 %v4133, %v4185
    %v4187 = vpop.f32.mrf.mxu0
    %v4188 = vadd.f32 %v4135, %v4187
    %v4189 = vpop.f32.mrf.mxu0
    %v4190 = vadd.f32 %v4137, %v4189
    %4191 = vmatprep.mubr.bf16.mxu0 %v83
    %4192 = vmatmul.mubr.bf16.gmra.mxu0 %v82
    %v4193 = vpop.f32.mrf.mxu0
    %v4194 = vadd.f32 %v4141, %v4193
    %v4195 = vpop.f32.mrf.mxu0
    %v4196 = vadd.f32 %v4143, %v4195
    %v4197 = vpop.f32.mrf.mxu0
    %v4198 = vadd.f32 %v4145, %v4197
    %v4199 = vpop.f32.mrf.mxu0
    %v4200 = vadd.f32 %v4147, %v4199
    %4201 = vdwg.mxu0
    %4202 = vmatprep.subr.bf16.mxu0 %v2876
    %4203 = vmatpush1.bf16.msra.mxu0 %v2875
    %4204 = vmatprep.subr.bf16.mxu0 %v2867
    %4205 = vmatpush1.bf16.msra.mxu0 %v2866
    %4206 = vmatprep.subr.bf16.mxu0 %v2858
    %4207 = vmatpush1.bf16.msra.mxu0 %v2857
    %4208 = vmatprep.subr.bf16.mxu0 %v2849
    %4209 = vmatpush1.bf16.msra.mxu0 %v2848
    %4210 = vmatprep.subr.bf16.mxu0 %v2840
    %4211 = vmatpush1.bf16.msra.mxu0 %v2839
    %4212 = vmatprep.subr.bf16.mxu0 %v2831
    %4213 = vmatpush1.bf16.msra.mxu0 %v2830
    %4214 = vmatprep.subr.bf16.mxu0 %v2822
    %4215 = vmatpush1.bf16.msra.mxu0 %v2821
    %4216 = vmatprep.subr.bf16.mxu0 %v2813
    %4217 = vmatpush1.bf16.msra.mxu0 %v2812
    %4218 = vmatprep.subr.bf16.mxu0 %v2948
    %4219 = vmatpush2.bf16.msra.mxu0 %v2947
    %4220 = vmatprep.subr.bf16.mxu0 %v2939
    %4221 = vmatpush2.bf16.msra.mxu0 %v2938
    %4222 = vmatprep.subr.bf16.mxu0 %v2930
    %4223 = vmatpush2.bf16.msra.mxu0 %v2929
    %4224 = vmatprep.subr.bf16.mxu0 %v2921
    %4225 = vmatpush2.bf16.msra.mxu0 %v2920
    %4226 = vmatprep.subr.bf16.mxu0 %v2912
    %4227 = vmatpush2.bf16.msra.mxu0 %v2911
    %4228 = vmatprep.subr.bf16.mxu0 %v2903
    %4229 = vmatpush2.bf16.msra.mxu0 %v2902
    %4230 = vmatprep.subr.bf16.mxu0 %v2894
    %4231 = vmatpush2.bf16.msra.mxu0 %v2893
    %4232 = vmatprep.subr.bf16.mxu0 %v2885
    %4233 = vmatpush2.bf16.msra.mxu0 %v2884
    %4234 = vmatprep.mubr.bf16.mxu0 %v77
    %4235 = vmatmul.mubr.bf16.gmra.mxu0 %v76
    %v4236 = vpop.f32.mrf.mxu0
    %v4237 = vadd.f32 %v4184, %v4236
    %v4238 = vpop.f32.mrf.mxu0
    %v4239 = vadd.f32 %v4186, %v4238
    %v4240 = vpop.f32.mrf.mxu0
    %v4241 = vadd.f32 %v4188, %v4240
    %v4242 = vpop.f32.mrf.mxu0
    %v4243 = vadd.f32 %v4190, %v4242
    %4244 = vmatprep.mubr.bf16.mxu0 %v85
    %4245 = vmatmul.mubr.bf16.gmra.mxu0 %v84
    %v4246 = vpop.f32.mrf.mxu0
    %v4247 = vadd.f32 %v4194, %v4246
    %v4248 = vpop.f32.mrf.mxu0
    %v4249 = vadd.f32 %v4196, %v4248
    %v4250 = vpop.f32.mrf.mxu0
    %v4251 = vadd.f32 %v4198, %v4250
    %v4252 = vpop.f32.mrf.mxu0
    %v4253 = vadd.f32 %v4200, %v4252
    %4254 = vdwg.mxu0
    %4255 = vmatprep.subr.bf16.mxu0 %v3020
    %4256 = vmatpush1.bf16.msra.mxu0 %v3019
    %4257 = vmatprep.subr.bf16.mxu0 %v3011
    %4258 = vmatpush1.bf16.msra.mxu0 %v3010
    %4259 = vmatprep.subr.bf16.mxu0 %v3002
    %4260 = vmatpush1.bf16.msra.mxu0 %v3001
    %4261 = vmatprep.subr.bf16.mxu0 %v2993
    %4262 = vmatpush1.bf16.msra.mxu0 %v2992
    %4263 = vmatprep.subr.bf16.mxu0 %v2984
    %4264 = vmatpush1.bf16.msra.mxu0 %v2983
    %4265 = vmatprep.subr.bf16.mxu0 %v2975
    %4266 = vmatpush1.bf16.msra.mxu0 %v2974
    %4267 = vmatprep.subr.bf16.mxu0 %v2966
    %4268 = vmatpush1.bf16.msra.mxu0 %v2965
    %4269 = vmatprep.subr.bf16.mxu0 %v2957
    %4270 = vmatpush1.bf16.msra.mxu0 %v2956
    %4271 = vmatprep.subr.bf16.mxu0 %v3092
    %4272 = vmatpush2.bf16.msra.mxu0 %v3091
    %4273 = vmatprep.subr.bf16.mxu0 %v3083
    %4274 = vmatpush2.bf16.msra.mxu0 %v3082
    %4275 = vmatprep.subr.bf16.mxu0 %v3074
    %4276 = vmatpush2.bf16.msra.mxu0 %v3073
    %4277 = vmatprep.subr.bf16.mxu0 %v3065
    %4278 = vmatpush2.bf16.msra.mxu0 %v3064
    %4279 = vmatprep.subr.bf16.mxu0 %v3056
    %4280 = vmatpush2.bf16.msra.mxu0 %v3055
    %4281 = vmatprep.subr.bf16.mxu0 %v3047
    %4282 = vmatpush2.bf16.msra.mxu0 %v3046
    %4283 = vmatprep.subr.bf16.mxu0 %v3038
    %4284 = vmatpush2.bf16.msra.mxu0 %v3037
    %4285 = vmatprep.subr.bf16.mxu0 %v3029
    %4286 = vmatpush2.bf16.msra.mxu0 %v3028
    %4287 = vmatprep.mubr.bf16.mxu0 %v79
    %4288 = vmatmul.mubr.bf16.gmra.mxu0 %v78
    %v4289 = vpop.f32.mrf.mxu0
    %v4290 = vadd.f32 %v4237, %v4289
    %v4291 = vpop.f32.mrf.mxu0
    %v4292 = vadd.f32 %v4239, %v4291
    %v4293 = vpop.f32.mrf.mxu0
    %v4294 = vadd.f32 %v4241, %v4293
    %v4295 = vpop.f32.mrf.mxu0
    %v4296 = vadd.f32 %v4243, %v4295
    %4297 = vmatprep.mubr.bf16.mxu0 %v87
    %4298 = vmatmul.mubr.bf16.gmra.mxu0 %v86
    %v4299 = vpop.f32.mrf.mxu0
    %v4300 = vadd.f32 %v4247, %v4299
    %v4301 = vpop.f32.mrf.mxu0
    %v4302 = vadd.f32 %v4249, %v4301
    %v4303 = vpop.f32.mrf.mxu0
    %v4304 = vadd.f32 %v4251, %v4303
    %v4305 = vpop.f32.mrf.mxu0
    %v4306 = vadd.f32 %v4253, %v4305
    %4307 = vdwg.mxu0
    %4308 = vmatprep.subr.bf16.mxu0 %v2590
    %4309 = vmatpush1.bf16.msra.mxu0 %v2589
    %4310 = vmatprep.subr.bf16.mxu0 %v2581
    %4311 = vmatpush1.bf16.msra.mxu0 %v2580
    %4312 = vmatprep.subr.bf16.mxu0 %v2572
    %4313 = vmatpush1.bf16.msra.mxu0 %v2571
    %4314 = vmatprep.subr.bf16.mxu0 %v2563
    %4315 = vmatpush1.bf16.msra.mxu0 %v2562
    %4316 = vmatprep.subr.bf16.mxu0 %v2554
    %4317 = vmatpush1.bf16.msra.mxu0 %v2553
    %4318 = vmatprep.subr.bf16.mxu0 %v2545
    %4319 = vmatpush1.bf16.msra.mxu0 %v2544
    %4320 = vmatprep.subr.bf16.mxu0 %v2536
    %4321 = vmatpush1.bf16.msra.mxu0 %v2535
    %4322 = vmatprep.subr.bf16.mxu0 %v2527
    %4323 = vmatpush1.bf16.msra.mxu0 %v2526
    %4324 = vmatprep.subr.bf16.mxu0 %v2662
    %4325 = vmatpush2.bf16.msra.mxu0 %v2661
    %4326 = vmatprep.subr.bf16.mxu0 %v2653
    %4327 = vmatpush2.bf16.msra.mxu0 %v2652
    %4328 = vmatprep.subr.bf16.mxu0 %v2644
    %4329 = vmatpush2.bf16.msra.mxu0 %v2643
    %4330 = vmatprep.subr.bf16.mxu0 %v2635
    %4331 = vmatpush2.bf16.msra.mxu0 %v2634
    %4332 = vmatprep.subr.bf16.mxu0 %v2626
    %4333 = vmatpush2.bf16.msra.mxu0 %v2625
    %4334 = vmatprep.subr.bf16.mxu0 %v2617
    %4335 = vmatpush2.bf16.msra.mxu0 %v2616
    %4336 = vmatprep.subr.bf16.mxu0 %v2608
    %4337 = vmatpush2.bf16.msra.mxu0 %v2607
    %4338 = vmatprep.subr.bf16.mxu0 %v2599
    %4339 = vmatpush2.bf16.msra.mxu0 %v2598
    %4340 = vmatprep.mubr.bf16.mxu0 %v73
    %4341 = vmatmul.mubr.bf16.gmra.mxu0 %v72
    %v4342 = vpop.f32.mrf.mxu0
    %v4343 = vadd.f32 0.0, %v4342
    %v4344 = vpop.f32.mrf.mxu0
    %v4345 = vadd.f32 0.0, %v4344
    %v4346 = vpop.f32.mrf.mxu0
    %v4347 = vadd.f32 0.0, %v4346
    %v4348 = vpop.f32.mrf.mxu0
    %v4349 = vadd.f32 0.0, %v4348
    %4350 = vmatprep.mubr.bf16.mxu0 %v81
    %4351 = vmatmul.mubr.bf16.gmra.mxu0 %v80
    %v4352 = vpop.f32.mrf.mxu0
    %v4353 = vadd.f32 0.0, %v4352
    %v4354 = vpop.f32.mrf.mxu0
    %v4355 = vadd.f32 0.0, %v4354
    %v4356 = vpop.f32.mrf.mxu0
    %v4357 = vadd.f32 0.0, %v4356
    %v4358 = vpop.f32.mrf.mxu0
    %v4359 = vadd.f32 0.0, %v4358
    %4360 = vdwg.mxu0
    %4361 = vmatprep.subr.bf16.mxu0 %v2734
    %4362 = vmatpush1.bf16.msra.mxu0 %v2733
    %4363 = vmatprep.subr.bf16.mxu0 %v2725
    %4364 = vmatpush1.bf16.msra.mxu0 %v2724
    %4365 = vmatprep.subr.bf16.mxu0 %v2716
    %4366 = vmatpush1.bf16.msra.mxu0 %v2715
    %4367 = vmatprep.subr.bf16.mxu0 %v2707
    %4368 = vmatpush1.bf16.msra.mxu0 %v2706
    %4369 = vmatprep.subr.bf16.mxu0 %v2698
    %4370 = vmatpush1.bf16.msra.mxu0 %v2697
    %4371 = vmatprep.subr.bf16.mxu0 %v2689
    %4372 = vmatpush1.bf16.msra.mxu0 %v2688
    %4373 = vmatprep.subr.bf16.mxu0 %v2680
    %4374 = vmatpush1.bf16.msra.mxu0 %v2679
    %4375 = vmatprep.subr.bf16.mxu0 %v2671
    %4376 = vmatpush1.bf16.msra.mxu0 %v2670
    %4377 = vmatprep.subr.bf16.mxu0 %v2806
    %4378 = vmatpush2.bf16.msra.mxu0 %v2805
    %4379 = vmatprep.subr.bf16.mxu0 %v2797
    %4380 = vmatpush2.bf16.msra.mxu0 %v2796
    %4381 = vmatprep.subr.bf16.mxu0 %v2788
    %4382 = vmatpush2.bf16.msra.mxu0 %v2787
    %4383 = vmatprep.subr.bf16.mxu0 %v2779
    %4384 = vmatpush2.bf16.msra.mxu0 %v2778
    %4385 = vmatprep.subr.bf16.mxu0 %v2770
    %4386 = vmatpush2.bf16.msra.mxu0 %v2769
    %4387 = vmatprep.subr.bf16.mxu0 %v2761
    %4388 = vmatpush2.bf16.msra.mxu0 %v2760
    %4389 = vmatprep.subr.bf16.mxu0 %v2752
    %4390 = vmatpush2.bf16.msra.mxu0 %v2751
    %4391 = vmatprep.subr.bf16.mxu0 %v2743
    %4392 = vmatpush2.bf16.msra.mxu0 %v2742
    %4393 = vmatprep.mubr.bf16.mxu0 %v75
    %4394 = vmatmul.mubr.bf16.gmra.mxu0 %v74
    %v4395 = vpop.f32.mrf.mxu0
    %v4396 = vadd.f32 %v4343, %v4395
    %v4397 = vpop.f32.mrf.mxu0
    %v4398 = vadd.f32 %v4345, %v4397
    %v4399 = vpop.f32.mrf.mxu0
    %v4400 = vadd.f32 %v4347, %v4399
    %v4401 = vpop.f32.mrf.mxu0
    %v4402 = vadd.f32 %v4349, %v4401
    %4403 = vmatprep.mubr.bf16.mxu0 %v83
    %4404 = vmatmul.mubr.bf16.gmra.mxu0 %v82
    %v4405 = vpop.f32.mrf.mxu0
    %v4406 = vadd.f32 %v4353, %v4405
    %v4407 = vpop.f32.mrf.mxu0
    %v4408 = vadd.f32 %v4355, %v4407
    %v4409 = vpop.f32.mrf.mxu0
    %v4410 = vadd.f32 %v4357, %v4409
    %v4411 = vpop.f32.mrf.mxu0
    %v4412 = vadd.f32 %v4359, %v4411
    %4413 = vdwg.mxu0
    %4414 = vmatprep.subr.bf16.mxu0 %v2878
    %4415 = vmatpush1.bf16.msra.mxu0 %v2877
    %4416 = vmatprep.subr.bf16.mxu0 %v2869
    %4417 = vmatpush1.bf16.msra.mxu0 %v2868
    %4418 = vmatprep.subr.bf16.mxu0 %v2860
    %4419 = vmatpush1.bf16.msra.mxu0 %v2859
    %4420 = vmatprep.subr.bf16.mxu0 %v2851
    %4421 = vmatpush1.bf16.msra.mxu0 %v2850
    %4422 = vmatprep.subr.bf16.mxu0 %v2842
    %4423 = vmatpush1.bf16.msra.mxu0 %v2841
    %4424 = vmatprep.subr.bf16.mxu0 %v2833
    %4425 = vmatpush1.bf16.msra.mxu0 %v2832
    %4426 = vmatprep.subr.bf16.mxu0 %v2824
    %4427 = vmatpush1.bf16.msra.mxu0 %v2823
    %4428 = vmatprep.subr.bf16.mxu0 %v2815
    %4429 = vmatpush1.bf16.msra.mxu0 %v2814
    %4430 = vmatprep.subr.bf16.mxu0 %v2950
    %4431 = vmatpush2.bf16.msra.mxu0 %v2949
    %4432 = vmatprep.subr.bf16.mxu0 %v2941
    %4433 = vmatpush2.bf16.msra.mxu0 %v2940
    %4434 = vmatprep.subr.bf16.mxu0 %v2932
    %4435 = vmatpush2.bf16.msra.mxu0 %v2931
    %4436 = vmatprep.subr.bf16.mxu0 %v2923
    %4437 = vmatpush2.bf16.msra.mxu0 %v2922
    %4438 = vmatprep.subr.bf16.mxu0 %v2914
    %4439 = vmatpush2.bf16.msra.mxu0 %v2913
    %4440 = vmatprep.subr.bf16.mxu0 %v2905
    %4441 = vmatpush2.bf16.msra.mxu0 %v2904
    %4442 = vmatprep.subr.bf16.mxu0 %v2896
    %4443 = vmatpush2.bf16.msra.mxu0 %v2895
    %4444 = vmatprep.subr.bf16.mxu0 %v2887
    %4445 = vmatpush2.bf16.msra.mxu0 %v2886
    %4446 = vmatprep.mubr.bf16.mxu0 %v77
    %4447 = vmatmul.mubr.bf16.gmra.mxu0 %v76
    %v4448 = vpop.f32.mrf.mxu0
    %v4449 = vadd.f32 %v4396, %v4448
    %v4450 = vpop.f32.mrf.mxu0
    %v4451 = vadd.f32 %v4398, %v4450
    %v4452 = vpop.f32.mrf.mxu0
    %v4453 = vadd.f32 %v4400, %v4452
    %v4454 = vpop.f32.mrf.mxu0
    %v4455 = vadd.f32 %v4402, %v4454
    %4456 = vmatprep.mubr.bf16.mxu0 %v85
    %4457 = vmatmul.mubr.bf16.gmra.mxu0 %v84
    %v4458 = vpop.f32.mrf.mxu0
    %v4459 = vadd.f32 %v4406, %v4458
    %v4460 = vpop.f32.mrf.mxu0
    %v4461 = vadd.f32 %v4408, %v4460
    %v4462 = vpop.f32.mrf.mxu0
    %v4463 = vadd.f32 %v4410, %v4462
    %v4464 = vpop.f32.mrf.mxu0
    %v4465 = vadd.f32 %v4412, %v4464
    %4466 = vdwg.mxu0
    %4467 = vmatprep.subr.bf16.mxu0 %v3022
    %4468 = vmatpush1.bf16.msra.mxu0 %v3021
    %4469 = vmatprep.subr.bf16.mxu0 %v3013
    %4470 = vmatpush1.bf16.msra.mxu0 %v3012
    %4471 = vmatprep.subr.bf16.mxu0 %v3004
    %4472 = vmatpush1.bf16.msra.mxu0 %v3003
    %4473 = vmatprep.subr.bf16.mxu0 %v2995
    %4474 = vmatpush1.bf16.msra.mxu0 %v2994
    %4475 = vmatprep.subr.bf16.mxu0 %v2986
    %4476 = vmatpush1.bf16.msra.mxu0 %v2985
    %4477 = vmatprep.subr.bf16.mxu0 %v2977
    %4478 = vmatpush1.bf16.msra.mxu0 %v2976
    %4479 = vmatprep.subr.bf16.mxu0 %v2968
    %4480 = vmatpush1.bf16.msra.mxu0 %v2967
    %4481 = vmatprep.subr.bf16.mxu0 %v2959
    %4482 = vmatpush1.bf16.msra.mxu0 %v2958
    %4483 = vmatprep.subr.bf16.mxu0 %v3094
    %4484 = vmatpush2.bf16.msra.mxu0 %v3093
    %4485 = vmatprep.subr.bf16.mxu0 %v3085
    %4486 = vmatpush2.bf16.msra.mxu0 %v3084
    %4487 = vmatprep.subr.bf16.mxu0 %v3076
    %4488 = vmatpush2.bf16.msra.mxu0 %v3075
    %4489 = vmatprep.subr.bf16.mxu0 %v3067
    %4490 = vmatpush2.bf16.msra.mxu0 %v3066
    %4491 = vmatprep.subr.bf16.mxu0 %v3058
    %4492 = vmatpush2.bf16.msra.mxu0 %v3057
    %4493 = vmatprep.subr.bf16.mxu0 %v3049
    %4494 = vmatpush2.bf16.msra.mxu0 %v3048
    %4495 = vmatprep.subr.bf16.mxu0 %v3040
    %4496 = vmatpush2.bf16.msra.mxu0 %v3039
    %4497 = vmatprep.subr.bf16.mxu0 %v3031
    %4498 = vmatpush2.bf16.msra.mxu0 %v3030
    %4499 = vmatprep.mubr.bf16.mxu0 %v79
    %4500 = vmatmul.mubr.bf16.gmra.mxu0 %v78
    %v4501 = vpop.f32.mrf.mxu0
    %v4502 = vadd.f32 %v4449, %v4501
    %v4503 = vpop.f32.mrf.mxu0
    %v4504 = vadd.f32 %v4451, %v4503
    %v4505 = vpop.f32.mrf.mxu0
    %v4506 = vadd.f32 %v4453, %v4505
    %v4507 = vpop.f32.mrf.mxu0
    %v4508 = vadd.f32 %v4455, %v4507
    %4509 = vmatprep.mubr.bf16.mxu0 %v87
    %4510 = vmatmul.mubr.bf16.gmra.mxu0 %v86
    %v4511 = vpop.f32.mrf.mxu0
    %v4512 = vadd.f32 %v4459, %v4511
    %v4513 = vpop.f32.mrf.mxu0
    %v4514 = vadd.f32 %v4461, %v4513
    %v4515 = vpop.f32.mrf.mxu0
    %v4516 = vadd.f32 %v4463, %v4515
    %v4517 = vpop.f32.mrf.mxu0
    %v4518 = vadd.f32 %v4465, %v4517
    %4519 = vdwg.mxu0
    %4520 = vmatprep.subr.bf16.mxu0 0
    %4521 = vmatpush1.bf16.msra.mxu0 %v2591
    %4522 = vmatprep.subr.bf16.mxu0 0
    %4523 = vmatpush1.bf16.msra.mxu0 %v2582
    %4524 = vmatprep.subr.bf16.mxu0 0
    %4525 = vmatpush1.bf16.msra.mxu0 %v2573
    %4526 = vmatprep.subr.bf16.mxu0 0
    %4527 = vmatpush1.bf16.msra.mxu0 %v2564
    %4528 = vmatprep.subr.bf16.mxu0 0
    %4529 = vmatpush1.bf16.msra.mxu0 %v2555
    %4530 = vmatprep.subr.bf16.mxu0 0
    %4531 = vmatpush1.bf16.msra.mxu0 %v2546
    %4532 = vmatprep.subr.bf16.mxu0 0
    %4533 = vmatpush1.bf16.msra.mxu0 %v2537
    %4534 = vmatprep.subr.bf16.mxu0 0
    %4535 = vmatpush1.bf16.msra.mxu0 %v2528
    %4536 = vmatprep.subr.bf16.mxu0 0
    %4537 = vmatpush2.bf16.msra.mxu0 %v2663
    %4538 = vmatprep.subr.bf16.mxu0 0
    %4539 = vmatpush2.bf16.msra.mxu0 %v2654
    %4540 = vmatprep.subr.bf16.mxu0 0
    %4541 = vmatpush2.bf16.msra.mxu0 %v2645
    %4542 = vmatprep.subr.bf16.mxu0 0
    %4543 = vmatpush2.bf16.msra.mxu0 %v2636
    %4544 = vmatprep.subr.bf16.mxu0 0
    %4545 = vmatpush2.bf16.msra.mxu0 %v2627
    %4546 = vmatprep.subr.bf16.mxu0 0
    %4547 = vmatpush2.bf16.msra.mxu0 %v2618
    %4548 = vmatprep.subr.bf16.mxu0 0
    %4549 = vmatpush2.bf16.msra.mxu0 %v2609
    %4550 = vmatprep.subr.bf16.mxu0 0
    %4551 = vmatpush2.bf16.msra.mxu0 %v2600
    %4552 = vmatprep.mubr.bf16.mxu0 %v73
    %4553 = vmatmul.mubr.bf16.gmra.mxu0 %v72
    %v4554 = vpop.f32.mrf.mxu0
    %v4555 = vadd.f32 0.0, %v4554
    %v4556 = vpop.f32.mrf.mxu0
    %v4557 = vpop.f32.mrf.mxu0
    %v4558 = vadd.f32 0.0, %v4557
    %v4559 = vpop.f32.mrf.mxu0
    %4560 = vmatprep.mubr.bf16.mxu0 %v81
    %4561 = vmatmul.mubr.bf16.gmra.mxu0 %v80
    %v4562 = vpop.f32.mrf.mxu0
    %v4563 = vadd.f32 0.0, %v4562
    %v4564 = vpop.f32.mrf.mxu0
    %v4565 = vpop.f32.mrf.mxu0
    %v4566 = vadd.f32 0.0, %v4565
    %v4567 = vpop.f32.mrf.mxu0
    %4568 = vdwg.mxu0
    %4569 = vmatprep.subr.bf16.mxu0 0
    %4570 = vmatpush1.bf16.msra.mxu0 %v2735
    %4571 = vmatprep.subr.bf16.mxu0 0
    %4572 = vmatpush1.bf16.msra.mxu0 %v2726
    %4573 = vmatprep.subr.bf16.mxu0 0
    %4574 = vmatpush1.bf16.msra.mxu0 %v2717
    %4575 = vmatprep.subr.bf16.mxu0 0
    %4576 = vmatpush1.bf16.msra.mxu0 %v2708
    %4577 = vmatprep.subr.bf16.mxu0 0
    %4578 = vmatpush1.bf16.msra.mxu0 %v2699
    %4579 = vmatprep.subr.bf16.mxu0 0
    %4580 = vmatpush1.bf16.msra.mxu0 %v2690
    %4581 = vmatprep.subr.bf16.mxu0 0
    %4582 = vmatpush1.bf16.msra.mxu0 %v2681
    %4583 = vmatprep.subr.bf16.mxu0 0
    %4584 = vmatpush1.bf16.msra.mxu0 %v2672
    %4585 = vmatprep.subr.bf16.mxu0 0
    %4586 = vmatpush2.bf16.msra.mxu0 %v2807
    %4587 = vmatprep.subr.bf16.mxu0 0
    %4588 = vmatpush2.bf16.msra.mxu0 %v2798
    %4589 = vmatprep.subr.bf16.mxu0 0
    %4590 = vmatpush2.bf16.msra.mxu0 %v2789
    %4591 = vmatprep.subr.bf16.mxu0 0
    %4592 = vmatpush2.bf16.msra.mxu0 %v2780
    %4593 = vmatprep.subr.bf16.mxu0 0
    %4594 = vmatpush2.bf16.msra.mxu0 %v2771
    %4595 = vmatprep.subr.bf16.mxu0 0
    %4596 = vmatpush2.bf16.msra.mxu0 %v2762
    %4597 = vmatprep.subr.bf16.mxu0 0
    %4598 = vmatpush2.bf16.msra.mxu0 %v2753
    %4599 = vmatprep.subr.bf16.mxu0 0
    %4600 = vmatpush2.bf16.msra.mxu0 %v2744
    %4601 = vmatprep.mubr.bf16.mxu0 %v75
    %4602 = vmatmul.mubr.bf16.gmra.mxu0 %v74
    %v4603 = vpop.f32.mrf.mxu0
    %v4604 = vadd.f32 %v4555, %v4603
    %v4605 = vpop.f32.mrf.mxu0
    %v4606 = vpop.f32.mrf.mxu0
    %v4607 = vadd.f32 %v4558, %v4606
    %v4608 = vpop.f32.mrf.mxu0
    %4609 = vmatprep.mubr.bf16.mxu0 %v83
    %4610 = vmatmul.mubr.bf16.gmra.mxu0 %v82
    %v4611 = vpop.f32.mrf.mxu0
    %v4612 = vadd.f32 %v4563, %v4611
    %v4613 = vpop.f32.mrf.mxu0
    %v4614 = vpop.f32.mrf.mxu0
    %v4615 = vadd.f32 %v4566, %v4614
    %v4616 = vpop.f32.mrf.mxu0
    %4617 = vdwg.mxu0
    %4618 = vmatprep.subr.bf16.mxu0 0
    %4619 = vmatpush1.bf16.msra.mxu0 %v2879
    %4620 = vmatprep.subr.bf16.mxu0 0
    %4621 = vmatpush1.bf16.msra.mxu0 %v2870
    %4622 = vmatprep.subr.bf16.mxu0 0
    %4623 = vmatpush1.bf16.msra.mxu0 %v2861
    %4624 = vmatprep.subr.bf16.mxu0 0
    %4625 = vmatpush1.bf16.msra.mxu0 %v2852
    %4626 = vmatprep.subr.bf16.mxu0 0
    %4627 = vmatpush1.bf16.msra.mxu0 %v2843
    %4628 = vmatprep.subr.bf16.mxu0 0
    %4629 = vmatpush1.bf16.msra.mxu0 %v2834
    %4630 = vmatprep.subr.bf16.mxu0 0
    %4631 = vmatpush1.bf16.msra.mxu0 %v2825
    %4632 = vmatprep.subr.bf16.mxu0 0
    %4633 = vmatpush1.bf16.msra.mxu0 %v2816
    %4634 = vmatprep.subr.bf16.mxu0 0
    %4635 = vmatpush2.bf16.msra.mxu0 %v2951
    %4636 = vmatprep.subr.bf16.mxu0 0
    %4637 = vmatpush2.bf16.msra.mxu0 %v2942
    %4638 = vmatprep.subr.bf16.mxu0 0
    %4639 = vmatpush2.bf16.msra.mxu0 %v2933
    %4640 = vmatprep.subr.bf16.mxu0 0
    %4641 = vmatpush2.bf16.msra.mxu0 %v2924
    %4642 = vmatprep.subr.bf16.mxu0 0
    %4643 = vmatpush2.bf16.msra.mxu0 %v2915
    %4644 = vmatprep.subr.bf16.mxu0 0
    %4645 = vmatpush2.bf16.msra.mxu0 %v2906
    %4646 = vmatprep.subr.bf16.mxu0 0
    %4647 = vmatpush2.bf16.msra.mxu0 %v2897
    %4648 = vmatprep.subr.bf16.mxu0 0
    %4649 = vmatpush2.bf16.msra.mxu0 %v2888
    %4650 = vmatprep.mubr.bf16.mxu0 %v77
    %4651 = vmatmul.mubr.bf16.gmra.mxu0 %v76
    %v4652 = vpop.f32.mrf.mxu0
    %v4653 = vadd.f32 %v4604, %v4652
    %v4654 = vpop.f32.mrf.mxu0
    %v4655 = vpop.f32.mrf.mxu0
    %v4656 = vadd.f32 %v4607, %v4655
    %v4657 = vpop.f32.mrf.mxu0
    %4658 = vmatprep.mubr.bf16.mxu0 %v85
    %4659 = vmatmul.mubr.bf16.gmra.mxu0 %v84
    %v4660 = vpop.f32.mrf.mxu0
    %v4661 = vadd.f32 %v4612, %v4660
    %v4662 = vpop.f32.mrf.mxu0
    %v4663 = vpop.f32.mrf.mxu0
    %v4664 = vadd.f32 %v4615, %v4663
    %v4665 = vpop.f32.mrf.mxu0
    %4666 = vdwg.mxu0
    %4667 = vmatprep.subr.bf16.mxu0 0
    %4668 = vmatpush1.bf16.msra.mxu0 %v3023
    %4669 = vmatprep.subr.bf16.mxu0 0
    %4670 = vmatpush1.bf16.msra.mxu0 %v3014
    %4671 = vmatprep.subr.bf16.mxu0 0
    %4672 = vmatpush1.bf16.msra.mxu0 %v3005
    %4673 = vmatprep.subr.bf16.mxu0 0
    %4674 = vmatpush1.bf16.msra.mxu0 %v2996
    %4675 = vmatprep.subr.bf16.mxu0 0
    %4676 = vmatpush1.bf16.msra.mxu0 %v2987
    %4677 = vmatprep.subr.bf16.mxu0 0
    %4678 = vmatpush1.bf16.msra.mxu0 %v2978
    %4679 = vmatprep.subr.bf16.mxu0 0
    %4680 = vmatpush1.bf16.msra.mxu0 %v2969
    %4681 = vmatprep.subr.bf16.mxu0 0
    %4682 = vmatpush1.bf16.msra.mxu0 %v2960
    %4683 = vmatprep.subr.bf16.mxu0 0
    %4684 = vmatpush2.bf16.msra.mxu0 %v3095
    %4685 = vmatprep.subr.bf16.mxu0 0
    %4686 = vmatpush2.bf16.msra.mxu0 %v3086
    %4687 = vmatprep.subr.bf16.mxu0 0
    %4688 = vmatpush2.bf16.msra.mxu0 %v3077
    %4689 = vmatprep.subr.bf16.mxu0 0
    %4690 = vmatpush2.bf16.msra.mxu0 %v3068
    %4691 = vmatprep.subr.bf16.mxu0 0
    %4692 = vmatpush2.bf16.msra.mxu0 %v3059
    %4693 = vmatprep.subr.bf16.mxu0 0
    %4694 = vmatpush2.bf16.msra.mxu0 %v3050
    %4695 = vmatprep.subr.bf16.mxu0 0
    %4696 = vmatpush2.bf16.msra.mxu0 %v3041
    %4697 = vmatprep.subr.bf16.mxu0 0
    %4698 = vmatpush2.bf16.msra.mxu0 %v3032
    %4699 = vmatprep.mubr.bf16.mxu0 %v79
    %4700 = vmatmul.mubr.bf16.gmra.mxu0 %v78
    %v4701 = vpop.f32.mrf.mxu0
    %v4702 = vadd.f32 %v4653, %v4701
    %v4703 = vpop.f32.mrf.mxu0
    %v4704 = vpop.f32.mrf.mxu0
    %v4705 = vadd.f32 %v4656, %v4704
    %v4706 = vpop.f32.mrf.mxu0
    %4707 = vmatprep.mubr.bf16.mxu0 %v87
    %4708 = vmatmul.mubr.bf16.gmra.mxu0 %v86
    %v4709 = vpop.f32.mrf.mxu0
    %v4710 = vadd.f32 %v4661, %v4709
    %v4711 = vpop.f32.mrf.mxu0
    %v4712 = vpop.f32.mrf.mxu0
    %v4713 = vadd.f32 %v4664, %v4712
    %v4714 = vpop.f32.mrf.mxu0
    %4715 = vdwg.mxu0
    %4716 = vmatprep.subr.mxu0 0.0
    %4717 = vmatpush1.xpose.msra.mxu0 0.0
    %4718 = vmatprep.subr.mxu0 0.0
    %4719 = vmatpush1.xpose.msra.mxu0 0.0
    %4720 = vmatprep.subr.mxu0 0.0
    %4721 = vmatpush1.xpose.msra.mxu0 0.0
    %4722 = vmatprep.subr.mxu0 0.0
    %4723 = vmatpush1.xpose.msra.mxu0 0.0
    %4724 = vmatprep.subr.mxu0 0.0
    %4725 = vmatpush1.xpose.msra.mxu0 0.0
    %4726 = vmatprep.subr.mxu0 0.0
    %4727 = vmatpush1.xpose.msra.mxu0 0.0
    %4728 = vmatprep.subr.mxu0 0.0
    %4729 = vmatpush1.xpose.msra.mxu0 0.0
    %4730 = vmatprep.subr.mxu0 0.0
    %4731 = vmatpush1.xpose.msra.mxu0 0.0
    %4732 = vmatprep.subr.mxu0 0.0
    %4733 = vmatpush1.xpose.msra.mxu0 0.0
    %4734 = vmatprep.subr.mxu0 0.0
    %4735 = vmatpush1.xpose.msra.mxu0 0.0
    %4736 = vmatprep.subr.mxu0 0.0
    %4737 = vmatpush1.xpose.msra.mxu0 0.0
    %4738 = vmatprep.subr.mxu0 0.0
    %4739 = vmatpush1.xpose.msra.mxu0 0.0
    %4740 = vmatprep.subr.mxu0 0.0
    %4741 = vmatpush1.xpose.msra.mxu0 0.0
    %4742 = vmatprep.subr.mxu0 0.0
    %4743 = vmatpush1.xpose.msra.mxu0 0.0
    %4744 = vmatprep.subr.mxu0 %v4296
    %4745 = vmatpush1.xpose.msra.mxu0 %v4294
    %4746 = vmatprep.subr.mxu0 %v4292
    %4747 = vmatpush1.xpose.msra.mxu0 %v4290
    %4748 = vmatprep.subr.mxu0 0.0
    %4749 = vmatpush2.xpose.msra.mxu0 0.0
    %4750 = vmatprep.subr.mxu0 0.0
    %4751 = vmatpush2.xpose.msra.mxu0 0.0
    %4752 = vmatprep.subr.mxu0 0.0
    %4753 = vmatpush2.xpose.msra.mxu0 0.0
    %4754 = vmatprep.subr.mxu0 0.0
    %4755 = vmatpush2.xpose.msra.mxu0 0.0
    %4756 = vmatprep.subr.mxu0 0.0
    %4757 = vmatpush2.xpose.msra.mxu0 0.0
    %4758 = vmatprep.subr.mxu0 0.0
    %4759 = vmatpush2.xpose.msra.mxu0 0.0
    %4760 = vmatprep.subr.mxu0 0.0
    %4761 = vmatpush2.xpose.msra.mxu0 0.0
    %4762 = vmatprep.subr.mxu0 0.0
    %4763 = vmatpush2.xpose.msra.mxu0 0.0
    %4764 = vmatprep.subr.mxu0 0.0
    %4765 = vmatpush2.xpose.msra.mxu0 0.0
    %4766 = vmatprep.subr.mxu0 0.0
    %4767 = vmatpush2.xpose.msra.mxu0 0.0
    %4768 = vmatprep.subr.mxu0 0.0
    %4769 = vmatpush2.xpose.msra.mxu0 0.0
    %4770 = vmatprep.subr.mxu0 0.0
    %4771 = vmatpush2.xpose.msra.mxu0 0.0
    %4772 = vmatprep.subr.mxu0 0.0
    %4773 = vmatpush2.xpose.msra.mxu0 0.0
    %4774 = vmatprep.subr.mxu0 0.0
    %4775 = vmatpush2.xpose.msra.mxu0 0.0
    %4776 = vmatprep.subr.mxu0 0.0
    %4777 = vmatpush2.xpose.msra.mxu0 0.0
    %4778 = vmatprep.subr.mxu0 0.0
    %4779 = vmatpush2.xpose.msra.mxu0 0.0
    %4780 = vmatprep.mubr.f32.mxu0 %v3868
    %4781 = vmatmul.mubr.f32.gmra.mxu0 %v3866
    %v4782 = vpop.f32.mrf.mxu0
    %v4783 = vadd.f32 0.0, %v4782
    %v4784 = vpop.f32.mrf.mxu0
    %4785 = vmatprep.mubr.f32.mxu0 %v3872
    %4786 = vmatmul.mubr.f32.gmra.mxu0 %v3870
    %v4787 = vpop.f32.mrf.mxu0
    %v4788 = vadd.f32 0.0, %v4787
    %v4789 = vpop.f32.mrf.mxu0
    %4790 = vdwg.mxu0
    %4791 = vmatprep.subr.mxu0 0.0
    %4792 = vmatpush1.xpose.msra.mxu0 0.0
    %4793 = vmatprep.subr.mxu0 0.0
    %4794 = vmatpush1.xpose.msra.mxu0 0.0
    %4795 = vmatprep.subr.mxu0 0.0
    %4796 = vmatpush1.xpose.msra.mxu0 0.0
    %4797 = vmatprep.subr.mxu0 0.0
    %4798 = vmatpush1.xpose.msra.mxu0 0.0
    %4799 = vmatprep.subr.mxu0 0.0
    %4800 = vmatpush1.xpose.msra.mxu0 0.0
    %4801 = vmatprep.subr.mxu0 0.0
    %4802 = vmatpush1.xpose.msra.mxu0 0.0
    %4803 = vmatprep.subr.mxu0 0.0
    %4804 = vmatpush1.xpose.msra.mxu0 0.0
    %4805 = vmatprep.subr.mxu0 0.0
    %4806 = vmatpush1.xpose.msra.mxu0 0.0
    %4807 = vmatprep.subr.mxu0 0.0
    %4808 = vmatpush1.xpose.msra.mxu0 0.0
    %4809 = vmatprep.subr.mxu0 0.0
    %4810 = vmatpush1.xpose.msra.mxu0 0.0
    %4811 = vmatprep.subr.mxu0 0.0
    %4812 = vmatpush1.xpose.msra.mxu0 0.0
    %4813 = vmatprep.subr.mxu0 0.0
    %4814 = vmatpush1.xpose.msra.mxu0 0.0
    %4815 = vmatprep.subr.mxu0 0.0
    %4816 = vmatpush1.xpose.msra.mxu0 0.0
    %4817 = vmatprep.subr.mxu0 0.0
    %4818 = vmatpush1.xpose.msra.mxu0 0.0
    %4819 = vmatprep.subr.mxu0 %v4508
    %4820 = vmatpush1.xpose.msra.mxu0 %v4506
    %4821 = vmatprep.subr.mxu0 %v4504
    %4822 = vmatpush1.xpose.msra.mxu0 %v4502
    %4823 = vmatprep.subr.mxu0 0.0
    %4824 = vmatpush2.xpose.msra.mxu0 0.0
    %4825 = vmatprep.subr.mxu0 0.0
    %4826 = vmatpush2.xpose.msra.mxu0 0.0
    %4827 = vmatprep.subr.mxu0 0.0
    %4828 = vmatpush2.xpose.msra.mxu0 0.0
    %4829 = vmatprep.subr.mxu0 0.0
    %4830 = vmatpush2.xpose.msra.mxu0 0.0
    %4831 = vmatprep.subr.mxu0 0.0
    %4832 = vmatpush2.xpose.msra.mxu0 0.0
    %4833 = vmatprep.subr.mxu0 0.0
    %4834 = vmatpush2.xpose.msra.mxu0 0.0
    %4835 = vmatprep.subr.mxu0 0.0
    %4836 = vmatpush2.xpose.msra.mxu0 0.0
    %4837 = vmatprep.subr.mxu0 0.0
    %4838 = vmatpush2.xpose.msra.mxu0 0.0
    %4839 = vmatprep.subr.mxu0 0.0
    %4840 = vmatpush2.xpose.msra.mxu0 0.0
    %4841 = vmatprep.subr.mxu0 0.0
    %4842 = vmatpush2.xpose.msra.mxu0 0.0
    %4843 = vmatprep.subr.mxu0 0.0
    %4844 = vmatpush2.xpose.msra.mxu0 0.0
    %4845 = vmatprep.subr.mxu0 0.0
    %4846 = vmatpush2.xpose.msra.mxu0 0.0
    %4847 = vmatprep.subr.mxu0 0.0
    %4848 = vmatpush2.xpose.msra.mxu0 0.0
    %4849 = vmatprep.subr.mxu0 0.0
    %4850 = vmatpush2.xpose.msra.mxu0 0.0
    %4851 = vmatprep.subr.mxu0 0.0
    %4852 = vmatpush2.xpose.msra.mxu0 0.0
    %4853 = vmatprep.subr.mxu0 0.0
    %4854 = vmatpush2.xpose.msra.mxu0 0.0
    %4855 = vmatprep.mubr.f32.mxu0 %v4080
    %4856 = vmatmul.mubr.f32.gmra.mxu0 %v4078
    %v4857 = vpop.f32.mrf.mxu0
    %v4858 = vadd.f32 %v4783, %v4857
    %v4859 = vpop.f32.mrf.mxu0
    %4860 = vmatprep.mubr.f32.mxu0 %v4084
    %4861 = vmatmul.mubr.f32.gmra.mxu0 %v4082
    %v4862 = vpop.f32.mrf.mxu0
    %v4863 = vadd.f32 %v4788, %v4862
    %v4864 = vpop.f32.mrf.mxu0
    %4865 = vdwg.mxu0
    %vm4866 = vcmask 130048
    %v4867 = vsel %vm4866, %v4858, -inf
    %4868 = vmax.xlane.f32.xlu0 %v4867
    %v4869 = vpop.xlane.xlu0 %4868
    %v4870 = vsel %vm4866, %v4863, -inf
    %4871 = vmax.xlane.f32.xlu0 %v4870
    %v4872 = vpop.xlane.xlu0 %4871
    %v4873 = vsub.f32 %v4858, %v4869
    %v4874 = vsub.f32 %v4863, %v4872
    %v4875 = vmul.f32 %v4873, 1.442695
    %v4876 = vpow.pop %v4875
    %v4877 = vmul.f32 %v4874, 1.442695
    %v4878 = vpow.pop %v4877
    %v4879 = vsel %vm4866, %v4876, 0.0
    %4880 = vadd.xlane.f32.xlu0 %v4879
    %v4881 = vpop.xlane.xlu0 %4880
    %v4882 = vsel %vm4866, %v4878, 0.0
    %4883 = vadd.xlane.f32.xlu0 %v4882
    %v4884 = vpop.xlane.xlu0 %4883
    %v4885 = vmul.f32 %v4881, 16.0
    %v4886 = vmul.f32 %v4884, 16.0
    %v4887 = vrcp.pop %v4885
    %v4888 = vrcp.pop %v4886
    %v4889 = vmul.f32 %v4876, %v4887
    %v4890 = vmul.f32 %v4878, %v4888
    %v4891 = vsel %vm4866, %v4889, 0.0
    %v4892 = vsel %vm4866, %v4890, 0.0
    %v4893 = vadd.f32 %v4891, %v4892
    %v4894 = vrot.slane %v4893, 4
    %v4895 = vadd.f32 %v4893, %v4894
    %v4896 = vrot.slane %v4895, 2
    %v4897 = vadd.f32 %v4895, %v4896
    %v4898 = vrot.slane %v4897, 1
    %v4899 = vadd.f32 %v4897, %v4898
    %v4901 = vsel %vm4866, %v4899, 0
    %4903 = vmatprep.subr.mxu0 0.0
    %4904 = vmatpush1.msra.mxu0 0.0
    %4905 = vmatprep.subr.mxu0 0.0
    %4906 = vmatpush1.msra.mxu0 0.0
    %4907 = vmatprep.subr.mxu0 0.0
    %4908 = vmatpush1.msra.mxu0 0.0
    %4909 = vmatprep.subr.mxu0 0.0
    %4910 = vmatpush1.msra.mxu0 0.0
    %4911 = vmatprep.subr.mxu0 0.0
    %4912 = vmatpush1.msra.mxu0 0.0
    %4913 = vmatprep.subr.mxu0 0.0
    %4914 = vmatpush1.msra.mxu0 0.0
    %4915 = vmatprep.subr.mxu0 0.0
    %4916 = vmatpush1.msra.mxu0 0.0
    %4917 = vmatprep.subr.mxu0 0.0
    %4918 = vmatpush1.msra.mxu0 0.0
    %4919 = vmatprep.subr.mxu0 0.0
    %4920 = vmatpush1.msra.mxu0 0.0
    %4921 = vmatprep.subr.mxu0 0.0
    %4922 = vmatpush1.msra.mxu0 0.0
    %4923 = vmatprep.subr.mxu0 0.0
    %4924 = vmatpush1.msra.mxu0 0.0
    %4925 = vmatprep.subr.mxu0 0.0
    %4926 = vmatpush1.msra.mxu0 0.0
    %4927 = vmatprep.subr.mxu0 0.0
    %4928 = vmatpush1.msra.mxu0 0.0
    %4929 = vmatprep.subr.mxu0 0.0
    %4930 = vmatpush1.msra.mxu0 0.0
    %4931 = vmatprep.subr.mxu0 0.0
    %4932 = vmatpush1.msra.mxu0 %v4705
    %4933 = vmatprep.subr.mxu0 0.0
    %4934 = vmatpush1.msra.mxu0 %v4702
    %4935 = vmatprep.subr.mxu0 0.0
    %4936 = vmatpush2.msra.mxu0 0.0
    %4937 = vmatprep.subr.mxu0 0.0
    %4938 = vmatpush2.msra.mxu0 0.0
    %4939 = vmatprep.subr.mxu0 0.0
    %4940 = vmatpush2.msra.mxu0 0.0
    %4941 = vmatprep.subr.mxu0 0.0
    %4942 = vmatpush2.msra.mxu0 0.0
    %4943 = vmatprep.subr.mxu0 0.0
    %4944 = vmatpush2.msra.mxu0 0.0
    %4945 = vmatprep.subr.mxu0 0.0
    %4946 = vmatpush2.msra.mxu0 0.0
    %4947 = vmatprep.subr.mxu0 0.0
    %4948 = vmatpush2.msra.mxu0 0.0
    %4949 = vmatprep.subr.mxu0 0.0
    %4950 = vmatpush2.msra.mxu0 0.0
    %4951 = vmatprep.subr.mxu0 0.0
    %4952 = vmatpush2.msra.mxu0 0.0
    %4953 = vmatprep.subr.mxu0 0.0
    %4954 = vmatpush2.msra.mxu0 0.0
    %4955 = vmatprep.subr.mxu0 0.0
    %4956 = vmatpush2.msra.mxu0 0.0
    %4957 = vmatprep.subr.mxu0 0.0
    %4958 = vmatpush2.msra.mxu0 0.0
    %4959 = vmatprep.subr.mxu0 0.0
    %4960 = vmatpush2.msra.mxu0 0.0
    %4961 = vmatprep.subr.mxu0 0.0
    %4962 = vmatpush2.msra.mxu0 0.0
    %4963 = vmatprep.subr.mxu0 0.0
    %4964 = vmatpush2.msra.mxu0 0.0
    %4965 = vmatprep.subr.mxu0 0.0
    %4966 = vmatpush2.msra.mxu0 0.0
    %4967 = vmatprep.mubr.f32.mxu0 0.0
    %4968 = vmatmul.mubr.f32.gmra.mxu0 %v4901
    %v4969 = vpop.f32.mrf.mxu0
    %v4970 = vadd.f32 0.0, %v4969
    %v4971 = vpop.f32.mrf.mxu0
    %4972 = vdwg.mxu0
    %vm4973 = vcmask 0
    %4974 = vst.msk [vmem:[%s2] sm:$0x1] %vm4973, %v4970
    %4975 = vmatprep.subr.mxu0 0.0
    %4976 = vmatpush1.xpose.msra.mxu0 0.0
    %4977 = vmatprep.subr.mxu0 0.0
    %4978 = vmatpush1.xpose.msra.mxu0 0.0
    %4979 = vmatprep.subr.mxu0 0.0
    %4980 = vmatpush1.xpose.msra.mxu0 0.0
    %4981 = vmatprep.subr.mxu0 0.0
    %4982 = vmatpush1.xpose.msra.mxu0 0.0
    %4983 = vmatprep.subr.mxu0 0.0
    %4984 = vmatpush1.xpose.msra.mxu0 0.0
    %4985 = vmatprep.subr.mxu0 0.0
    %4986 = vmatpush1.xpose.msra.mxu0 0.0
    %4987 = vmatprep.subr.mxu0 0.0
    %4988 = vmatpush1.xpose.msra.mxu0 0.0
    %4989 = vmatprep.subr.mxu0 0.0
    %4990 = vmatpush1.xpose.msra.mxu0 0.0
    %4991 = vmatprep.subr.mxu0 0.0
    %4992 = vmatpush1.xpose.msra.mxu0 0.0
    %4993 = vmatprep.subr.mxu0 0.0
    %4994 = vmatpush1.xpose.msra.mxu0 0.0
    %4995 = vmatprep.subr.mxu0 0.0
    %4996 = vmatpush1.xpose.msra.mxu0 0.0
    %4997 = vmatprep.subr.mxu0 0.0
    %4998 = vmatpush1.xpose.msra.mxu0 0.0
    %4999 = vmatprep.subr.mxu0 0.0
    %5000 = vmatpush1.xpose.msra.mxu0 0.0
    %5001 = vmatprep.subr.mxu0 0.0
    %5002 = vmatpush1.xpose.msra.mxu0 0.0
    %5003 = vmatprep.subr.mxu0 %v4306
    %5004 = vmatpush1.xpose.msra.mxu0 %v4304
    %5005 = vmatprep.subr.mxu0 %v4302
    %5006 = vmatpush1.xpose.msra.mxu0 %v4300
    %5007 = vmatprep.subr.mxu0 0.0
    %5008 = vmatpush2.xpose.msra.mxu0 0.0
    %5009 = vmatprep.subr.mxu0 0.0
    %5010 = vmatpush2.xpose.msra.mxu0 0.0
    %5011 = vmatprep.subr.mxu0 0.0
    %5012 = vmatpush2.xpose.msra.mxu0 0.0
    %5013 = vmatprep.subr.mxu0 0.0
    %5014 = vmatpush2.xpose.msra.mxu0 0.0
    %5015 = vmatprep.subr.mxu0 0.0
    %5016 = vmatpush2.xpose.msra.mxu0 0.0
    %5017 = vmatprep.subr.mxu0 0.0
    %5018 = vmatpush2.xpose.msra.mxu0 0.0
    %5019 = vmatprep.subr.mxu0 0.0
    %5020 = vmatpush2.xpose.msra.mxu0 0.0
    %5021 = vmatprep.subr.mxu0 0.0
    %5022 = vmatpush2.xpose.msra.mxu0 0.0
    %5023 = vmatprep.subr.mxu0 0.0
    %5024 = vmatpush2.xpose.msra.mxu0 0.0
    %5025 = vmatprep.subr.mxu0 0.0
    %5026 = vmatpush2.xpose.msra.mxu0 0.0
    %5027 = vmatprep.subr.mxu0 0.0
    %5028 = vmatpush2.xpose.msra.mxu0 0.0
    %5029 = vmatprep.subr.mxu0 0.0
    %5030 = vmatpush2.xpose.msra.mxu0 0.0
    %5031 = vmatprep.subr.mxu0 0.0
    %5032 = vmatpush2.xpose.msra.mxu0 0.0
    %5033 = vmatprep.subr.mxu0 0.0
    %5034 = vmatpush2.xpose.msra.mxu0 0.0
    %5035 = vmatprep.subr.mxu0 0.0
    %5036 = vmatpush2.xpose.msra.mxu0 0.0
    %5037 = vmatprep.subr.mxu0 0.0
    %5038 = vmatpush2.xpose.msra.mxu0 0.0
    %5039 = vmatprep.mubr.f32.mxu0 %v3878
    %5040 = vmatmul.mubr.f32.gmra.mxu0 %v3876
    %v5041 = vpop.f32.mrf.mxu0
    %v5042 = vadd.f32 0.0, %v5041
    %v5043 = vpop.f32.mrf.mxu0
    %5044 = vmatprep.mubr.f32.mxu0 %v3882
    %5045 = vmatmul.mubr.f32.gmra.mxu0 %v3880
    %v5046 = vpop.f32.mrf.mxu0
    %v5047 = vadd.f32 0.0, %v5046
    %v5048 = vpop.f32.mrf.mxu0
    %5049 = vdwg.mxu0
    %5050 = vmatprep.subr.mxu0 0.0
    %5051 = vmatpush1.xpose.msra.mxu0 0.0
    %5052 = vmatprep.subr.mxu0 0.0
    %5053 = vmatpush1.xpose.msra.mxu0 0.0
    %5054 = vmatprep.subr.mxu0 0.0
    %5055 = vmatpush1.xpose.msra.mxu0 0.0
    %5056 = vmatprep.subr.mxu0 0.0
    %5057 = vmatpush1.xpose.msra.mxu0 0.0
    %5058 = vmatprep.subr.mxu0 0.0
    %5059 = vmatpush1.xpose.msra.mxu0 0.0
    %5060 = vmatprep.subr.mxu0 0.0
    %5061 = vmatpush1.xpose.msra.mxu0 0.0
    %5062 = vmatprep.subr.mxu0 0.0
    %5063 = vmatpush1.xpose.msra.mxu0 0.0
    %5064 = vmatprep.subr.mxu0 0.0
    %5065 = vmatpush1.xpose.msra.mxu0 0.0
    %5066 = vmatprep.subr.mxu0 0.0
    %5067 = vmatpush1.xpose.msra.mxu0 0.0
    %5068 = vmatprep.subr.mxu0 0.0
    %5069 = vmatpush1.xpose.msra.mxu0 0.0
    %5070 = vmatprep.subr.mxu0 0.0
    %5071 = vmatpush1.xpose.msra.mxu0 0.0
    %5072 = vmatprep.subr.mxu0 0.0
    %5073 = vmatpush1.xpose.msra.mxu0 0.0
    %5074 = vmatprep.subr.mxu0 0.0
    %5075 = vmatpush1.xpose.msra.mxu0 0.0
    %5076 = vmatprep.subr.mxu0 0.0
    %5077 = vmatpush1.xpose.msra.mxu0 0.0
    %5078 = vmatprep.subr.mxu0 %v4518
    %5079 = vmatpush1.xpose.msra.mxu0 %v4516
    %5080 = vmatprep.subr.mxu0 %v4514
    %5081 = vmatpush1.xpose.msra.mxu0 %v4512
    %5082 = vmatprep.subr.mxu0 0.0
    %5083 = vmatpush2.xpose.msra.mxu0 0.0
    %5084 = vmatprep.subr.mxu0 0.0
    %5085 = vmatpush2.xpose.msra.mxu0 0.0
    %5086 = vmatprep.subr.mxu0 0.0
    %5087 = vmatpush2.xpose.msra.mxu0 0.0
    %5088 = vmatprep.subr.mxu0 0.0
    %5089 = vmatpush2.xpose.msra.mxu0 0.0
    %5090 = vmatprep.subr.mxu0 0.0
    %5091 = vmatpush2.xpose.msra.mxu0 0.0
    %5092 = vmatprep.subr.mxu0 0.0
    %5093 = vmatpush2.xpose.msra.mxu0 0.0
    %5094 = vmatprep.subr.mxu0 0.0
    %5095 = vmatpush2.xpose.msra.mxu0 0.0
    %5096 = vmatprep.subr.mxu0 0.0
    %5097 = vmatpush2.xpose.msra.mxu0 0.0
    %5098 = vmatprep.subr.mxu0 0.0
    %5099 = vmatpush2.xpose.msra.mxu0 0.0
    %5100 = vmatprep.subr.mxu0 0.0
    %5101 = vmatpush2.xpose.msra.mxu0 0.0
    %5102 = vmatprep.subr.mxu0 0.0
    %5103 = vmatpush2.xpose.msra.mxu0 0.0
    %5104 = vmatprep.subr.mxu0 0.0
    %5105 = vmatpush2.xpose.msra.mxu0 0.0
    %5106 = vmatprep.subr.mxu0 0.0
    %5107 = vmatpush2.xpose.msra.mxu0 0.0
    %5108 = vmatprep.subr.mxu0 0.0
    %5109 = vmatpush2.xpose.msra.mxu0 0.0
    %5110 = vmatprep.subr.mxu0 0.0
    %5111 = vmatpush2.xpose.msra.mxu0 0.0
    %5112 = vmatprep.subr.mxu0 0.0
    %5113 = vmatpush2.xpose.msra.mxu0 0.0
    %5114 = vmatprep.mubr.f32.mxu0 %v4090
    %5115 = vmatmul.mubr.f32.gmra.mxu0 %v4088
    %v5116 = vpop.f32.mrf.mxu0
    %v5117 = vadd.f32 %v5042, %v5116
    %v5118 = vpop.f32.mrf.mxu0
    %5119 = vmatprep.mubr.f32.mxu0 %v4094
    %5120 = vmatmul.mubr.f32.gmra.mxu0 %v4092
    %v5121 = vpop.f32.mrf.mxu0
    %v5122 = vadd.f32 %v5047, %v5121
    %v5123 = vpop.f32.mrf.mxu0
    %5124 = vdwg.mxu0
    %v5125 = vsel %vm4866, %v5117, -inf
    %5126 = vmax.xlane.f32.xlu0 %v5125
    %v5127 = vpop.xlane.xlu0 %5126
    %v5128 = vsel %vm4866, %v5122, -inf
    %5129 = vmax.xlane.f32.xlu0 %v5128
    %v5130 = vpop.xlane.xlu0 %5129
    %v5131 = vsub.f32 %v5117, %v5127
    %v5132 = vsub.f32 %v5122, %v5130
    %v5133 = vmul.f32 %v5131, 1.442695
    %v5134 = vpow.pop %v5133
    %v5135 = vmul.f32 %v5132, 1.442695
    %v5136 = vpow.pop %v5135
    %v5137 = vsel %vm4866, %v5134, 0.0
    %5138 = vadd.xlane.f32.xlu0 %v5137
    %v5139 = vpop.xlane.xlu0 %5138
    %v5140 = vsel %vm4866, %v5136, 0.0
    %5141 = vadd.xlane.f32.xlu0 %v5140
    %v5142 = vpop.xlane.xlu0 %5141
    %v5143 = vmul.f32 %v5139, 16.0
    %v5144 = vmul.f32 %v5142, 16.0
    %v5145 = vrcp.pop %v5143
    %v5146 = vrcp.pop %v5144
    %v5147 = vmul.f32 %v5134, %v5145
    %v5148 = vmul.f32 %v5136, %v5146
    %v5149 = vsel %vm4866, %v5147, 0.0
    %v5150 = vsel %vm4866, %v5148, 0.0
    %v5151 = vadd.f32 %v5149, %v5150
    %v5152 = vrot.slane %v5151, 4
    %v5153 = vadd.f32 %v5151, %v5152
    %v5154 = vrot.slane %v5153, 2
    %v5155 = vadd.f32 %v5153, %v5154
    %v5156 = vrot.slane %v5155, 1
    %v5157 = vadd.f32 %v5155, %v5156
    %v5159 = vsel %vm4866, %v5157, 0
    %5161 = vmatprep.subr.mxu0 0.0
    %5162 = vmatpush1.msra.mxu0 0.0
    %5163 = vmatprep.subr.mxu0 0.0
    %5164 = vmatpush1.msra.mxu0 0.0
    %5165 = vmatprep.subr.mxu0 0.0
    %5166 = vmatpush1.msra.mxu0 0.0
    %5167 = vmatprep.subr.mxu0 0.0
    %5168 = vmatpush1.msra.mxu0 0.0
    %5169 = vmatprep.subr.mxu0 0.0
    %5170 = vmatpush1.msra.mxu0 0.0
    %5171 = vmatprep.subr.mxu0 0.0
    %5172 = vmatpush1.msra.mxu0 0.0
    %5173 = vmatprep.subr.mxu0 0.0
    %5174 = vmatpush1.msra.mxu0 0.0
    %5175 = vmatprep.subr.mxu0 0.0
    %5176 = vmatpush1.msra.mxu0 0.0
    %5177 = vmatprep.subr.mxu0 0.0
    %5178 = vmatpush1.msra.mxu0 0.0
    %5179 = vmatprep.subr.mxu0 0.0
    %5180 = vmatpush1.msra.mxu0 0.0
    %5181 = vmatprep.subr.mxu0 0.0
    %5182 = vmatpush1.msra.mxu0 0.0
    %5183 = vmatprep.subr.mxu0 0.0
    %5184 = vmatpush1.msra.mxu0 0.0
    %5185 = vmatprep.subr.mxu0 0.0
    %5186 = vmatpush1.msra.mxu0 0.0
    %5187 = vmatprep.subr.mxu0 0.0
    %5188 = vmatpush1.msra.mxu0 0.0
    %5189 = vmatprep.subr.mxu0 0.0
    %5190 = vmatpush1.msra.mxu0 %v4713
    %5191 = vmatprep.subr.mxu0 0.0
    %5192 = vmatpush1.msra.mxu0 %v4710
    %5193 = vmatprep.subr.mxu0 0.0
    %5194 = vmatpush2.msra.mxu0 0.0
    %5195 = vmatprep.subr.mxu0 0.0
    %5196 = vmatpush2.msra.mxu0 0.0
    %5197 = vmatprep.subr.mxu0 0.0
    %5198 = vmatpush2.msra.mxu0 0.0
    %5199 = vmatprep.subr.mxu0 0.0
    %5200 = vmatpush2.msra.mxu0 0.0
    %5201 = vmatprep.subr.mxu0 0.0
    %5202 = vmatpush2.msra.mxu0 0.0
    %5203 = vmatprep.subr.mxu0 0.0
    %5204 = vmatpush2.msra.mxu0 0.0
    %5205 = vmatprep.subr.mxu0 0.0
    %5206 = vmatpush2.msra.mxu0 0.0
    %5207 = vmatprep.subr.mxu0 0.0
    %5208 = vmatpush2.msra.mxu0 0.0
    %5209 = vmatprep.subr.mxu0 0.0
    %5210 = vmatpush2.msra.mxu0 0.0
    %5211 = vmatprep.subr.mxu0 0.0
    %5212 = vmatpush2.msra.mxu0 0.0
    %5213 = vmatprep.subr.mxu0 0.0
    %5214 = vmatpush2.msra.mxu0 0.0
    %5215 = vmatprep.subr.mxu0 0.0
    %5216 = vmatpush2.msra.mxu0 0.0
    %5217 = vmatprep.subr.mxu0 0.0
    %5218 = vmatpush2.msra.mxu0 0.0
    %5219 = vmatprep.subr.mxu0 0.0
    %5220 = vmatpush2.msra.mxu0 0.0
    %5221 = vmatprep.subr.mxu0 0.0
    %5222 = vmatpush2.msra.mxu0 0.0
    %5223 = vmatprep.subr.mxu0 0.0
    %5224 = vmatpush2.msra.mxu0 0.0
    %5225 = vmatprep.mubr.f32.mxu0 0.0
    %5226 = vmatmul.mubr.f32.gmra.mxu0 %v5159
    %v5227 = vpop.f32.mrf.mxu0
    %v5228 = vadd.f32 0.0, %v5227
    %v5229 = vpop.f32.mrf.mxu0
    %5230 = vdwg.mxu0
    %5231 = vst.msk [vmem:[%s2 + $0x1] sm:$0x1] %vm4973, %v5228
    // Predicated region
    $region18: #{tpu_custom_call.1} parent=1 // pred_check
      _
    $region19: #{tpu_custom_call.1} parent=1 // pred_check_branch
      %5233 = sbr.rel (0) target = $region21
    $region20: #{tpu_custom_call.1} parent=1 // pred_region
      _
    $region21: #{tpu_custom_call.1} parent=1 // pred_fallthru
      _
    // Predicated region
    $region22: #{tpu_custom_call.1} parent=1 // pred_check
      _
    $region23: #{tpu_custom_call.1} parent=1 // pred_check_branch
      %5235 = sbr.rel (0) target = $region25
    $region24: #{tpu_custom_call.1} parent=1 // pred_region
      _
    $region25: #{tpu_custom_call.1} parent=1 // pred_fallthru
      _
    %5236 = vsyncpa [#allocation3], 1
    %5237 = vsyncpa [#allocation5], 1

</llo_original>
